<compile_context>
chip_gen: v7x
topology: tpu7x:2x2x1
jax: 0.10.0
libtpu: 0.0.40
codegen_flags: <defaults>
</compile_context>

<pallas_src>
import numpy as np
import jax
import jax.numpy as jnp
from jax.experimental import pallas as pl
from jax.experimental.pallas import tpu as pltpu


# ---------------------------------------------------------------------------
# Model configuration (small shapes).
# ---------------------------------------------------------------------------
BATCH = 2
IN_CHANNELS = 3
IMG = 16
HIDDEN = 32
ACTION_DIM = 4
FUSION = 32

# encoder: Conv(3->8, k4, s2, p1) -> Conv(8->16, k3, s2, p1)  => 16x4x4 = 256
LSTM_INPUT = 16 * 4 * 4
DECONV_INPUT_SHAPE = (16, 4, 4)
# decoder: Linear(64 -> 256) -> Deconv(16->8, k4,s2,p1) -> Deconv(8->3, k4,s2,p1)

ENC1_FLAT = 8 * 8 * 8                  # conv1 output, NCHW-flat
ENC2_FLAT = 16 * 4 * 4                 # conv2 output (= LSTM input)
DEC1_FLAT = 8 * 8 * 8                  # deconv1 output
OUT_FLAT = IN_CHANNELS * IMG * IMG     # final decoded image, NCHW-flat
SUBLANE = 8                            # pad batch rows up to full sublane tiles


# ---------------------------------------------------------------------------
# Parameter init (torch-layout weights)
# ---------------------------------------------------------------------------
def init_params(key):
    ks = jax.random.split(key, 16)
    s = 0.05
    p = {}
    # encoder (torch Conv2d layout [Cout, Cin, kh, kw])
    p["enc_w1"] = s * jax.random.normal(ks[0], (8, IN_CHANNELS, 4, 4), jnp.float32)
    p["enc_b1"] = s * jax.random.normal(ks[1], (8,), jnp.float32)
    p["enc_w2"] = s * jax.random.normal(ks[2], (16, 8, 3, 3), jnp.float32)
    p["enc_b2"] = s * jax.random.normal(ks[3], (16,), jnp.float32)
    # action-conditioned LSTM
    p["lstm_wxf"] = s * jax.random.normal(ks[4], (LSTM_INPUT, FUSION), jnp.float32)
    p["lstm_waf"] = s * jax.random.normal(ks[5], (ACTION_DIM, FUSION), jnp.float32)
    p["lstm_wih"] = s * jax.random.normal(ks[6], (FUSION, 4 * HIDDEN), jnp.float32)
    p["lstm_whh"] = s * jax.random.normal(ks[7], (HIDDEN, 4 * HIDDEN), jnp.float32)
    p["lstm_b"] = s * jax.random.normal(ks[8], (1, 4 * HIDDEN), jnp.float32)
    # decoder (torch ConvTranspose2d layout [Cin, Cout, kh, kw])
    p["dec_fc_w"] = s * jax.random.normal(ks[9], (2 * HIDDEN, 16 * 4 * 4), jnp.float32)
    p["dec_fc_b"] = s * jax.random.normal(ks[10], (1, 16 * 4 * 4), jnp.float32)
    p["dec_w1"] = s * jax.random.normal(ks[11], (16, 8, 4, 4), jnp.float32)
    p["dec_b1"] = s * jax.random.normal(ks[12], (8,), jnp.float32)
    p["dec_w2"] = s * jax.random.normal(ks[13], (8, 3, 4, 4), jnp.float32)
    p["dec_b2"] = s * jax.random.normal(ks[14], (3,), jnp.float32)
    return p


# ---------------------------------------------------------------------------
# Host-side weight prep: lower conv / deconv to exact dense NCHW-flat operators
# ---------------------------------------------------------------------------
def _conv_dense(w, stride, pad, H, W):
    """torch Conv2d weight [Cout,Cin,kh,kw] -> M [Cin*H*W, Cout*Ho*Wo] such that
    flatten_nchw(conv(x)) == flatten_nchw(x) @ M  (per sample, exactly)."""
    Cout, Cin, kh, kw = w.shape
    Ho = (H + 2 * pad - kh) // stride + 1
    Wo = (W + 2 * pad - kw) // stride + 1
    M = np.zeros((Cin, H, W, Cout, Ho, Wo), np.float32)
    for t in range(Ho):
        for s in range(Wo):
            for ki in range(kh):
                for kj in range(kw):
                    hi = t * stride + ki - pad
                    wi = s * stride + kj - pad
                    if 0 <= hi < H and 0 <= wi < W:
                        M[:, hi, wi, :, t, s] += w[:, :, ki, kj].T   # [Cin, Cout]
    return M.reshape(Cin * H * W, Cout * Ho * Wo)


def _deconv_dense(w, stride, pad, H, W):
    """torch ConvTranspose2d weight [Cin,Cout,kh,kw] -> M [Cin*H*W, Cout*Ho*Wo] such
    that flatten_nchw(deconv(x)) == flatten_nchw(x) @ M  (per sample, exactly)."""
    Cin, Cout, kh, kw = w.shape
    Ho = (H - 1) * stride - 2 * pad + kh
    Wo = (W - 1) * stride - 2 * pad + kw
    M = np.zeros((Cin, H, W, Cout, Ho, Wo), np.float32)
    for t in range(H):
        for s in range(W):
            for ki in range(kh):
                for kj in range(kw):
                    ho = t * stride + ki - pad
                    wo = s * stride + kj - pad
                    if 0 <= ho < Ho and 0 <= wo < Wo:
                        M[:, t, s, :, ho, wo] += w[:, :, ki, kj]     # [Cin, Cout]
    return M.reshape(Cin * H * W, Cout * Ho * Wo)


def prepare_params(p):
    """Build the bf16/f32 operand tuple consumed by the fused kernel."""
    bf16, f32 = jnp.bfloat16, jnp.float32
    H = HIDDEN

    m1 = _conv_dense(np.asarray(p["enc_w1"]), 2, 1, IMG, IMG)            # [768, 512]
    m2 = _conv_dense(np.asarray(p["enc_w2"]), 2, 1, IMG // 2, IMG // 2)  # [512, 256]
    d1 = _deconv_dense(np.asarray(p["dec_w1"]), 2, 1, 4, 4)              # [256, 512]
    d2 = _deconv_dense(np.asarray(p["dec_w2"]), 2, 1, 8, 8)              # [512, 768]

    def bias_row(b, cout, hw):  # broadcast per-channel bias over NCHW-flat columns
        b = np.asarray(b, np.float32)
        return jnp.asarray(np.broadcast_to(b[:, None], (cout, hw)).reshape(1, -1), f32)

    # per-gate split of the LSTM weights (PyTorch i,f,g,o column order) -> no
    # sub-128-lane slicing of the gate tensor inside the kernel.
    wih = np.asarray(p["lstm_wih"])                       # [FUSION, 4H]
    whh = np.asarray(p["lstm_whh"])                       # [HIDDEN, 4H]
    bg = np.asarray(p["lstm_b"])                          # [1, 4H]
    wih_s = np.stack([wih[:, g * H:(g + 1) * H] for g in range(4)])   # [4, F, H]
    whh_s = np.stack([whh[:, g * H:(g + 1) * H] for g in range(4)])   # [4, H, H]
    bg_s = np.stack([bg[:, g * H:(g + 1) * H] for g in range(4)])     # [4, 1, H]

    # cat([new_h, new_c]) @ Wfc  ==  new_h @ Wfc[:H] + new_c @ Wfc[H:]
    wfc = np.asarray(p["dec_fc_w"])                       # [2H, 256]

    return (
        jnp.asarray(m1, bf16), bias_row(p["enc_b1"], 8, 8 * 8),
        jnp.asarray(m2, bf16), bias_row(p["enc_b2"], 16, 4 * 4),
        jnp.asarray(p["lstm_wxf"], bf16), jnp.asarray(p["lstm_waf"], bf16),
        jnp.asarray(wih_s, bf16), jnp.asarray(whh_s, bf16), jnp.asarray(bg_s, f32),
        jnp.asarray(wfc[:H], bf16), jnp.asarray(wfc[H:], bf16),
        jnp.asarray(p["dec_fc_b"], f32),
        jnp.asarray(d1, bf16), bias_row(p["dec_b1"], 8, 8 * 8),
        jnp.asarray(d2, bf16), bias_row(p["dec_b2"], 3, 16 * 16),
    )


# ---------------------------------------------------------------------------
# The single fused Pallas kernel: encoder -> ActCondLSTM -> decoder
# ---------------------------------------------------------------------------
def _fused_step_kernel(
        # activations (f32, batch padded to a multiple of 8 rows)
        x_ref, a_ref, h_ref, c_ref,
        # weights (bf16 matrices, f32 biases), all resident in VMEM
        m1_ref, b1_ref, m2_ref, b2_ref,
        wxf_ref, waf_ref, wih_ref, whh_ref, bg_ref,
        wfh_ref, wfc_ref, bfc_ref,
        d1_ref, bd1_ref, d2_ref, bd2_ref,
        # outputs
        dec_ref, nh_ref, nc_ref):

    bf16 = jnp.bfloat16

    def mm(x_bf, w):
        # bf16 MXU operands, f32 accumulation (v5e/v6e/v7x MXU-native).
        return jnp.dot(x_bf, w, preferred_element_type=jnp.float32)

    def sigmoid(v):
        # single EUP transcendental, numerically stable (no exp overflow / divide)
        return 0.5 * jnp.tanh(0.5 * v) + 0.5

    def relu(v):
        return jnp.maximum(v, 0.0)

    # ---- ConvEncoder (convs as dense NCHW-flat operators) + ReLU ----
    y1 = relu(mm(x_ref[...].astype(bf16), m1_ref[...]) + b1_ref[...])     # [B, 512]
    enc = relu(mm(y1.astype(bf16), m2_ref[...]) + b2_ref[...])            # [B, 256]

    # ---- ActCondLSTM: multiplicative action fusion + LSTM cell (i,f,g,o) ----
    fused = (mm(enc.astype(bf16), wxf_ref[...]) *
             mm(a_ref[...].astype(bf16), waf_ref[...]))                   # [B, F]
    # cast reused matmul operands to bf16 exactly once
    fused_bf = fused.astype(bf16)
    h_bf = h_ref[...].astype(bf16)
    pre = [mm(fused_bf, wih_ref[g]) + mm(h_bf, whh_ref[g]) + bg_ref[g]    # [B, H] each
           for g in range(4)]
    i_g, f_g = sigmoid(pre[0]), sigmoid(pre[1])
    g_g, o_g = jnp.tanh(pre[2]), sigmoid(pre[3])
    new_c = f_g * c_ref[...] + i_g * g_g
    new_h = o_g * jnp.tanh(new_c)
    nh_ref[...] = new_h
    nc_ref[...] = new_c

    # ---- ConvDecoder: Linear(cat[h,c]) + ReLU -> deconv1 + ReLU -> deconv2 ----
    z = relu(mm(new_h.astype(bf16), wfh_ref[...]) +
             mm(new_c.astype(bf16), wfc_ref[...]) + bfc_ref[...])         # [B, 256]
    y2 = relu(mm(z.astype(bf16), d1_ref[...]) + bd1_ref[...])             # [B, 512]
    dec_ref[...] = mm(y2.astype(bf16), d2_ref[...]) + bd2_ref[...]        # [B, 768]


def rec_env_sim_forward(weights, x, a, h, c):
    """x: [B, C, H, W] (NCHW), a: [B, A], h/c: [B, HIDDEN]."""
    B = x.shape[0]
    Bp = max(SUBLANE, ((B + SUBLANE - 1) // SUBLANE) * SUBLANE)   # full sublane tiles

    def prep_rows(t):
        t = t.astype(jnp.float32).reshape(B, -1)
        return jnp.pad(t, ((0, Bp - B), (0, 0)))

    xf, af, hf, cf = prep_rows(x), prep_rows(a), prep_rows(h), prep_rows(c)

    vmem = pl.BlockSpec(memory_space=pltpu.MemorySpace.VMEM)
    dec, nh, nc = pl.pallas_call(
        _fused_step_kernel,
        out_shape=(jax.ShapeDtypeStruct((Bp, OUT_FLAT), jnp.float32),
                   jax.ShapeDtypeStruct((Bp, HIDDEN), jnp.float32),
                   jax.ShapeDtypeStruct((Bp, HIDDEN), jnp.float32)),
        in_specs=[vmem] * 20,
        out_specs=(vmem, vmem, vmem),
    )(xf, af, hf, cf, *weights)

    decoded = dec[:B].reshape(B, IN_CHANNELS, IMG, IMG)   # pure reshape: columns are NCHW
    return decoded, (nh[:B], nc[:B])


# ---------------------------------------------------------------------------
# Plain-JAX f32 reference of the module (known-correct)
# ---------------------------------------------------------------------------
def _ref_conv2d(x, w, b, stride, pad, act_relu):
    N, Cin, H, W = x.shape
    Cout, _, kh, kw = w.shape
    Ho = (H + 2 * pad - kh) // stride + 1
    Wo = (W + 2 * pad - kw) // stride + 1
    xp = jnp.pad(x, ((0, 0), (0, 0), (pad, pad), (pad, pad)))
    cols = []
    for ki in range(kh):
        for kj in range(kw):
            cols.append(xp[:, :, ki:ki + (Ho - 1) * stride + 1:stride,
                           kj:kj + (Wo - 1) * stride + 1:stride])
    p = jnp.stack(cols, axis=2)                                    # [N,Cin,kh*kw,Ho,Wo]
    p = p.transpose(0, 3, 4, 1, 2).reshape(N * Ho * Wo, Cin * kh * kw)
    y = p @ w.reshape(Cout, -1).T + b[None, :]
    if act_relu:
        y = jnp.maximum(y, 0.0)
    return y.reshape(N, Ho, Wo, Cout).transpose(0, 3, 1, 2)


def _ref_deconv2d(x, w, b, stride, pad, act_relu):
    N, Cin, Hi, Wi = x.shape
    _, Cout, kh, kw = w.shape
    Ho = (Hi - 1) * stride - 2 * pad + kh
    Wo = (Wi - 1) * stride - 2 * pad + kw
    x2 = x.transpose(0, 2, 3, 1).reshape(N * Hi * Wi, Cin)
    cols = (x2 @ w.reshape(Cin, Cout * kh * kw)).reshape(N, Hi, Wi, Cout, kh, kw)
    Hf = (Hi - 1) * stride + kh
    Wf = (Wi - 1) * stride + kw
    out = jnp.zeros((N, Hf, Wf, Cout), jnp.float32)
    for ki in range(kh):
        for kj in range(kw):
            out = out.at[:, ki:ki + (Hi - 1) * stride + 1:stride,
                         kj:kj + (Wi - 1) * stride + 1:stride, :].add(cols[:, :, :, :, ki, kj])
    out = out[:, pad:pad + Ho, pad:pad + Wo, :]
    y = out.reshape(N * Ho * Wo, Cout) + b[None, :]
    if act_relu:
        y = jnp.maximum(y, 0.0)
    return y.reshape(N, Ho, Wo, Cout).transpose(0, 3, 1, 2)


def _ref_forward(p, x, a, h, c):
    e = _ref_conv2d(x, p["enc_w1"], p["enc_b1"], 2, 1, True)
    e = _ref_conv2d(e, p["enc_w2"], p["enc_b2"], 2, 1, True)
    enc = e.reshape(e.shape[0], -1)
    fused = (enc @ p["lstm_wxf"]) * (a @ p["lstm_waf"])
    gates = fused @ p["lstm_wih"] + h @ p["lstm_whh"] + p["lstm_b"]
    H = HIDDEN
    i = jax.nn.sigmoid(gates[:, :H]); f = jax.nn.sigmoid(gates[:, H:2 * H])
    g = jnp.tanh(gates[:, 2 * H:3 * H]); o = jax.nn.sigmoid(gates[:, 3 * H:])
    nc = f * c + i * g
    nh = o * jnp.tanh(nc)
    z = jnp.maximum(jnp.concatenate([nh, nc], -1) @ p["dec_fc_w"] + p["dec_fc_b"], 0.0)
    z = z.reshape(z.shape[0], *DECONV_INPUT_SHAPE)
    d = _ref_deconv2d(z, p["dec_w1"], p["dec_b1"], 2, 1, True)
    d = _ref_deconv2d(d, p["dec_w2"], p["dec_b2"], 2, 1, False)
    return d, (nh, nc)


# ---------------------------------------------------------------------------
if __name__ == "__main__":
    key = jax.random.PRNGKey(0)
    kp, kx, ka, kh, kc = jax.random.split(key, 5)
    params = init_params(kp)
    weights = prepare_params(params)

    x = jax.random.normal(kx, (BATCH, IN_CHANNELS, IMG, IMG), jnp.float32)
    a = jax.nn.one_hot(jax.random.randint(ka, (BATCH,), 0, ACTION_DIM), ACTION_DIM,
                       dtype=jnp.float32)
    h0 = 0.1 * jax.random.normal(kh, (BATCH, HIDDEN), jnp.float32)
    c0 = 0.1 * jax.random.normal(kc, (BATCH, HIDDEN), jnp.float32)

    fwd = jax.jit(rec_env_sim_forward)
    decoded, (new_h, new_c) = fwd(weights, x, a, h0, c0)
    jax.block_until_ready((decoded, new_h, new_c))

    assert decoded.shape == (BATCH, IN_CHANNELS, IMG, IMG)
    assert new_h.shape == (BATCH, HIDDEN) and new_c.shape == (BATCH, HIDDEN)
    assert bool(jnp.all(jnp.isfinite(decoded)))

    # Semantic sanity check against the straightforward f32 JAX reference
    # (tolerance covers the bf16 MXU operands).
    ref_dec, (ref_h, ref_c) = _ref_forward(params, x, a, h0, c0)
    assert float(jnp.max(jnp.abs(decoded - ref_dec))) < 5e-2
    assert float(jnp.max(jnp.abs(new_h - ref_h))) < 5e-2
    assert float(jnp.max(jnp.abs(new_c - ref_c))) < 5e-2

    print("KERNEL_OK")
</pallas_src>

<mosaic_0001>
module attributes {stable_mosaic.version = 11 : i64} {
  func.func @_fused_step_kernel(%arg0: memref<8x768xf32, #tpu.memory_space<vmem>>, %arg1: memref<8x4xf32, #tpu.memory_space<vmem>>, %arg2: memref<8x32xf32, #tpu.memory_space<vmem>>, %arg3: memref<8x32xf32, #tpu.memory_space<vmem>>, %arg4: memref<768x512xbf16, #tpu.memory_space<vmem>>, %arg5: memref<1x512xf32, #tpu.memory_space<vmem>>, %arg6: memref<512x256xbf16, #tpu.memory_space<vmem>>, %arg7: memref<1x256xf32, #tpu.memory_space<vmem>>, %arg8: memref<256x32xbf16, #tpu.memory_space<vmem>>, %arg9: memref<4x32xbf16, #tpu.memory_space<vmem>>, %arg10: memref<4x32x32xbf16, #tpu.memory_space<vmem>>, %arg11: memref<4x32x32xbf16, #tpu.memory_space<vmem>>, %arg12: memref<4x1x32xf32, #tpu.memory_space<vmem>>, %arg13: memref<32x256xbf16, #tpu.memory_space<vmem>>, %arg14: memref<32x256xbf16, #tpu.memory_space<vmem>>, %arg15: memref<1x256xf32, #tpu.memory_space<vmem>>, %arg16: memref<256x512xbf16, #tpu.memory_space<vmem>>, %arg17: memref<1x512xf32, #tpu.memory_space<vmem>>, %arg18: memref<512x768xbf16, #tpu.memory_space<vmem>>, %arg19: memref<1x768xf32, #tpu.memory_space<vmem>>, %arg20: memref<8x768xf32, #tpu.memory_space<vmem>>, %arg21: memref<8x32xf32, #tpu.memory_space<vmem>>, %arg22: memref<8x32xf32, #tpu.memory_space<vmem>>) attributes {dimension_semantics = [], scalar_prefetch = 0 : i64, scratch_operands = 0 : i64, tpu.core_type = #tpu.core_type<tc>} {
    %c0 = arith.constant 0 : index
    %c0_0 = arith.constant 0 : index
    %0 = vector.load %arg0[%c0, %c0_0] : memref<8x768xf32, #tpu.memory_space<vmem>>, vector<8x768xf32>
    %1 = arith.truncf %0 : vector<8x768xf32> to vector<8x768xbf16>
    %c0_1 = arith.constant 0 : index
    %c0_2 = arith.constant 0 : index
    %2 = vector.load %arg4[%c0_1, %c0_2] : memref<768x512xbf16, #tpu.memory_space<vmem>>, vector<768x512xbf16>
    %cst = arith.constant dense<0.000000e+00> : vector<8x512xf32>
    %3 = tpu.matmul %1, %2, %cst {dimension_numbers = #tpu.dot_dimension_numbers<[1], [0], [0], [1], [0, 0, 1, 1], [], []>} : vector<8x768xbf16>, vector<768x512xbf16>, vector<8x512xf32> -> vector<8x512xf32>
    %c0_3 = arith.constant 0 : index
    %c0_4 = arith.constant 0 : index
    %4 = vector.load %arg5[%c0_3, %c0_4] : memref<1x512xf32, #tpu.memory_space<vmem>>, vector<1x512xf32>
    %5 = vector.broadcast %4 : vector<1x512xf32> to vector<8x512xf32>
    %6 = arith.addf %3, %5 : vector<8x512xf32>
    %cst_5 = arith.constant 0.000000e+00 : f32
    %7 = vector.broadcast %cst_5 : f32 to vector<8x512xf32>
    %8 = arith.maximumf %6, %7 : vector<8x512xf32>
    %9 = arith.truncf %8 : vector<8x512xf32> to vector<8x512xbf16>
    %c0_6 = arith.constant 0 : index
    %c0_7 = arith.constant 0 : index
    %10 = vector.load %arg6[%c0_6, %c0_7] : memref<512x256xbf16, #tpu.memory_space<vmem>>, vector<512x256xbf16>
    %cst_8 = arith.constant dense<0.000000e+00> : vector<8x256xf32>
    %11 = tpu.matmul %9, %10, %cst_8 {dimension_numbers = #tpu.dot_dimension_numbers<[1], [0], [0], [1], [0, 0, 1, 1], [], []>} : vector<8x512xbf16>, vector<512x256xbf16>, vector<8x256xf32> -> vector<8x256xf32>
    %c0_9 = arith.constant 0 : index
    %c0_10 = arith.constant 0 : index
    %12 = vector.load %arg7[%c0_9, %c0_10] : memref<1x256xf32, #tpu.memory_space<vmem>>, vector<1x256xf32>
    %13 = vector.broadcast %12 : vector<1x256xf32> to vector<8x256xf32>
    %14 = arith.addf %11, %13 : vector<8x256xf32>
    %cst_11 = arith.constant 0.000000e+00 : f32
    %15 = vector.broadcast %cst_11 : f32 to vector<8x256xf32>
    %16 = arith.maximumf %14, %15 : vector<8x256xf32>
    %17 = arith.truncf %16 : vector<8x256xf32> to vector<8x256xbf16>
    %c0_12 = arith.constant 0 : index
    %c0_13 = arith.constant 0 : index
    %18 = vector.load %arg8[%c0_12, %c0_13] : memref<256x32xbf16, #tpu.memory_space<vmem>>, vector<256x32xbf16>
    %cst_14 = arith.constant dense<0.000000e+00> : vector<8x32xf32>
    %19 = tpu.matmul %17, %18, %cst_14 {dimension_numbers = #tpu.dot_dimension_numbers<[1], [0], [0], [1], [0, 0, 1, 1], [], []>} : vector<8x256xbf16>, vector<256x32xbf16>, vector<8x32xf32> -> vector<8x32xf32>
    %c0_15 = arith.constant 0 : index
    %c0_16 = arith.constant 0 : index
    %20 = vector.load %arg1[%c0_15, %c0_16] : memref<8x4xf32, #tpu.memory_space<vmem>>, vector<8x4xf32>
    %21 = arith.truncf %20 : vector<8x4xf32> to vector<8x4xbf16>
    %c0_17 = arith.constant 0 : index
    %c0_18 = arith.constant 0 : index
    %22 = vector.load %arg9[%c0_17, %c0_18] : memref<4x32xbf16, #tpu.memory_space<vmem>>, vector<4x32xbf16>
    %cst_19 = arith.constant dense<0.000000e+00> : vector<8x32xf32>
    %23 = tpu.matmul %21, %22, %cst_19 {dimension_numbers = #tpu.dot_dimension_numbers<[1], [0], [0], [1], [0, 0, 1, 1], [], []>} : vector<8x4xbf16>, vector<4x32xbf16>, vector<8x32xf32> -> vector<8x32xf32>
    %24 = arith.mulf %19, %23 : vector<8x32xf32>
    %25 = arith.truncf %24 : vector<8x32xf32> to vector<8x32xbf16>
    %c0_20 = arith.constant 0 : index
    %c0_21 = arith.constant 0 : index
    %26 = vector.load %arg2[%c0_20, %c0_21] : memref<8x32xf32, #tpu.memory_space<vmem>>, vector<8x32xf32>
    %27 = arith.truncf %26 : vector<8x32xf32> to vector<8x32xbf16>
    %c0_22 = arith.constant 0 : index
    %c0_23 = arith.constant 0 : index
    %c0_24 = arith.constant 0 : index
    %28 = vector.load %arg10[%c0_22, %c0_23, %c0_24] : memref<4x32x32xbf16, #tpu.memory_space<vmem>>, vector<1x32x32xbf16>
    %29 = vector.shape_cast %28 : vector<1x32x32xbf16> to vector<32x32xbf16>
    %cst_25 = arith.constant dense<0.000000e+00> : vector<8x32xf32>
    %30 = tpu.matmul %25, %29, %cst_25 {dimension_numbers = #tpu.dot_dimension_numbers<[1], [0], [0], [1], [0, 0, 1, 1], [], []>} : vector<8x32xbf16>, vector<32x32xbf16>, vector<8x32xf32> -> vector<8x32xf32>
    %c0_26 = arith.constant 0 : index
    %c0_27 = arith.constant 0 : index
    %c0_28 = arith.constant 0 : index
    %31 = vector.load %arg11[%c0_26, %c0_27, %c0_28] : memref<4x32x32xbf16, #tpu.memory_space<vmem>>, vector<1x32x32xbf16>
    %32 = vector.shape_cast %31 : vector<1x32x32xbf16> to vector<32x32xbf16>
    %cst_29 = arith.constant dense<0.000000e+00> : vector<8x32xf32>
    %33 = tpu.matmul %27, %32, %cst_29 {dimension_numbers = #tpu.dot_dimension_numbers<[1], [0], [0], [1], [0, 0, 1, 1], [], []>} : vector<8x32xbf16>, vector<32x32xbf16>, vector<8x32xf32> -> vector<8x32xf32>
    %34 = arith.addf %30, %33 : vector<8x32xf32>
    %c0_30 = arith.constant 0 : index
    %c0_31 = arith.constant 0 : index
    %c0_32 = arith.constant 0 : index
    %35 = vector.load %arg12[%c0_30, %c0_31, %c0_32] : memref<4x1x32xf32, #tpu.memory_space<vmem>>, vector<1x1x32xf32>
    %36 = vector.shape_cast %35 : vector<1x1x32xf32> to vector<1x32xf32>
    %37 = vector.broadcast %36 : vector<1x32xf32> to vector<8x32xf32>
    %38 = arith.addf %34, %37 : vector<8x32xf32>
    %c1 = arith.constant 1 : index
    %c0_33 = arith.constant 0 : index
    %c0_34 = arith.constant 0 : index
    %39 = vector.load %arg10[%c1, %c0_33, %c0_34] : memref<4x32x32xbf16, #tpu.memory_space<vmem>>, vector<1x32x32xbf16>
    %40 = vector.shape_cast %39 : vector<1x32x32xbf16> to vector<32x32xbf16>
    %cst_35 = arith.constant dense<0.000000e+00> : vector<8x32xf32>
    %41 = tpu.matmul %25, %40, %cst_35 {dimension_numbers = #tpu.dot_dimension_numbers<[1], [0], [0], [1], [0, 0, 1, 1], [], []>} : vector<8x32xbf16>, vector<32x32xbf16>, vector<8x32xf32> -> vector<8x32xf32>
    %c1_36 = arith.constant 1 : index
    %c0_37 = arith.constant 0 : index
    %c0_38 = arith.constant 0 : index
    %42 = vector.load %arg11[%c1_36, %c0_37, %c0_38] : memref<4x32x32xbf16, #tpu.memory_space<vmem>>, vector<1x32x32xbf16>
    %43 = vector.shape_cast %42 : vector<1x32x32xbf16> to vector<32x32xbf16>
    %cst_39 = arith.constant dense<0.000000e+00> : vector<8x32xf32>
    %44 = tpu.matmul %27, %43, %cst_39 {dimension_numbers = #tpu.dot_dimension_numbers<[1], [0], [0], [1], [0, 0, 1, 1], [], []>} : vector<8x32xbf16>, vector<32x32xbf16>, vector<8x32xf32> -> vector<8x32xf32>
    %45 = arith.addf %41, %44 : vector<8x32xf32>
    %c1_40 = arith.constant 1 : index
    %c0_41 = arith.constant 0 : index
    %c0_42 = arith.constant 0 : index
    %46 = vector.load %arg12[%c1_40, %c0_41, %c0_42] : memref<4x1x32xf32, #tpu.memory_space<vmem>>, vector<1x1x32xf32>
    %47 = vector.shape_cast %46 : vector<1x1x32xf32> to vector<1x32xf32>
    %48 = vector.broadcast %47 : vector<1x32xf32> to vector<8x32xf32>
    %49 = arith.addf %45, %48 : vector<8x32xf32>
    %c2 = arith.constant 2 : index
    %c0_43 = arith.constant 0 : index
    %c0_44 = arith.constant 0 : index
    %50 = vector.load %arg10[%c2, %c0_43, %c0_44] : memref<4x32x32xbf16, #tpu.memory_space<vmem>>, vector<1x32x32xbf16>
    %51 = vector.shape_cast %50 : vector<1x32x32xbf16> to vector<32x32xbf16>
    %cst_45 = arith.constant dense<0.000000e+00> : vector<8x32xf32>
    %52 = tpu.matmul %25, %51, %cst_45 {dimension_numbers = #tpu.dot_dimension_numbers<[1], [0], [0], [1], [0, 0, 1, 1], [], []>} : vector<8x32xbf16>, vector<32x32xbf16>, vector<8x32xf32> -> vector<8x32xf32>
    %c2_46 = arith.constant 2 : index
    %c0_47 = arith.constant 0 : index
    %c0_48 = arith.constant 0 : index
    %53 = vector.load %arg11[%c2_46, %c0_47, %c0_48] : memref<4x32x32xbf16, #tpu.memory_space<vmem>>, vector<1x32x32xbf16>
    %54 = vector.shape_cast %53 : vector<1x32x32xbf16> to vector<32x32xbf16>
    %cst_49 = arith.constant dense<0.000000e+00> : vector<8x32xf32>
    %55 = tpu.matmul %27, %54, %cst_49 {dimension_numbers = #tpu.dot_dimension_numbers<[1], [0], [0], [1], [0, 0, 1, 1], [], []>} : vector<8x32xbf16>, vector<32x32xbf16>, vector<8x32xf32> -> vector<8x32xf32>
    %56 = arith.addf %52, %55 : vector<8x32xf32>
    %c2_50 = arith.constant 2 : index
    %c0_51 = arith.constant 0 : index
    %c0_52 = arith.constant 0 : index
    %57 = vector.load %arg12[%c2_50, %c0_51, %c0_52] : memref<4x1x32xf32, #tpu.memory_space<vmem>>, vector<1x1x32xf32>
    %58 = vector.shape_cast %57 : vector<1x1x32xf32> to vector<1x32xf32>
    %59 = vector.broadcast %58 : vector<1x32xf32> to vector<8x32xf32>
    %60 = arith.addf %56, %59 : vector<8x32xf32>
    %c3 = arith.constant 3 : index
    %c0_53 = arith.constant 0 : index
    %c0_54 = arith.constant 0 : index
    %61 = vector.load %arg10[%c3, %c0_53, %c0_54] : memref<4x32x32xbf16, #tpu.memory_space<vmem>>, vector<1x32x32xbf16>
    %62 = vector.shape_cast %61 : vector<1x32x32xbf16> to vector<32x32xbf16>
    %cst_55 = arith.constant dense<0.000000e+00> : vector<8x32xf32>
    %63 = tpu.matmul %25, %62, %cst_55 {dimension_numbers = #tpu.dot_dimension_numbers<[1], [0], [0], [1], [0, 0, 1, 1], [], []>} : vector<8x32xbf16>, vector<32x32xbf16>, vector<8x32xf32> -> vector<8x32xf32>
    %c3_56 = arith.constant 3 : index
    %c0_57 = arith.constant 0 : index
    %c0_58 = arith.constant 0 : index
    %64 = vector.load %arg11[%c3_56, %c0_57, %c0_58] : memref<4x32x32xbf16, #tpu.memory_space<vmem>>, vector<1x32x32xbf16>
    %65 = vector.shape_cast %64 : vector<1x32x32xbf16> to vector<32x32xbf16>
    %cst_59 = arith.constant dense<0.000000e+00> : vector<8x32xf32>
    %66 = tpu.matmul %27, %65, %cst_59 {dimension_numbers = #tpu.dot_dimension_numbers<[1], [0], [0], [1], [0, 0, 1, 1], [], []>} : vector<8x32xbf16>, vector<32x32xbf16>, vector<8x32xf32> -> vector<8x32xf32>
    %67 = arith.addf %63, %66 : vector<8x32xf32>
    %c3_60 = arith.constant 3 : index
    %c0_61 = arith.constant 0 : index
    %c0_62 = arith.constant 0 : index
    %68 = vector.load %arg12[%c3_60, %c0_61, %c0_62] : memref<4x1x32xf32, #tpu.memory_space<vmem>>, vector<1x1x32xf32>
    %69 = vector.shape_cast %68 : vector<1x1x32xf32> to vector<1x32xf32>
    %70 = vector.broadcast %69 : vector<1x32xf32> to vector<8x32xf32>
    %71 = arith.addf %67, %70 : vector<8x32xf32>
    %cst_63 = arith.constant 5.000000e-01 : f32
    %72 = vector.broadcast %cst_63 : f32 to vector<8x32xf32>
    %73 = arith.mulf %72, %38 : vector<8x32xf32>
    %74 = math.tanh %73 : vector<8x32xf32>
    %cst_64 = arith.constant 5.000000e-01 : f32
    %75 = vector.broadcast %cst_64 : f32 to vector<8x32xf32>
    %76 = arith.mulf %75, %74 : vector<8x32xf32>
    %cst_65 = arith.constant 5.000000e-01 : f32
    %77 = vector.broadcast %cst_65 : f32 to vector<8x32xf32>
    %78 = arith.addf %76, %77 : vector<8x32xf32>
    %cst_66 = arith.constant 5.000000e-01 : f32
    %79 = vector.broadcast %cst_66 : f32 to vector<8x32xf32>
    %80 = arith.mulf %79, %49 : vector<8x32xf32>
    %81 = math.tanh %80 : vector<8x32xf32>
    %cst_67 = arith.constant 5.000000e-01 : f32
    %82 = vector.broadcast %cst_67 : f32 to vector<8x32xf32>
    %83 = arith.mulf %82, %81 : vector<8x32xf32>
    %cst_68 = arith.constant 5.000000e-01 : f32
    %84 = vector.broadcast %cst_68 : f32 to vector<8x32xf32>
    %85 = arith.addf %83, %84 : vector<8x32xf32>
    %86 = math.tanh %60 : vector<8x32xf32>
    %cst_69 = arith.constant 5.000000e-01 : f32
    %87 = vector.broadcast %cst_69 : f32 to vector<8x32xf32>
    %88 = arith.mulf %87, %71 : vector<8x32xf32>
    %89 = math.tanh %88 : vector<8x32xf32>
    %cst_70 = arith.constant 5.000000e-01 : f32
    %90 = vector.broadcast %cst_70 : f32 to vector<8x32xf32>
    %91 = arith.mulf %90, %89 : vector<8x32xf32>
    %cst_71 = arith.constant 5.000000e-01 : f32
    %92 = vector.broadcast %cst_71 : f32 to vector<8x32xf32>
    %93 = arith.addf %91, %92 : vector<8x32xf32>
    %c0_72 = arith.constant 0 : index
    %c0_73 = arith.constant 0 : index
    %94 = vector.load %arg3[%c0_72, %c0_73] : memref<8x32xf32, #tpu.memory_space<vmem>>, vector<8x32xf32>
    %95 = arith.mulf %85, %94 : vector<8x32xf32>
    %96 = arith.mulf %78, %86 : vector<8x32xf32>
    %97 = arith.addf %95, %96 : vector<8x32xf32>
    %98 = math.tanh %97 : vector<8x32xf32>
    %99 = arith.mulf %93, %98 : vector<8x32xf32>
    %c0_74 = arith.constant 0 : index
    %c0_75 = arith.constant 0 : index
    %100 = vector.load %arg21[%c0_74, %c0_75] : memref<8x32xf32, #tpu.memory_space<vmem>>, vector<8x32xf32>
    tpu.vector_store %arg21[%c0_74, %c0_75], %99 {strides = array<i32>} : memref<8x32xf32, #tpu.memory_space<vmem>>, vector<8x32xf32>,
    %c0_76 = arith.constant 0 : index
    %c0_77 = arith.constant 0 : index
    %101 = vector.load %arg22[%c0_76, %c0_77] : memref<8x32xf32, #tpu.memory_space<vmem>>, vector<8x32xf32>
    tpu.vector_store %arg22[%c0_76, %c0_77], %97 {strides = array<i32>} : memref<8x32xf32, #tpu.memory_space<vmem>>, vector<8x32xf32>,
    %102 = arith.truncf %99 : vector<8x32xf32> to vector<8x32xbf16>
    %c0_78 = arith.constant 0 : index
    %c0_79 = arith.constant 0 : index
    %103 = vector.load %arg13[%c0_78, %c0_79] : memref<32x256xbf16, #tpu.memory_space<vmem>>, vector<32x256xbf16>
    %cst_80 = arith.constant dense<0.000000e+00> : vector<8x256xf32>
    %104 = tpu.matmul %102, %103, %cst_80 {dimension_numbers = #tpu.dot_dimension_numbers<[1], [0], [0], [1], [0, 0, 1, 1], [], []>} : vector<8x32xbf16>, vector<32x256xbf16>, vector<8x256xf32> -> vector<8x256xf32>
    %105 = arith.truncf %97 : vector<8x32xf32> to vector<8x32xbf16>
    %c0_81 = arith.constant 0 : index
    %c0_82 = arith.constant 0 : index
    %106 = vector.load %arg14[%c0_81, %c0_82] : memref<32x256xbf16, #tpu.memory_space<vmem>>, vector<32x256xbf16>
    %cst_83 = arith.constant dense<0.000000e+00> : vector<8x256xf32>
    %107 = tpu.matmul %105, %106, %cst_83 {dimension_numbers = #tpu.dot_dimension_numbers<[1], [0], [0], [1], [0, 0, 1, 1], [], []>} : vector<8x32xbf16>, vector<32x256xbf16>, vector<8x256xf32> -> vector<8x256xf32>
    %108 = arith.addf %104, %107 : vector<8x256xf32>
    %c0_84 = arith.constant 0 : index
    %c0_85 = arith.constant 0 : index
    %109 = vector.load %arg15[%c0_84, %c0_85] : memref<1x256xf32, #tpu.memory_space<vmem>>, vector<1x256xf32>
    %110 = vector.broadcast %109 : vector<1x256xf32> to vector<8x256xf32>
    %111 = arith.addf %108, %110 : vector<8x256xf32>
    %cst_86 = arith.constant 0.000000e+00 : f32
    %112 = vector.broadcast %cst_86 : f32 to vector<8x256xf32>
    %113 = arith.maximumf %111, %112 : vector<8x256xf32>
    %114 = arith.truncf %113 : vector<8x256xf32> to vector<8x256xbf16>
    %c0_87 = arith.constant 0 : index
    %c0_88 = arith.constant 0 : index
    %115 = vector.load %arg16[%c0_87, %c0_88] : memref<256x512xbf16, #tpu.memory_space<vmem>>, vector<256x512xbf16>
    %cst_89 = arith.constant dense<0.000000e+00> : vector<8x512xf32>
    %116 = tpu.matmul %114, %115, %cst_89 {dimension_numbers = #tpu.dot_dimension_numbers<[1], [0], [0], [1], [0, 0, 1, 1], [], []>} : vector<8x256xbf16>, vector<256x512xbf16>, vector<8x512xf32> -> vector<8x512xf32>
    %c0_90 = arith.constant 0 : index
    %c0_91 = arith.constant 0 : index
    %117 = vector.load %arg17[%c0_90, %c0_91] : memref<1x512xf32, #tpu.memory_space<vmem>>, vector<1x512xf32>
    %118 = vector.broadcast %117 : vector<1x512xf32> to vector<8x512xf32>
    %119 = arith.addf %116, %118 : vector<8x512xf32>
    %cst_92 = arith.constant 0.000000e+00 : f32
    %120 = vector.broadcast %cst_92 : f32 to vector<8x512xf32>
    %121 = arith.maximumf %119, %120 : vector<8x512xf32>
    %122 = arith.truncf %121 : vector<8x512xf32> to vector<8x512xbf16>
    %c0_93 = arith.constant 0 : index
    %c0_94 = arith.constant 0 : index
    %123 = vector.load %arg18[%c0_93, %c0_94] : memref<512x768xbf16, #tpu.memory_space<vmem>>, vector<512x768xbf16>
    %cst_95 = arith.constant dense<0.000000e+00> : vector<8x768xf32>
    %124 = tpu.matmul %122, %123, %cst_95 {dimension_numbers = #tpu.dot_dimension_numbers<[1], [0], [0], [1], [0, 0, 1, 1], [], []>} : vector<8x512xbf16>, vector<512x768xbf16>, vector<8x768xf32> -> vector<8x768xf32>
    %c0_96 = arith.constant 0 : index
    %c0_97 = arith.constant 0 : index
    %125 = vector.load %arg19[%c0_96, %c0_97] : memref<1x768xf32, #tpu.memory_space<vmem>>, vector<1x768xf32>
    %126 = vector.broadcast %125 : vector<1x768xf32> to vector<8x768xf32>
    %127 = arith.addf %124, %126 : vector<8x768xf32>
    %c0_98 = arith.constant 0 : index
    %c0_99 = arith.constant 0 : index
    %128 = vector.load %arg20[%c0_98, %c0_99] : memref<8x768xf32, #tpu.memory_space<vmem>>, vector<8x768xf32>
    tpu.vector_store %arg20[%c0_98, %c0_99], %127 {strides = array<i32>} : memref<8x768xf32, #tpu.memory_space<vmem>>, vector<8x768xf32>,
    return
  }
}

</mosaic_0001>

<llo_original>
// kernel: rec_env_sim_forward.1
$region0: #{rec_env_sim_forward.1}
  #allocation0 [shape = 'u32[]', space=smem, size = 0x4, offset = 0x4, fixed_abs, tag = 'smem constant byte address 0x4 - core index']
  #allocation1 [shape = 'u32[144,128]{1,0:T(1,128)}', space=vmem, size = 0x12000, scoped, tag = 'internal scratch']
  %s0 = inlined_call_operand.vmem [shape: f32[8,768], index: 0, kind: input, shape index: {}]
  %s1 = inlined_call_operand.vmem [shape: f32[8,4], index: 1, kind: input, shape index: {}]
  %s2 = inlined_call_operand.vmem [shape: f32[8,32], index: 2, kind: input, shape index: {}]
  %s3 = inlined_call_operand.vmem [shape: f32[8,32], index: 3, kind: input, shape index: {}]
  %s4 = inlined_call_operand.hbm [shape: bf16[768,512], index: 4, kind: input, shape index: {}]
  %s5 = inlined_call_operand.vmem [shape: f32[1,512], index: 5, kind: input, shape index: {}]
  %s6 = inlined_call_operand.hbm [shape: bf16[512,256], index: 6, kind: input, shape index: {}]
  %s7 = inlined_call_operand.vmem [shape: f32[1,256], index: 7, kind: input, shape index: {}]
  %s8 = inlined_call_operand.vmem [shape: bf16[256,32], index: 8, kind: input, shape index: {}]
  %s9 = inlined_call_operand.vmem [shape: bf16[4,32], index: 9, kind: input, shape index: {}]
  %s10 = inlined_call_operand.vmem [shape: bf16[4,32,32], index: 10, kind: input, shape index: {}]
  %s11 = inlined_call_operand.vmem [shape: bf16[4,32,32], index: 11, kind: input, shape index: {}]
  %s12 = inlined_call_operand.vmem [shape: f32[4,1,32], index: 12, kind: input, shape index: {}]
  %s13 = inlined_call_operand.vmem [shape: bf16[32,256], index: 13, kind: input, shape index: {}]
  %s14 = inlined_call_operand.vmem [shape: bf16[32,256], index: 14, kind: input, shape index: {}]
  %s15 = inlined_call_operand.vmem [shape: f32[1,256], index: 15, kind: input, shape index: {}]
  %s16 = inlined_call_operand.hbm [shape: bf16[256,512], index: 16, kind: input, shape index: {}]
  %s17 = inlined_call_operand.vmem [shape: f32[1,512], index: 17, kind: input, shape index: {}]
  %s18 = inlined_call_operand.hbm [shape: bf16[512,768], index: 18, kind: input, shape index: {}]
  %s19 = inlined_call_operand.vmem [shape: f32[1,768], index: 19, kind: input, shape index: {}]
  %s20 = inlined_call_operand.vmem [shape: f32[8,768], index: 20, kind: output, shape index: {0}]
  %s21 = inlined_call_operand.vmem [shape: f32[8,32], index: 21, kind: output, shape index: {1}]
  %s22 = inlined_call_operand.vmem [shape: f32[8,32], index: 22, kind: output, shape index: {2}]
  %23 = xla_tuple %s20, %s21, %s22
  %s24 = sld [smem:[#allocation0]]
  $region122: #{rec_env_sim_forward.1} parent=0
    _
  %s26 = ssub.s32 1, %s24
  %s27 = scalar_select 0, %s26, %s24
  $region1: #{rec_env_sim_forward.1} parent=0
    #allocation2 [shape = 'u8[786432]{0}', space=vmem, size = 0xc0000, scoped, tag = 'input window, operand 4, single buffered']
    #allocation3 [shape = 's32[1]{0}', space=sflag, size = 0x4, scoped, tag = 'scoped memory for rec_env_sim_forward.1']
    #allocation4 [shape = 'u8[262144]{0}', space=vmem, size = 0x40000, scoped, tag = 'input window, operand 6, single buffered']
    #allocation5 [shape = 's32[1]{0}', space=sflag, size = 0x4, scoped, tag = 'scoped memory for rec_env_sim_forward.1']
    #allocation6 [shape = 'u8[262144]{0}', space=vmem, size = 0x40000, scoped, tag = 'input window, operand 16, single buffered']
    #allocation7 [shape = 'u8[786432]{0}', space=vmem, size = 0xc0000, scoped, tag = 'input window, operand 18, single buffered']
    #allocation8 [shape = 's32[1]{0}', space=sflag, size = 0x4, scoped, tag = 'scoped memory for rec_env_sim_forward.1']
    %28 = vsyncpa [#allocation3], 0
    %29 = vsyncpa [#allocation5], 0
    %30 = vsyncpa [#allocation8], 0
    // Predicated region
    $region2: #{rec_env_sim_forward.1} parent=1 // pred_check
      _
    $region3: #{rec_env_sim_forward.1} parent=1 // pred_check_branch
      %32 = sbr.rel (0) target = $region5
    $region4: #{rec_env_sim_forward.1} parent=1 // pred_region
      _
    $region5: #{rec_env_sim_forward.1} parent=1 // pred_fallthru
      _
    // Predicated region
    $region6: #{rec_env_sim_forward.1} parent=1 // pred_check
      _
    $region7: #{rec_env_sim_forward.1} parent=1 // pred_check_branch
      %34 = sbr.rel (0) target = $region9
    $region8: #{rec_env_sim_forward.1} parent=1 // pred_region
      _
    $region9: #{rec_env_sim_forward.1} parent=1 // pred_fallthru
      _
    // Predicated region
    $region10: #{rec_env_sim_forward.1} parent=1 // pred_check
      _
    $region11: #{rec_env_sim_forward.1} parent=1 // pred_check_branch
      %36 = sbr.rel (0) target = $region13
    $region12: #{rec_env_sim_forward.1} parent=1 // pred_region
      _
    $region13: #{rec_env_sim_forward.1} parent=1 // pred_fallthru
      _
    // Predicated region
    $region14: #{rec_env_sim_forward.1} parent=1 // pred_check
      _
    $region15: #{rec_env_sim_forward.1} parent=1 // pred_check_branch
      %38 = sbr.rel (0) target = $region17
    $region16: #{rec_env_sim_forward.1} parent=1 // pred_region
      _
    $region17: #{rec_env_sim_forward.1} parent=1 // pred_fallthru
      _
    // Predicated region
    $region18: #{rec_env_sim_forward.1} parent=1 // pred_check
      _
    $region19: #{rec_env_sim_forward.1} parent=1 // pred_check_branch
      %40 = sbr.rel (0) target = $region21
    $region20: #{rec_env_sim_forward.1} parent=1 // pred_region
      %s42 = ssub.s32 24576, 24576
      %43 = vsyncadd [#allocation3], %s42
      %s44 = sshll.u32 [#allocation2], 4
      %s45 = int_to_ptr.vmem [resolvable:$true] %s44
      %50 = dma.hbm_to_vmem [thread:$0]  %s4, 24576, %s45, [#allocation3], 256, 256, 16
    $region21: #{rec_env_sim_forward.1} parent=1 // pred_fallthru
      _
    // Predicated region
    $region22: #{rec_env_sim_forward.1} parent=1 // pred_check
      _
    $region23: #{rec_env_sim_forward.1} parent=1 // pred_check_branch
      %52 = sbr.rel (0) target = $region25
    $region24: #{rec_env_sim_forward.1} parent=1 // pred_region
      _
    $region25: #{rec_env_sim_forward.1} parent=1 // pred_fallthru
      _
    // Predicated region
    $region26: #{rec_env_sim_forward.1} parent=1 // pred_check
      _
    $region27: #{rec_env_sim_forward.1} parent=1 // pred_check_branch
      %54 = sbr.rel (0) target = $region29
    $region28: #{rec_env_sim_forward.1} parent=1 // pred_region
      %s56 = ssub.s32 8192, 8192
      %57 = vsyncadd [#allocation5], %s56
      %s58 = sshll.u32 [#allocation4], 4
      %s59 = int_to_ptr.vmem [resolvable:$true] %s58
      %64 = dma.hbm_to_vmem [thread:$0]  %s6, 8192, %s59, [#allocation5], 128, 128, 8
    $region29: #{rec_env_sim_forward.1} parent=1 // pred_fallthru
      _
    // Predicated region
    $region30: #{rec_env_sim_forward.1} parent=1 // pred_check
      _
    $region31: #{rec_env_sim_forward.1} parent=1 // pred_check_branch
      %66 = sbr.rel (0) target = $region33
    $region32: #{rec_env_sim_forward.1} parent=1 // pred_region
      _
    $region33: #{rec_env_sim_forward.1} parent=1 // pred_fallthru
      _
    // Predicated region
    $region34: #{rec_env_sim_forward.1} parent=1 // pred_check
      _
    $region35: #{rec_env_sim_forward.1} parent=1 // pred_check_branch
      %68 = sbr.rel (0) target = $region37
    $region36: #{rec_env_sim_forward.1} parent=1 // pred_region
      _
    $region37: #{rec_env_sim_forward.1} parent=1 // pred_fallthru
      _
    // Predicated region
    $region38: #{rec_env_sim_forward.1} parent=1 // pred_check
      _
    $region39: #{rec_env_sim_forward.1} parent=1 // pred_check_branch
      %70 = sbr.rel (0) target = $region41
    $region40: #{rec_env_sim_forward.1} parent=1 // pred_region
      _
    $region41: #{rec_env_sim_forward.1} parent=1 // pred_fallthru
      _
    // Predicated region
    $region42: #{rec_env_sim_forward.1} parent=1 // pred_check
      _
    $region43: #{rec_env_sim_forward.1} parent=1 // pred_check_branch
      %72 = sbr.rel (0) target = $region45
    $region44: #{rec_env_sim_forward.1} parent=1 // pred_region
      _
    $region45: #{rec_env_sim_forward.1} parent=1 // pred_fallthru
      _
    // Predicated region
    $region46: #{rec_env_sim_forward.1} parent=1 // pred_check
      _
    $region47: #{rec_env_sim_forward.1} parent=1 // pred_check_branch
      %74 = sbr.rel (0) target = $region49
    $region48: #{rec_env_sim_forward.1} parent=1 // pred_region
      _
    $region49: #{rec_env_sim_forward.1} parent=1 // pred_fallthru
      _
    // Predicated region
    $region50: #{rec_env_sim_forward.1} parent=1 // pred_check
      _
    $region51: #{rec_env_sim_forward.1} parent=1 // pred_check_branch
      %76 = sbr.rel (0) target = $region53
    $region52: #{rec_env_sim_forward.1} parent=1 // pred_region
      _
    $region53: #{rec_env_sim_forward.1} parent=1 // pred_fallthru
      _
    // Predicated region
    $region54: #{rec_env_sim_forward.1} parent=1 // pred_check
      _
    $region55: #{rec_env_sim_forward.1} parent=1 // pred_check_branch
      %78 = sbr.rel (0) target = $region57
    $region56: #{rec_env_sim_forward.1} parent=1 // pred_region
      _
    $region57: #{rec_env_sim_forward.1} parent=1 // pred_fallthru
      _
    // Predicated region
    $region58: #{rec_env_sim_forward.1} parent=1 // pred_check
      _
    $region59: #{rec_env_sim_forward.1} parent=1 // pred_check_branch
      %80 = sbr.rel (0) target = $region61
    $region60: #{rec_env_sim_forward.1} parent=1 // pred_region
      _
    $region61: #{rec_env_sim_forward.1} parent=1 // pred_fallthru
      _
    // Predicated region
    $region62: #{rec_env_sim_forward.1} parent=1 // pred_check
      _
    $region63: #{rec_env_sim_forward.1} parent=1 // pred_check_branch
      %82 = sbr.rel (0) target = $region65
    $region64: #{rec_env_sim_forward.1} parent=1 // pred_region
      _
    $region65: #{rec_env_sim_forward.1} parent=1 // pred_fallthru
      _
    // Predicated region
    $region66: #{rec_env_sim_forward.1} parent=1 // pred_check
      _
    $region67: #{rec_env_sim_forward.1} parent=1 // pred_check_branch
      %84 = sbr.rel (0) target = $region69
    $region68: #{rec_env_sim_forward.1} parent=1 // pred_region
      %s86 = ssub.s32 8192, 8192
      %87 = vsyncadd [#allocation5], %s86
      %s88 = sshll.u32 [#allocation6], 4
      %s89 = int_to_ptr.vmem [resolvable:$true] %s88
      %94 = dma.hbm_to_vmem [thread:$0]  %s16, 8192, %s89, [#allocation5], 256, 256, 16
    $region69: #{rec_env_sim_forward.1} parent=1 // pred_fallthru
      _
    // Predicated region
    $region70: #{rec_env_sim_forward.1} parent=1 // pred_check
      _
    $region71: #{rec_env_sim_forward.1} parent=1 // pred_check_branch
      %96 = sbr.rel (0) target = $region73
    $region72: #{rec_env_sim_forward.1} parent=1 // pred_region
      _
    $region73: #{rec_env_sim_forward.1} parent=1 // pred_fallthru
      _
    // Predicated region
    $region74: #{rec_env_sim_forward.1} parent=1 // pred_check
      _
    $region75: #{rec_env_sim_forward.1} parent=1 // pred_check_branch
      %98 = sbr.rel (0) target = $region77
    $region76: #{rec_env_sim_forward.1} parent=1 // pred_region
      %s100 = ssub.s32 24576, 24576
      %101 = vsyncadd [#allocation8], %s100
      %s102 = sshll.u32 [#allocation7], 4
      %s103 = int_to_ptr.vmem [resolvable:$true] %s102
      %108 = dma.hbm_to_vmem [thread:$0]  %s18, 24576, %s103, [#allocation8], 384, 384, 24
    $region77: #{rec_env_sim_forward.1} parent=1 // pred_fallthru
      _
    // Predicated region
    $region78: #{rec_env_sim_forward.1} parent=1 // pred_check
      _
    $region79: #{rec_env_sim_forward.1} parent=1 // pred_check_branch
      %110 = sbr.rel (0) target = $region81
    $region80: #{rec_env_sim_forward.1} parent=1 // pred_region
      _
    $region81: #{rec_env_sim_forward.1} parent=1 // pred_fallthru
      _
    // Predicated region
    $region82: #{rec_env_sim_forward.1} parent=1 // pred_check
      _
    $region83: #{rec_env_sim_forward.1} parent=1 // pred_check_branch
      %112 = sbr.rel (0) target = $region85
    $region84: #{rec_env_sim_forward.1} parent=1 // pred_region
      %113 = dma.done [#allocation3], 24576
    $region85: #{rec_env_sim_forward.1} parent=1 // pred_fallthru
      _
    // Predicated region
    $region86: #{rec_env_sim_forward.1} parent=1 // pred_check
      _
    $region87: #{rec_env_sim_forward.1} parent=1 // pred_check_branch
      %115 = sbr.rel (0) target = $region89
    $region88: #{rec_env_sim_forward.1} parent=1 // pred_region
      %116 = dma.done [#allocation5], 8192
    $region89: #{rec_env_sim_forward.1} parent=1 // pred_fallthru
      _
    // Predicated region
    $region90: #{rec_env_sim_forward.1} parent=1 // pred_check
      _
    $region91: #{rec_env_sim_forward.1} parent=1 // pred_check_branch
      %118 = sbr.rel (0) target = $region93
    $region92: #{rec_env_sim_forward.1} parent=1 // pred_region
      %119 = dma.done [#allocation5], 8192
    $region93: #{rec_env_sim_forward.1} parent=1 // pred_fallthru
      _
    // Predicated region
    $region94: #{rec_env_sim_forward.1} parent=1 // pred_check
      _
    $region95: #{rec_env_sim_forward.1} parent=1 // pred_check_branch
      %121 = sbr.rel (0) target = $region97
    $region96: #{rec_env_sim_forward.1} parent=1 // pred_region
      %122 = dma.done [#allocation8], 24576
    $region97: #{rec_env_sim_forward.1} parent=1 // pred_fallthru
      _
    %v124 = vld [vmem:[%s0] sm:$0xff]
    %v125 = vld [vmem:[%s0 + $0x8] sm:$0xff]
    %v126 = vld [vmem:[%s0 + $0x10] sm:$0xff]
    %v127 = vld [vmem:[%s0 + $0x18] sm:$0xff]
    %v128 = vld [vmem:[%s0 + $0x20] sm:$0xff]
    %v129 = vld [vmem:[%s0 + $0x28] sm:$0xff]
    %v130 = vpack.c.bf16 %v124, %v124
    %v131 = vpack.c.bf16 %v125, %v125
    %v132 = vpack.c.bf16 %v126, %v126
    %v133 = vpack.c.bf16 %v127, %v127
    %v134 = vpack.c.bf16 %v128, %v128
    %v135 = vpack.c.bf16 %v129, %v129
    %v136 = vld [vmem:[#allocation2] sm:$0xff]
    %v137 = vld [vmem:[#allocation2 + $0x8] sm:$0xff]
    %v138 = vld [vmem:[#allocation2 + $0x10] sm:$0xff]
    %v139 = vld [vmem:[#allocation2 + $0x18] sm:$0xff]
    %v140 = vld [vmem:[#allocation2 + $0x20] sm:$0xff]
    %v141 = vld [vmem:[#allocation2 + $0x28] sm:$0xff]
    %v142 = vld [vmem:[#allocation2 + $0x30] sm:$0xff]
    %v143 = vld [vmem:[#allocation2 + $0x38] sm:$0xff]
    %v144 = vld [vmem:[#allocation2 + $0x40] sm:$0xff]
    %v145 = vld [vmem:[#allocation2 + $0x48] sm:$0xff]
    %v146 = vld [vmem:[#allocation2 + $0x50] sm:$0xff]
    %v147 = vld [vmem:[#allocation2 + $0x58] sm:$0xff]
    %v148 = vld [vmem:[#allocation2 + $0x60] sm:$0xff]
    %v149 = vld [vmem:[#allocation2 + $0x68] sm:$0xff]
    %v150 = vld [vmem:[#allocation2 + $0x70] sm:$0xff]
    %v151 = vld [vmem:[#allocation2 + $0x78] sm:$0xff]
    %v152 = vld [vmem:[#allocation2 + $0x80] sm:$0xff]
    %v153 = vld [vmem:[#allocation2 + $0x88] sm:$0xff]
    %v154 = vld [vmem:[#allocation2 + $0x90] sm:$0xff]
    %v155 = vld [vmem:[#allocation2 + $0x98] sm:$0xff]
    %v156 = vld [vmem:[#allocation2 + $0xa0] sm:$0xff]
    %v157 = vld [vmem:[#allocation2 + $0xa8] sm:$0xff]
    %v158 = vld [vmem:[#allocation2 + $0xb0] sm:$0xff]
    %v159 = vld [vmem:[#allocation2 + $0xb8] sm:$0xff]
    %v160 = vld [vmem:[#allocation2 + $0xc0] sm:$0xff]
    %v161 = vld [vmem:[#allocation2 + $0xc8] sm:$0xff]
    %v162 = vld [vmem:[#allocation2 + $0xd0] sm:$0xff]
    %v163 = vld [vmem:[#allocation2 + $0xd8] sm:$0xff]
    %v164 = vld [vmem:[#allocation2 + $0xe0] sm:$0xff]
    %v165 = vld [vmem:[#allocation2 + $0xe8] sm:$0xff]
    %v166 = vld [vmem:[#allocation2 + $0xf0] sm:$0xff]
    %v167 = vld [vmem:[#allocation2 + $0xf8] sm:$0xff]
    %v168 = vld [vmem:[#allocation2 + $0x100] sm:$0xff]
    %v169 = vld [vmem:[#allocation2 + $0x108] sm:$0xff]
    %v170 = vld [vmem:[#allocation2 + $0x110] sm:$0xff]
    %v171 = vld [vmem:[#allocation2 + $0x118] sm:$0xff]
    %v172 = vld [vmem:[#allocation2 + $0x120] sm:$0xff]
    %v173 = vld [vmem:[#allocation2 + $0x128] sm:$0xff]
    %v174 = vld [vmem:[#allocation2 + $0x130] sm:$0xff]
    %v175 = vld [vmem:[#allocation2 + $0x138] sm:$0xff]
    %v176 = vld [vmem:[#allocation2 + $0x140] sm:$0xff]
    %v177 = vld [vmem:[#allocation2 + $0x148] sm:$0xff]
    %v178 = vld [vmem:[#allocation2 + $0x150] sm:$0xff]
    %v179 = vld [vmem:[#allocation2 + $0x158] sm:$0xff]
    %v180 = vld [vmem:[#allocation2 + $0x160] sm:$0xff]
    %v181 = vld [vmem:[#allocation2 + $0x168] sm:$0xff]
    %v182 = vld [vmem:[#allocation2 + $0x170] sm:$0xff]
    %v183 = vld [vmem:[#allocation2 + $0x178] sm:$0xff]
    %v184 = vld [vmem:[#allocation2 + $0x180] sm:$0xff]
    %v185 = vld [vmem:[#allocation2 + $0x188] sm:$0xff]
    %v186 = vld [vmem:[#allocation2 + $0x190] sm:$0xff]
    %v187 = vld [vmem:[#allocation2 + $0x198] sm:$0xff]
    %v188 = vld [vmem:[#allocation2 + $0x1a0] sm:$0xff]
    %v189 = vld [vmem:[#allocation2 + $0x1a8] sm:$0xff]
    %v190 = vld [vmem:[#allocation2 + $0x1b0] sm:$0xff]
    %v191 = vld [vmem:[#allocation2 + $0x1b8] sm:$0xff]
    %v192 = vld [vmem:[#allocation2 + $0x1c0] sm:$0xff]
    %v193 = vld [vmem:[#allocation2 + $0x1c8] sm:$0xff]
    %v194 = vld [vmem:[#allocation2 + $0x1d0] sm:$0xff]
    %v195 = vld [vmem:[#allocation2 + $0x1d8] sm:$0xff]
    %v196 = vld [vmem:[#allocation2 + $0x1e0] sm:$0xff]
    %v197 = vld [vmem:[#allocation2 + $0x1e8] sm:$0xff]
    %v198 = vld [vmem:[#allocation2 + $0x1f0] sm:$0xff]
    %v199 = vld [vmem:[#allocation2 + $0x1f8] sm:$0xff]
    %v200 = vld [vmem:[#allocation2 + $0x200] sm:$0xff]
    %v201 = vld [vmem:[#allocation2 + $0x208] sm:$0xff]
    %v202 = vld [vmem:[#allocation2 + $0x210] sm:$0xff]
    %v203 = vld [vmem:[#allocation2 + $0x218] sm:$0xff]
    %v204 = vld [vmem:[#allocation2 + $0x220] sm:$0xff]
    %v205 = vld [vmem:[#allocation2 + $0x228] sm:$0xff]
    %v206 = vld [vmem:[#allocation2 + $0x230] sm:$0xff]
    %v207 = vld [vmem:[#allocation2 + $0x238] sm:$0xff]
    %v208 = vld [vmem:[#allocation2 + $0x240] sm:$0xff]
    %v209 = vld [vmem:[#allocation2 + $0x248] sm:$0xff]
    %v210 = vld [vmem:[#allocation2 + $0x250] sm:$0xff]
    %v211 = vld [vmem:[#allocation2 + $0x258] sm:$0xff]
    %v212 = vld [vmem:[#allocation2 + $0x260] sm:$0xff]
    %v213 = vld [vmem:[#allocation2 + $0x268] sm:$0xff]
    %v214 = vld [vmem:[#allocation2 + $0x270] sm:$0xff]
    %v215 = vld [vmem:[#allocation2 + $0x278] sm:$0xff]
    %v216 = vld [vmem:[#allocation2 + $0x280] sm:$0xff]
    %v217 = vld [vmem:[#allocation2 + $0x288] sm:$0xff]
    %v218 = vld [vmem:[#allocation2 + $0x290] sm:$0xff]
    %v219 = vld [vmem:[#allocation2 + $0x298] sm:$0xff]
    %v220 = vld [vmem:[#allocation2 + $0x2a0] sm:$0xff]
    %v221 = vld [vmem:[#allocation2 + $0x2a8] sm:$0xff]
    %v222 = vld [vmem:[#allocation2 + $0x2b0] sm:$0xff]
    %v223 = vld [vmem:[#allocation2 + $0x2b8] sm:$0xff]
    %v224 = vld [vmem:[#allocation2 + $0x2c0] sm:$0xff]
    %v225 = vld [vmem:[#allocation2 + $0x2c8] sm:$0xff]
    %v226 = vld [vmem:[#allocation2 + $0x2d0] sm:$0xff]
    %v227 = vld [vmem:[#allocation2 + $0x2d8] sm:$0xff]
    %v228 = vld [vmem:[#allocation2 + $0x2e0] sm:$0xff]
    %v229 = vld [vmem:[#allocation2 + $0x2e8] sm:$0xff]
    %v230 = vld [vmem:[#allocation2 + $0x2f0] sm:$0xff]
    %v231 = vld [vmem:[#allocation2 + $0x2f8] sm:$0xff]
    %v232 = vld [vmem:[#allocation2 + $0x300] sm:$0xff]
    %v233 = vld [vmem:[#allocation2 + $0x308] sm:$0xff]
    %v234 = vld [vmem:[#allocation2 + $0x310] sm:$0xff]
    %v235 = vld [vmem:[#allocation2 + $0x318] sm:$0xff]
    %v236 = vld [vmem:[#allocation2 + $0x320] sm:$0xff]
    %v237 = vld [vmem:[#allocation2 + $0x328] sm:$0xff]
    %v238 = vld [vmem:[#allocation2 + $0x330] sm:$0xff]
    %v239 = vld [vmem:[#allocation2 + $0x338] sm:$0xff]
    %v240 = vld [vmem:[#allocation2 + $0x340] sm:$0xff]
    %v241 = vld [vmem:[#allocation2 + $0x348] sm:$0xff]
    %v242 = vld [vmem:[#allocation2 + $0x350] sm:$0xff]
    %v243 = vld [vmem:[#allocation2 + $0x358] sm:$0xff]
    %v244 = vld [vmem:[#allocation2 + $0x360] sm:$0xff]
    %v245 = vld [vmem:[#allocation2 + $0x368] sm:$0xff]
    %v246 = vld [vmem:[#allocation2 + $0x370] sm:$0xff]
    %v247 = vld [vmem:[#allocation2 + $0x378] sm:$0xff]
    %v248 = vld [vmem:[#allocation2 + $0x380] sm:$0xff]
    %v249 = vld [vmem:[#allocation2 + $0x388] sm:$0xff]
    %v250 = vld [vmem:[#allocation2 + $0x390] sm:$0xff]
    %v251 = vld [vmem:[#allocation2 + $0x398] sm:$0xff]
    %v252 = vld [vmem:[#allocation2 + $0x3a0] sm:$0xff]
    %v253 = vld [vmem:[#allocation2 + $0x3a8] sm:$0xff]
    %v254 = vld [vmem:[#allocation2 + $0x3b0] sm:$0xff]
    %v255 = vld [vmem:[#allocation2 + $0x3b8] sm:$0xff]
    %v256 = vld [vmem:[#allocation2 + $0x3c0] sm:$0xff]
    %v257 = vld [vmem:[#allocation2 + $0x3c8] sm:$0xff]
    %v258 = vld [vmem:[#allocation2 + $0x3d0] sm:$0xff]
    %v259 = vld [vmem:[#allocation2 + $0x3d8] sm:$0xff]
    %v260 = vld [vmem:[#allocation2 + $0x3e0] sm:$0xff]
    %v261 = vld [vmem:[#allocation2 + $0x3e8] sm:$0xff]
    %v262 = vld [vmem:[#allocation2 + $0x3f0] sm:$0xff]
    %v263 = vld [vmem:[#allocation2 + $0x3f8] sm:$0xff]
    %v264 = vld [vmem:[#allocation2 + $0x400] sm:$0xff]
    %v265 = vld [vmem:[#allocation2 + $0x408] sm:$0xff]
    %v266 = vld [vmem:[#allocation2 + $0x410] sm:$0xff]
    %v267 = vld [vmem:[#allocation2 + $0x418] sm:$0xff]
    %v268 = vld [vmem:[#allocation2 + $0x420] sm:$0xff]
    %v269 = vld [vmem:[#allocation2 + $0x428] sm:$0xff]
    %v270 = vld [vmem:[#allocation2 + $0x430] sm:$0xff]
    %v271 = vld [vmem:[#allocation2 + $0x438] sm:$0xff]
    %v272 = vld [vmem:[#allocation2 + $0x440] sm:$0xff]
    %v273 = vld [vmem:[#allocation2 + $0x448] sm:$0xff]
    %v274 = vld [vmem:[#allocation2 + $0x450] sm:$0xff]
    %v275 = vld [vmem:[#allocation2 + $0x458] sm:$0xff]
    %v276 = vld [vmem:[#allocation2 + $0x460] sm:$0xff]
    %v277 = vld [vmem:[#allocation2 + $0x468] sm:$0xff]
    %v278 = vld [vmem:[#allocation2 + $0x470] sm:$0xff]
    %v279 = vld [vmem:[#allocation2 + $0x478] sm:$0xff]
    %v280 = vld [vmem:[#allocation2 + $0x480] sm:$0xff]
    %v281 = vld [vmem:[#allocation2 + $0x488] sm:$0xff]
    %v282 = vld [vmem:[#allocation2 + $0x490] sm:$0xff]
    %v283 = vld [vmem:[#allocation2 + $0x498] sm:$0xff]
    %v284 = vld [vmem:[#allocation2 + $0x4a0] sm:$0xff]
    %v285 = vld [vmem:[#allocation2 + $0x4a8] sm:$0xff]
    %v286 = vld [vmem:[#allocation2 + $0x4b0] sm:$0xff]
    %v287 = vld [vmem:[#allocation2 + $0x4b8] sm:$0xff]
    %v288 = vld [vmem:[#allocation2 + $0x4c0] sm:$0xff]
    %v289 = vld [vmem:[#allocation2 + $0x4c8] sm:$0xff]
    %v290 = vld [vmem:[#allocation2 + $0x4d0] sm:$0xff]
    %v291 = vld [vmem:[#allocation2 + $0x4d8] sm:$0xff]
    %v292 = vld [vmem:[#allocation2 + $0x4e0] sm:$0xff]
    %v293 = vld [vmem:[#allocation2 + $0x4e8] sm:$0xff]
    %v294 = vld [vmem:[#allocation2 + $0x4f0] sm:$0xff]
    %v295 = vld [vmem:[#allocation2 + $0x4f8] sm:$0xff]
    %v296 = vld [vmem:[#allocation2 + $0x500] sm:$0xff]
    %v297 = vld [vmem:[#allocation2 + $0x508] sm:$0xff]
    %v298 = vld [vmem:[#allocation2 + $0x510] sm:$0xff]
    %v299 = vld [vmem:[#allocation2 + $0x518] sm:$0xff]
    %v300 = vld [vmem:[#allocation2 + $0x520] sm:$0xff]
    %v301 = vld [vmem:[#allocation2 + $0x528] sm:$0xff]
    %v302 = vld [vmem:[#allocation2 + $0x530] sm:$0xff]
    %v303 = vld [vmem:[#allocation2 + $0x538] sm:$0xff]
    %v304 = vld [vmem:[#allocation2 + $0x540] sm:$0xff]
    %v305 = vld [vmem:[#allocation2 + $0x548] sm:$0xff]
    %v306 = vld [vmem:[#allocation2 + $0x550] sm:$0xff]
    %v307 = vld [vmem:[#allocation2 + $0x558] sm:$0xff]
    %v308 = vld [vmem:[#allocation2 + $0x560] sm:$0xff]
    %v309 = vld [vmem:[#allocation2 + $0x568] sm:$0xff]
    %v310 = vld [vmem:[#allocation2 + $0x570] sm:$0xff]
    %v311 = vld [vmem:[#allocation2 + $0x578] sm:$0xff]
    %v312 = vld [vmem:[#allocation2 + $0x580] sm:$0xff]
    %v313 = vld [vmem:[#allocation2 + $0x588] sm:$0xff]
    %v314 = vld [vmem:[#allocation2 + $0x590] sm:$0xff]
    %v315 = vld [vmem:[#allocation2 + $0x598] sm:$0xff]
    %v316 = vld [vmem:[#allocation2 + $0x5a0] sm:$0xff]
    %v317 = vld [vmem:[#allocation2 + $0x5a8] sm:$0xff]
    %v318 = vld [vmem:[#allocation2 + $0x5b0] sm:$0xff]
    %v319 = vld [vmem:[#allocation2 + $0x5b8] sm:$0xff]
    %v320 = vld [vmem:[#allocation2 + $0x5c0] sm:$0xff]
    %v321 = vld [vmem:[#allocation2 + $0x5c8] sm:$0xff]
    %v322 = vld [vmem:[#allocation2 + $0x5d0] sm:$0xff]
    %v323 = vld [vmem:[#allocation2 + $0x5d8] sm:$0xff]
    %v324 = vld [vmem:[#allocation2 + $0x5e0] sm:$0xff]
    %v325 = vld [vmem:[#allocation2 + $0x5e8] sm:$0xff]
    %v326 = vld [vmem:[#allocation2 + $0x5f0] sm:$0xff]
    %v327 = vld [vmem:[#allocation2 + $0x5f8] sm:$0xff]
    %v328 = vld [vmem:[%s5] sm:$0xf]
    %v330 = vlaneseq
    %v331 = vshrl.u32 %v330, 7
    %v332 = vsub.s32 0, %v331
    %v333 = vrot.slane %v328, %v332
    %v334 = vlaneseq
    %v335 = vshrl.u32 %v334, 7
    %v336 = vsub.s32 1, %v335
    %v337 = vrot.slane %v328, %v336
    %v338 = vlaneseq
    %v339 = vshrl.u32 %v338, 7
    %v340 = vsub.s32 2, %v339
    %v341 = vrot.slane %v328, %v340
    %v342 = vlaneseq
    %v343 = vshrl.u32 %v342, 7
    %v344 = vsub.s32 3, %v343
    %v345 = vrot.slane %v328, %v344
    %v542 = vunpack.c.l.b16 %v136
    %v543 = vunpack.c.h.b16 %v136
    %v544 = vunpack.c.l.b16 %v137
    %v545 = vunpack.c.h.b16 %v137
    %v546 = vunpack.c.l.b16 %v138
    %v547 = vunpack.c.h.b16 %v138
    %v548 = vunpack.c.l.b16 %v139
    %v549 = vunpack.c.h.b16 %v139
    %v550 = vunpack.c.l.b16 %v140
    %v551 = vunpack.c.h.b16 %v140
    %v552 = vunpack.c.l.b16 %v141
    %v553 = vunpack.c.h.b16 %v141
    %v554 = vunpack.c.l.b16 %v142
    %v555 = vunpack.c.h.b16 %v142
    %v556 = vunpack.c.l.b16 %v143
    %v557 = vunpack.c.h.b16 %v143
    %v558 = vunpack.c.l.b16 %v144
    %v559 = vunpack.c.h.b16 %v144
    %v560 = vunpack.c.l.b16 %v145
    %v561 = vunpack.c.h.b16 %v145
    %v562 = vunpack.c.l.b16 %v146
    %v563 = vunpack.c.h.b16 %v146
    %v564 = vunpack.c.l.b16 %v147
    %v565 = vunpack.c.h.b16 %v147
    %v566 = vunpack.c.l.b16 %v148
    %v567 = vunpack.c.h.b16 %v148
    %v568 = vunpack.c.l.b16 %v149
    %v569 = vunpack.c.h.b16 %v149
    %v570 = vunpack.c.l.b16 %v150
    %v571 = vunpack.c.h.b16 %v150
    %v572 = vunpack.c.l.b16 %v151
    %v573 = vunpack.c.h.b16 %v151
    %v574 = vunpack.c.l.b16 %v152
    %v575 = vunpack.c.h.b16 %v152
    %v576 = vunpack.c.l.b16 %v153
    %v577 = vunpack.c.h.b16 %v153
    %v578 = vunpack.c.l.b16 %v154
    %v579 = vunpack.c.h.b16 %v154
    %v580 = vunpack.c.l.b16 %v155
    %v581 = vunpack.c.h.b16 %v155
    %v582 = vunpack.c.l.b16 %v156
    %v583 = vunpack.c.h.b16 %v156
    %v584 = vunpack.c.l.b16 %v157
    %v585 = vunpack.c.h.b16 %v157
    %v586 = vunpack.c.l.b16 %v158
    %v587 = vunpack.c.h.b16 %v158
    %v588 = vunpack.c.l.b16 %v159
    %v589 = vunpack.c.h.b16 %v159
    %v590 = vunpack.c.l.b16 %v160
    %v591 = vunpack.c.h.b16 %v160
    %v592 = vunpack.c.l.b16 %v161
    %v593 = vunpack.c.h.b16 %v161
    %v594 = vunpack.c.l.b16 %v162
    %v595 = vunpack.c.h.b16 %v162
    %v596 = vunpack.c.l.b16 %v163
    %v597 = vunpack.c.h.b16 %v163
    %v598 = vunpack.c.l.b16 %v164
    %v599 = vunpack.c.h.b16 %v164
    %v600 = vunpack.c.l.b16 %v165
    %v601 = vunpack.c.h.b16 %v165
    %v602 = vunpack.c.l.b16 %v166
    %v603 = vunpack.c.h.b16 %v166
    %v604 = vunpack.c.l.b16 %v167
    %v605 = vunpack.c.h.b16 %v167
    %v606 = vunpack.c.l.b16 %v168
    %v607 = vunpack.c.h.b16 %v168
    %v608 = vunpack.c.l.b16 %v169
    %v609 = vunpack.c.h.b16 %v169
    %v610 = vunpack.c.l.b16 %v170
    %v611 = vunpack.c.h.b16 %v170
    %v612 = vunpack.c.l.b16 %v171
    %v613 = vunpack.c.h.b16 %v171
    %v614 = vunpack.c.l.b16 %v172
    %v615 = vunpack.c.h.b16 %v172
    %v616 = vunpack.c.l.b16 %v173
    %v617 = vunpack.c.h.b16 %v173
    %v618 = vunpack.c.l.b16 %v174
    %v619 = vunpack.c.h.b16 %v174
    %v620 = vunpack.c.l.b16 %v175
    %v621 = vunpack.c.h.b16 %v175
    %v622 = vunpack.c.l.b16 %v176
    %v623 = vunpack.c.h.b16 %v176
    %v624 = vunpack.c.l.b16 %v177
    %v625 = vunpack.c.h.b16 %v177
    %v626 = vunpack.c.l.b16 %v178
    %v627 = vunpack.c.h.b16 %v178
    %v628 = vunpack.c.l.b16 %v179
    %v629 = vunpack.c.h.b16 %v179
    %v630 = vunpack.c.l.b16 %v180
    %v631 = vunpack.c.h.b16 %v180
    %v632 = vunpack.c.l.b16 %v181
    %v633 = vunpack.c.h.b16 %v181
    %v634 = vunpack.c.l.b16 %v182
    %v635 = vunpack.c.h.b16 %v182
    %v636 = vunpack.c.l.b16 %v183
    %v637 = vunpack.c.h.b16 %v183
    %v638 = vunpack.c.l.b16 %v184
    %v639 = vunpack.c.h.b16 %v184
    %v640 = vunpack.c.l.b16 %v185
    %v641 = vunpack.c.h.b16 %v185
    %v642 = vunpack.c.l.b16 %v186
    %v643 = vunpack.c.h.b16 %v186
    %v644 = vunpack.c.l.b16 %v187
    %v645 = vunpack.c.h.b16 %v187
    %v646 = vunpack.c.l.b16 %v188
    %v647 = vunpack.c.h.b16 %v188
    %v648 = vunpack.c.l.b16 %v189
    %v649 = vunpack.c.h.b16 %v189
    %v650 = vunpack.c.l.b16 %v190
    %v651 = vunpack.c.h.b16 %v190
    %v652 = vunpack.c.l.b16 %v191
    %v653 = vunpack.c.h.b16 %v191
    %v654 = vunpack.c.l.b16 %v192
    %v655 = vunpack.c.h.b16 %v192
    %v656 = vunpack.c.l.b16 %v193
    %v657 = vunpack.c.h.b16 %v193
    %v658 = vunpack.c.l.b16 %v194
    %v659 = vunpack.c.h.b16 %v194
    %v660 = vunpack.c.l.b16 %v195
    %v661 = vunpack.c.h.b16 %v195
    %v662 = vunpack.c.l.b16 %v196
    %v663 = vunpack.c.h.b16 %v196
    %v664 = vunpack.c.l.b16 %v197
    %v665 = vunpack.c.h.b16 %v197
    %v666 = vunpack.c.l.b16 %v198
    %v667 = vunpack.c.h.b16 %v198
    %v668 = vunpack.c.l.b16 %v199
    %v669 = vunpack.c.h.b16 %v199
    %v670 = vunpack.c.l.b16 %v200
    %v671 = vunpack.c.h.b16 %v200
    %v672 = vunpack.c.l.b16 %v201
    %v673 = vunpack.c.h.b16 %v201
    %v674 = vunpack.c.l.b16 %v202
    %v675 = vunpack.c.h.b16 %v202
    %v676 = vunpack.c.l.b16 %v203
    %v677 = vunpack.c.h.b16 %v203
    %v678 = vunpack.c.l.b16 %v204
    %v679 = vunpack.c.h.b16 %v204
    %v680 = vunpack.c.l.b16 %v205
    %v681 = vunpack.c.h.b16 %v205
    %v682 = vunpack.c.l.b16 %v206
    %v683 = vunpack.c.h.b16 %v206
    %v684 = vunpack.c.l.b16 %v207
    %v685 = vunpack.c.h.b16 %v207
    %v686 = vunpack.c.l.b16 %v208
    %v687 = vunpack.c.h.b16 %v208
    %v688 = vunpack.c.l.b16 %v209
    %v689 = vunpack.c.h.b16 %v209
    %v690 = vunpack.c.l.b16 %v210
    %v691 = vunpack.c.h.b16 %v210
    %v692 = vunpack.c.l.b16 %v211
    %v693 = vunpack.c.h.b16 %v211
    %v694 = vunpack.c.l.b16 %v212
    %v695 = vunpack.c.h.b16 %v212
    %v696 = vunpack.c.l.b16 %v213
    %v697 = vunpack.c.h.b16 %v213
    %v698 = vunpack.c.l.b16 %v214
    %v699 = vunpack.c.h.b16 %v214
    %v700 = vunpack.c.l.b16 %v215
    %v701 = vunpack.c.h.b16 %v215
    %v702 = vunpack.c.l.b16 %v216
    %v703 = vunpack.c.h.b16 %v216
    %v704 = vunpack.c.l.b16 %v217
    %v705 = vunpack.c.h.b16 %v217
    %v706 = vunpack.c.l.b16 %v218
    %v707 = vunpack.c.h.b16 %v218
    %v708 = vunpack.c.l.b16 %v219
    %v709 = vunpack.c.h.b16 %v219
    %v710 = vunpack.c.l.b16 %v220
    %v711 = vunpack.c.h.b16 %v220
    %v712 = vunpack.c.l.b16 %v221
    %v713 = vunpack.c.h.b16 %v221
    %v714 = vunpack.c.l.b16 %v222
    %v715 = vunpack.c.h.b16 %v222
    %v716 = vunpack.c.l.b16 %v223
    %v717 = vunpack.c.h.b16 %v223
    %v718 = vunpack.c.l.b16 %v224
    %v719 = vunpack.c.h.b16 %v224
    %v720 = vunpack.c.l.b16 %v225
    %v721 = vunpack.c.h.b16 %v225
    %v722 = vunpack.c.l.b16 %v226
    %v723 = vunpack.c.h.b16 %v226
    %v724 = vunpack.c.l.b16 %v227
    %v725 = vunpack.c.h.b16 %v227
    %v726 = vunpack.c.l.b16 %v228
    %v727 = vunpack.c.h.b16 %v228
    %v728 = vunpack.c.l.b16 %v229
    %v729 = vunpack.c.h.b16 %v229
    %v730 = vunpack.c.l.b16 %v230
    %v731 = vunpack.c.h.b16 %v230
    %v732 = vunpack.c.l.b16 %v231
    %v733 = vunpack.c.h.b16 %v231
    %v734 = vunpack.c.l.b16 %v232
    %v735 = vunpack.c.h.b16 %v232
    %v736 = vunpack.c.l.b16 %v233
    %v737 = vunpack.c.h.b16 %v233
    %v738 = vunpack.c.l.b16 %v234
    %v739 = vunpack.c.h.b16 %v234
    %v740 = vunpack.c.l.b16 %v235
    %v741 = vunpack.c.h.b16 %v235
    %v742 = vunpack.c.l.b16 %v236
    %v743 = vunpack.c.h.b16 %v236
    %v744 = vunpack.c.l.b16 %v237
    %v745 = vunpack.c.h.b16 %v237
    %v746 = vunpack.c.l.b16 %v238
    %v747 = vunpack.c.h.b16 %v238
    %v748 = vunpack.c.l.b16 %v239
    %v749 = vunpack.c.h.b16 %v239
    %v750 = vunpack.c.l.b16 %v240
    %v751 = vunpack.c.h.b16 %v240
    %v752 = vunpack.c.l.b16 %v241
    %v753 = vunpack.c.h.b16 %v241
    %v754 = vunpack.c.l.b16 %v242
    %v755 = vunpack.c.h.b16 %v242
    %v756 = vunpack.c.l.b16 %v243
    %v757 = vunpack.c.h.b16 %v243
    %v758 = vunpack.c.l.b16 %v244
    %v759 = vunpack.c.h.b16 %v244
    %v760 = vunpack.c.l.b16 %v245
    %v761 = vunpack.c.h.b16 %v245
    %v762 = vunpack.c.l.b16 %v246
    %v763 = vunpack.c.h.b16 %v246
    %v764 = vunpack.c.l.b16 %v247
    %v765 = vunpack.c.h.b16 %v247
    %v766 = vunpack.c.l.b16 %v248
    %v767 = vunpack.c.h.b16 %v248
    %v768 = vunpack.c.l.b16 %v249
    %v769 = vunpack.c.h.b16 %v249
    %v770 = vunpack.c.l.b16 %v250
    %v771 = vunpack.c.h.b16 %v250
    %v772 = vunpack.c.l.b16 %v251
    %v773 = vunpack.c.h.b16 %v251
    %v774 = vunpack.c.l.b16 %v252
    %v775 = vunpack.c.h.b16 %v252
    %v776 = vunpack.c.l.b16 %v253
    %v777 = vunpack.c.h.b16 %v253
    %v778 = vunpack.c.l.b16 %v254
    %v779 = vunpack.c.h.b16 %v254
    %v780 = vunpack.c.l.b16 %v255
    %v781 = vunpack.c.h.b16 %v255
    %v782 = vunpack.c.l.b16 %v256
    %v783 = vunpack.c.h.b16 %v256
    %v784 = vunpack.c.l.b16 %v257
    %v785 = vunpack.c.h.b16 %v257
    %v786 = vunpack.c.l.b16 %v258
    %v787 = vunpack.c.h.b16 %v258
    %v788 = vunpack.c.l.b16 %v259
    %v789 = vunpack.c.h.b16 %v259
    %v790 = vunpack.c.l.b16 %v260
    %v791 = vunpack.c.h.b16 %v260
    %v792 = vunpack.c.l.b16 %v261
    %v793 = vunpack.c.h.b16 %v261
    %v794 = vunpack.c.l.b16 %v262
    %v795 = vunpack.c.h.b16 %v262
    %v796 = vunpack.c.l.b16 %v263
    %v797 = vunpack.c.h.b16 %v263
    %v798 = vunpack.c.l.b16 %v264
    %v799 = vunpack.c.h.b16 %v264
    %v800 = vunpack.c.l.b16 %v265
    %v801 = vunpack.c.h.b16 %v265
    %v802 = vunpack.c.l.b16 %v266
    %v803 = vunpack.c.h.b16 %v266
    %v804 = vunpack.c.l.b16 %v267
    %v805 = vunpack.c.h.b16 %v267
    %v806 = vunpack.c.l.b16 %v268
    %v807 = vunpack.c.h.b16 %v268
    %v808 = vunpack.c.l.b16 %v269
    %v809 = vunpack.c.h.b16 %v269
    %v810 = vunpack.c.l.b16 %v270
    %v811 = vunpack.c.h.b16 %v270
    %v812 = vunpack.c.l.b16 %v271
    %v813 = vunpack.c.h.b16 %v271
    %v814 = vunpack.c.l.b16 %v272
    %v815 = vunpack.c.h.b16 %v272
    %v816 = vunpack.c.l.b16 %v273
    %v817 = vunpack.c.h.b16 %v273
    %v818 = vunpack.c.l.b16 %v274
    %v819 = vunpack.c.h.b16 %v274
    %v820 = vunpack.c.l.b16 %v275
    %v821 = vunpack.c.h.b16 %v275
    %v822 = vunpack.c.l.b16 %v276
    %v823 = vunpack.c.h.b16 %v276
    %v824 = vunpack.c.l.b16 %v277
    %v825 = vunpack.c.h.b16 %v277
    %v826 = vunpack.c.l.b16 %v278
    %v827 = vunpack.c.h.b16 %v278
    %v828 = vunpack.c.l.b16 %v279
    %v829 = vunpack.c.h.b16 %v279
    %v830 = vunpack.c.l.b16 %v280
    %v831 = vunpack.c.h.b16 %v280
    %v832 = vunpack.c.l.b16 %v281
    %v833 = vunpack.c.h.b16 %v281
    %v834 = vunpack.c.l.b16 %v282
    %v835 = vunpack.c.h.b16 %v282
    %v836 = vunpack.c.l.b16 %v283
    %v837 = vunpack.c.h.b16 %v283
    %v838 = vunpack.c.l.b16 %v284
    %v839 = vunpack.c.h.b16 %v284
    %v840 = vunpack.c.l.b16 %v285
    %v841 = vunpack.c.h.b16 %v285
    %v842 = vunpack.c.l.b16 %v286
    %v843 = vunpack.c.h.b16 %v286
    %v844 = vunpack.c.l.b16 %v287
    %v845 = vunpack.c.h.b16 %v287
    %v846 = vunpack.c.l.b16 %v288
    %v847 = vunpack.c.h.b16 %v288
    %v848 = vunpack.c.l.b16 %v289
    %v849 = vunpack.c.h.b16 %v289
    %v850 = vunpack.c.l.b16 %v290
    %v851 = vunpack.c.h.b16 %v290
    %v852 = vunpack.c.l.b16 %v291
    %v853 = vunpack.c.h.b16 %v291
    %v854 = vunpack.c.l.b16 %v292
    %v855 = vunpack.c.h.b16 %v292
    %v856 = vunpack.c.l.b16 %v293
    %v857 = vunpack.c.h.b16 %v293
    %v858 = vunpack.c.l.b16 %v294
    %v859 = vunpack.c.h.b16 %v294
    %v860 = vunpack.c.l.b16 %v295
    %v861 = vunpack.c.h.b16 %v295
    %v862 = vunpack.c.l.b16 %v296
    %v863 = vunpack.c.h.b16 %v296
    %v864 = vunpack.c.l.b16 %v297
    %v865 = vunpack.c.h.b16 %v297
    %v866 = vunpack.c.l.b16 %v298
    %v867 = vunpack.c.h.b16 %v298
    %v868 = vunpack.c.l.b16 %v299
    %v869 = vunpack.c.h.b16 %v299
    %v870 = vunpack.c.l.b16 %v300
    %v871 = vunpack.c.h.b16 %v300
    %v872 = vunpack.c.l.b16 %v301
    %v873 = vunpack.c.h.b16 %v301
    %v874 = vunpack.c.l.b16 %v302
    %v875 = vunpack.c.h.b16 %v302
    %v876 = vunpack.c.l.b16 %v303
    %v877 = vunpack.c.h.b16 %v303
    %v878 = vunpack.c.l.b16 %v304
    %v879 = vunpack.c.h.b16 %v304
    %v880 = vunpack.c.l.b16 %v305
    %v881 = vunpack.c.h.b16 %v305
    %v882 = vunpack.c.l.b16 %v306
    %v883 = vunpack.c.h.b16 %v306
    %v884 = vunpack.c.l.b16 %v307
    %v885 = vunpack.c.h.b16 %v307
    %v886 = vunpack.c.l.b16 %v308
    %v887 = vunpack.c.h.b16 %v308
    %v888 = vunpack.c.l.b16 %v309
    %v889 = vunpack.c.h.b16 %v309
    %v890 = vunpack.c.l.b16 %v310
    %v891 = vunpack.c.h.b16 %v310
    %v892 = vunpack.c.l.b16 %v311
    %v893 = vunpack.c.h.b16 %v311
    %v894 = vunpack.c.l.b16 %v312
    %v895 = vunpack.c.h.b16 %v312
    %v896 = vunpack.c.l.b16 %v313
    %v897 = vunpack.c.h.b16 %v313
    %v898 = vunpack.c.l.b16 %v314
    %v899 = vunpack.c.h.b16 %v314
    %v900 = vunpack.c.l.b16 %v315
    %v901 = vunpack.c.h.b16 %v315
    %v902 = vunpack.c.l.b16 %v316
    %v903 = vunpack.c.h.b16 %v316
    %v904 = vunpack.c.l.b16 %v317
    %v905 = vunpack.c.h.b16 %v317
    %v906 = vunpack.c.l.b16 %v318
    %v907 = vunpack.c.h.b16 %v318
    %v908 = vunpack.c.l.b16 %v319
    %v909 = vunpack.c.h.b16 %v319
    %v910 = vunpack.c.l.b16 %v320
    %v911 = vunpack.c.h.b16 %v320
    %v912 = vunpack.c.l.b16 %v321
    %v913 = vunpack.c.h.b16 %v321
    %v914 = vunpack.c.l.b16 %v322
    %v915 = vunpack.c.h.b16 %v322
    %v916 = vunpack.c.l.b16 %v323
    %v917 = vunpack.c.h.b16 %v323
    %v918 = vunpack.c.l.b16 %v324
    %v919 = vunpack.c.h.b16 %v324
    %v920 = vunpack.c.l.b16 %v325
    %v921 = vunpack.c.h.b16 %v325
    %v922 = vunpack.c.l.b16 %v326
    %v923 = vunpack.c.h.b16 %v326
    %v924 = vunpack.c.l.b16 %v327
    %v925 = vunpack.c.h.b16 %v327
    %v926 = vpack.c.b16 %v546, %v542
    %v927 = vpack.c.b16 %v547, %v543
    %v928 = vpack.c.b16 %v548, %v544
    %v929 = vpack.c.b16 %v549, %v545
    %v930 = vpack.c.b16 %v554, %v550
    %v931 = vpack.c.b16 %v555, %v551
    %v932 = vpack.c.b16 %v556, %v552
    %v933 = vpack.c.b16 %v557, %v553
    %v934 = vpack.c.b16 %v562, %v558
    %v935 = vpack.c.b16 %v563, %v559
    %v936 = vpack.c.b16 %v564, %v560
    %v937 = vpack.c.b16 %v565, %v561
    %v938 = vpack.c.b16 %v570, %v566
    %v939 = vpack.c.b16 %v571, %v567
    %v940 = vpack.c.b16 %v572, %v568
    %v941 = vpack.c.b16 %v573, %v569
    %v942 = vpack.c.b16 %v578, %v574
    %v943 = vpack.c.b16 %v579, %v575
    %v944 = vpack.c.b16 %v580, %v576
    %v945 = vpack.c.b16 %v581, %v577
    %v946 = vpack.c.b16 %v586, %v582
    %v947 = vpack.c.b16 %v587, %v583
    %v948 = vpack.c.b16 %v588, %v584
    %v949 = vpack.c.b16 %v589, %v585
    %v950 = vpack.c.b16 %v594, %v590
    %v951 = vpack.c.b16 %v595, %v591
    %v952 = vpack.c.b16 %v596, %v592
    %v953 = vpack.c.b16 %v597, %v593
    %v954 = vpack.c.b16 %v602, %v598
    %v955 = vpack.c.b16 %v603, %v599
    %v956 = vpack.c.b16 %v604, %v600
    %v957 = vpack.c.b16 %v605, %v601
    %v958 = vpack.c.b16 %v610, %v606
    %v959 = vpack.c.b16 %v611, %v607
    %v960 = vpack.c.b16 %v612, %v608
    %v961 = vpack.c.b16 %v613, %v609
    %v962 = vpack.c.b16 %v618, %v614
    %v963 = vpack.c.b16 %v619, %v615
    %v964 = vpack.c.b16 %v620, %v616
    %v965 = vpack.c.b16 %v621, %v617
    %v966 = vpack.c.b16 %v626, %v622
    %v967 = vpack.c.b16 %v627, %v623
    %v968 = vpack.c.b16 %v628, %v624
    %v969 = vpack.c.b16 %v629, %v625
    %v970 = vpack.c.b16 %v634, %v630
    %v971 = vpack.c.b16 %v635, %v631
    %v972 = vpack.c.b16 %v636, %v632
    %v973 = vpack.c.b16 %v637, %v633
    %v974 = vpack.c.b16 %v642, %v638
    %v975 = vpack.c.b16 %v643, %v639
    %v976 = vpack.c.b16 %v644, %v640
    %v977 = vpack.c.b16 %v645, %v641
    %v978 = vpack.c.b16 %v650, %v646
    %v979 = vpack.c.b16 %v651, %v647
    %v980 = vpack.c.b16 %v652, %v648
    %v981 = vpack.c.b16 %v653, %v649
    %v982 = vpack.c.b16 %v658, %v654
    %v983 = vpack.c.b16 %v659, %v655
    %v984 = vpack.c.b16 %v660, %v656
    %v985 = vpack.c.b16 %v661, %v657
    %v986 = vpack.c.b16 %v666, %v662
    %v987 = vpack.c.b16 %v667, %v663
    %v988 = vpack.c.b16 %v668, %v664
    %v989 = vpack.c.b16 %v669, %v665
    %v990 = vpack.c.b16 %v674, %v670
    %v991 = vpack.c.b16 %v675, %v671
    %v992 = vpack.c.b16 %v676, %v672
    %v993 = vpack.c.b16 %v677, %v673
    %v994 = vpack.c.b16 %v682, %v678
    %v995 = vpack.c.b16 %v683, %v679
    %v996 = vpack.c.b16 %v684, %v680
    %v997 = vpack.c.b16 %v685, %v681
    %v998 = vpack.c.b16 %v690, %v686
    %v999 = vpack.c.b16 %v691, %v687
    %v1000 = vpack.c.b16 %v692, %v688
    %v1001 = vpack.c.b16 %v693, %v689
    %v1002 = vpack.c.b16 %v698, %v694
    %v1003 = vpack.c.b16 %v699, %v695
    %v1004 = vpack.c.b16 %v700, %v696
    %v1005 = vpack.c.b16 %v701, %v697
    %v1006 = vpack.c.b16 %v706, %v702
    %v1007 = vpack.c.b16 %v707, %v703
    %v1008 = vpack.c.b16 %v708, %v704
    %v1009 = vpack.c.b16 %v709, %v705
    %v1010 = vpack.c.b16 %v714, %v710
    %v1011 = vpack.c.b16 %v715, %v711
    %v1012 = vpack.c.b16 %v716, %v712
    %v1013 = vpack.c.b16 %v717, %v713
    %v1014 = vpack.c.b16 %v722, %v718
    %v1015 = vpack.c.b16 %v723, %v719
    %v1016 = vpack.c.b16 %v724, %v720
    %v1017 = vpack.c.b16 %v725, %v721
    %v1018 = vpack.c.b16 %v730, %v726
    %v1019 = vpack.c.b16 %v731, %v727
    %v1020 = vpack.c.b16 %v732, %v728
    %v1021 = vpack.c.b16 %v733, %v729
    %v1022 = vpack.c.b16 %v738, %v734
    %v1023 = vpack.c.b16 %v739, %v735
    %v1024 = vpack.c.b16 %v740, %v736
    %v1025 = vpack.c.b16 %v741, %v737
    %v1026 = vpack.c.b16 %v746, %v742
    %v1027 = vpack.c.b16 %v747, %v743
    %v1028 = vpack.c.b16 %v748, %v744
    %v1029 = vpack.c.b16 %v749, %v745
    %v1030 = vpack.c.b16 %v754, %v750
    %v1031 = vpack.c.b16 %v755, %v751
    %v1032 = vpack.c.b16 %v756, %v752
    %v1033 = vpack.c.b16 %v757, %v753
    %v1034 = vpack.c.b16 %v762, %v758
    %v1035 = vpack.c.b16 %v763, %v759
    %v1036 = vpack.c.b16 %v764, %v760
    %v1037 = vpack.c.b16 %v765, %v761
    %v1038 = vpack.c.b16 %v770, %v766
    %v1039 = vpack.c.b16 %v771, %v767
    %v1040 = vpack.c.b16 %v772, %v768
    %v1041 = vpack.c.b16 %v773, %v769
    %v1042 = vpack.c.b16 %v778, %v774
    %v1043 = vpack.c.b16 %v779, %v775
    %v1044 = vpack.c.b16 %v780, %v776
    %v1045 = vpack.c.b16 %v781, %v777
    %v1046 = vpack.c.b16 %v786, %v782
    %v1047 = vpack.c.b16 %v787, %v783
    %v1048 = vpack.c.b16 %v788, %v784
    %v1049 = vpack.c.b16 %v789, %v785
    %v1050 = vpack.c.b16 %v794, %v790
    %v1051 = vpack.c.b16 %v795, %v791
    %v1052 = vpack.c.b16 %v796, %v792
    %v1053 = vpack.c.b16 %v797, %v793
    %v1054 = vpack.c.b16 %v802, %v798
    %v1055 = vpack.c.b16 %v803, %v799
    %v1056 = vpack.c.b16 %v804, %v800
    %v1057 = vpack.c.b16 %v805, %v801
    %v1058 = vpack.c.b16 %v810, %v806
    %v1059 = vpack.c.b16 %v811, %v807
    %v1060 = vpack.c.b16 %v812, %v808
    %v1061 = vpack.c.b16 %v813, %v809
    %v1062 = vpack.c.b16 %v818, %v814
    %v1063 = vpack.c.b16 %v819, %v815
    %v1064 = vpack.c.b16 %v820, %v816
    %v1065 = vpack.c.b16 %v821, %v817
    %v1066 = vpack.c.b16 %v826, %v822
    %v1067 = vpack.c.b16 %v827, %v823
    %v1068 = vpack.c.b16 %v828, %v824
    %v1069 = vpack.c.b16 %v829, %v825
    %v1070 = vpack.c.b16 %v834, %v830
    %v1071 = vpack.c.b16 %v835, %v831
    %v1072 = vpack.c.b16 %v836, %v832
    %v1073 = vpack.c.b16 %v837, %v833
    %v1074 = vpack.c.b16 %v842, %v838
    %v1075 = vpack.c.b16 %v843, %v839
    %v1076 = vpack.c.b16 %v844, %v840
    %v1077 = vpack.c.b16 %v845, %v841
    %v1078 = vpack.c.b16 %v850, %v846
    %v1079 = vpack.c.b16 %v851, %v847
    %v1080 = vpack.c.b16 %v852, %v848
    %v1081 = vpack.c.b16 %v853, %v849
    %v1082 = vpack.c.b16 %v858, %v854
    %v1083 = vpack.c.b16 %v859, %v855
    %v1084 = vpack.c.b16 %v860, %v856
    %v1085 = vpack.c.b16 %v861, %v857
    %v1086 = vpack.c.b16 %v866, %v862
    %v1087 = vpack.c.b16 %v867, %v863
    %v1088 = vpack.c.b16 %v868, %v864
    %v1089 = vpack.c.b16 %v869, %v865
    %v1090 = vpack.c.b16 %v874, %v870
    %v1091 = vpack.c.b16 %v875, %v871
    %v1092 = vpack.c.b16 %v876, %v872
    %v1093 = vpack.c.b16 %v877, %v873
    %v1094 = vpack.c.b16 %v882, %v878
    %v1095 = vpack.c.b16 %v883, %v879
    %v1096 = vpack.c.b16 %v884, %v880
    %v1097 = vpack.c.b16 %v885, %v881
    %v1098 = vpack.c.b16 %v890, %v886
    %v1099 = vpack.c.b16 %v891, %v887
    %v1100 = vpack.c.b16 %v892, %v888
    %v1101 = vpack.c.b16 %v893, %v889
    %v1102 = vpack.c.b16 %v898, %v894
    %v1103 = vpack.c.b16 %v899, %v895
    %v1104 = vpack.c.b16 %v900, %v896
    %v1105 = vpack.c.b16 %v901, %v897
    %v1106 = vpack.c.b16 %v906, %v902
    %v1107 = vpack.c.b16 %v907, %v903
    %v1108 = vpack.c.b16 %v908, %v904
    %v1109 = vpack.c.b16 %v909, %v905
    %v1110 = vpack.c.b16 %v914, %v910
    %v1111 = vpack.c.b16 %v915, %v911
    %v1112 = vpack.c.b16 %v916, %v912
    %v1113 = vpack.c.b16 %v917, %v913
    %v1114 = vpack.c.b16 %v922, %v918
    %v1115 = vpack.c.b16 %v923, %v919
    %v1116 = vpack.c.b16 %v924, %v920
    %v1117 = vpack.c.b16 %v925, %v921
    %1310 = vmatprep.subr.bf16.mxu0 %v927
    %1311 = vmatpush1.bf16.msra.mxu0 %v926
    %1312 = vmatprep.subr.bf16.mxu0 %v931
    %1313 = vmatpush1.bf16.msra.mxu0 %v930
    %1314 = vmatprep.subr.bf16.mxu0 %v935
    %1315 = vmatpush1.bf16.msra.mxu0 %v934
    %1316 = vmatprep.subr.bf16.mxu0 %v939
    %1317 = vmatpush1.bf16.msra.mxu0 %v938
    %1318 = vmatprep.subr.bf16.mxu0 %v943
    %1319 = vmatpush1.bf16.msra.mxu0 %v942
    %1320 = vmatprep.subr.bf16.mxu0 %v947
    %1321 = vmatpush1.bf16.msra.mxu0 %v946
    %1322 = vmatprep.subr.bf16.mxu0 %v951
    %1323 = vmatpush1.bf16.msra.mxu0 %v950
    %1324 = vmatprep.subr.bf16.mxu0 %v955
    %1325 = vmatpush1.bf16.msra.mxu0 %v954
    %1326 = vmatprep.subr.bf16.mxu0 %v959
    %1327 = vmatpush1.bf16.msra.mxu0 %v958
    %1328 = vmatprep.subr.bf16.mxu0 %v963
    %1329 = vmatpush1.bf16.msra.mxu0 %v962
    %1330 = vmatprep.subr.bf16.mxu0 %v967
    %1331 = vmatpush1.bf16.msra.mxu0 %v966
    %1332 = vmatprep.subr.bf16.mxu0 %v971
    %1333 = vmatpush1.bf16.msra.mxu0 %v970
    %1334 = vmatprep.subr.bf16.mxu0 %v975
    %1335 = vmatpush1.bf16.msra.mxu0 %v974
    %1336 = vmatprep.subr.bf16.mxu0 %v979
    %1337 = vmatpush1.bf16.msra.mxu0 %v978
    %1338 = vmatprep.subr.bf16.mxu0 %v983
    %1339 = vmatpush1.bf16.msra.mxu0 %v982
    %1340 = vmatprep.subr.bf16.mxu0 %v987
    %1341 = vmatpush1.bf16.msra.mxu0 %v986
    %1342 = vmatprep.mubr.bf16.mxu0 %v131
    %1343 = vmatmul.mubr.bf16.gmra.mrb[0].mxu0 %v130
    %v1344 = vpop.f32.mrb[0].mxu0
    %v1345 = vadd.f32 %v333, %v1344
    %v1346 = vpop.f32.mrb[0].mxu0
    %v1347 = vadd.f32 %v337, %v1346
    %v1348 = vpop.f32.mrb[0].mxu0
    %v1349 = vpop.f32.mrb[0].mxu0
    %1350 = vdwg.mxu0
    %1351 = vmatprep.subr.bf16.mxu0 %v991
    %1352 = vmatpush1.bf16.msra.mxu0 %v990
    %1353 = vmatprep.subr.bf16.mxu0 %v995
    %1354 = vmatpush1.bf16.msra.mxu0 %v994
    %1355 = vmatprep.subr.bf16.mxu0 %v999
    %1356 = vmatpush1.bf16.msra.mxu0 %v998
    %1357 = vmatprep.subr.bf16.mxu0 %v1003
    %1358 = vmatpush1.bf16.msra.mxu0 %v1002
    %1359 = vmatprep.subr.bf16.mxu0 %v1007
    %1360 = vmatpush1.bf16.msra.mxu0 %v1006
    %1361 = vmatprep.subr.bf16.mxu0 %v1011
    %1362 = vmatpush1.bf16.msra.mxu0 %v1010
    %1363 = vmatprep.subr.bf16.mxu0 %v1015
    %1364 = vmatpush1.bf16.msra.mxu0 %v1014
    %1365 = vmatprep.subr.bf16.mxu0 %v1019
    %1366 = vmatpush1.bf16.msra.mxu0 %v1018
    %1367 = vmatprep.subr.bf16.mxu0 %v1023
    %1368 = vmatpush1.bf16.msra.mxu0 %v1022
    %1369 = vmatprep.subr.bf16.mxu0 %v1027
    %1370 = vmatpush1.bf16.msra.mxu0 %v1026
    %1371 = vmatprep.subr.bf16.mxu0 %v1031
    %1372 = vmatpush1.bf16.msra.mxu0 %v1030
    %1373 = vmatprep.subr.bf16.mxu0 %v1035
    %1374 = vmatpush1.bf16.msra.mxu0 %v1034
    %1375 = vmatprep.subr.bf16.mxu0 %v1039
    %1376 = vmatpush1.bf16.msra.mxu0 %v1038
    %1377 = vmatprep.subr.bf16.mxu0 %v1043
    %1378 = vmatpush1.bf16.msra.mxu0 %v1042
    %1379 = vmatprep.subr.bf16.mxu0 %v1047
    %1380 = vmatpush1.bf16.msra.mxu0 %v1046
    %1381 = vmatprep.subr.bf16.mxu0 %v1051
    %1382 = vmatpush1.bf16.msra.mxu0 %v1050
    %1383 = vmatprep.mubr.bf16.mxu0 %v133
    %1384 = vmatmul.mubr.bf16.gmra.mrb[0].mxu0 %v132
    %v1385 = vpop.f32.mrb[0].mxu0
    %v1386 = vadd.f32 %v1345, %v1385
    %v1387 = vpop.f32.mrb[0].mxu0
    %v1388 = vadd.f32 %v1347, %v1387
    %v1389 = vpop.f32.mrb[0].mxu0
    %v1390 = vpop.f32.mrb[0].mxu0
    %1391 = vdwg.mxu0
    %1392 = vmatprep.subr.bf16.mxu0 %v1055
    %1393 = vmatpush1.bf16.msra.mxu0 %v1054
    %1394 = vmatprep.subr.bf16.mxu0 %v1059
    %1395 = vmatpush1.bf16.msra.mxu0 %v1058
    %1396 = vmatprep.subr.bf16.mxu0 %v1063
    %1397 = vmatpush1.bf16.msra.mxu0 %v1062
    %1398 = vmatprep.subr.bf16.mxu0 %v1067
    %1399 = vmatpush1.bf16.msra.mxu0 %v1066
    %1400 = vmatprep.subr.bf16.mxu0 %v1071
    %1401 = vmatpush1.bf16.msra.mxu0 %v1070
    %1402 = vmatprep.subr.bf16.mxu0 %v1075
    %1403 = vmatpush1.bf16.msra.mxu0 %v1074
    %1404 = vmatprep.subr.bf16.mxu0 %v1079
    %1405 = vmatpush1.bf16.msra.mxu0 %v1078
    %1406 = vmatprep.subr.bf16.mxu0 %v1083
    %1407 = vmatpush1.bf16.msra.mxu0 %v1082
    %1408 = vmatprep.subr.bf16.mxu0 %v1087
    %1409 = vmatpush1.bf16.msra.mxu0 %v1086
    %1410 = vmatprep.subr.bf16.mxu0 %v1091
    %1411 = vmatpush1.bf16.msra.mxu0 %v1090
    %1412 = vmatprep.subr.bf16.mxu0 %v1095
    %1413 = vmatpush1.bf16.msra.mxu0 %v1094
    %1414 = vmatprep.subr.bf16.mxu0 %v1099
    %1415 = vmatpush1.bf16.msra.mxu0 %v1098
    %1416 = vmatprep.subr.bf16.mxu0 %v1103
    %1417 = vmatpush1.bf16.msra.mxu0 %v1102
    %1418 = vmatprep.subr.bf16.mxu0 %v1107
    %1419 = vmatpush1.bf16.msra.mxu0 %v1106
    %1420 = vmatprep.subr.bf16.mxu0 %v1111
    %1421 = vmatpush1.bf16.msra.mxu0 %v1110
    %1422 = vmatprep.subr.bf16.mxu0 %v1115
    %1423 = vmatpush1.bf16.msra.mxu0 %v1114
    %1424 = vmatprep.mubr.bf16.mxu0 %v135
    %1425 = vmatmul.mubr.bf16.gmra.mrb[0].mxu0 %v134
    %v1426 = vpop.f32.mrb[0].mxu0
    %v1427 = vadd.f32 %v1386, %v1426
    %v1428 = vpop.f32.mrb[0].mxu0
    %v1429 = vadd.f32 %v1388, %v1428
    %v1430 = vpop.f32.mrb[0].mxu0
    %v1431 = vpop.f32.mrb[0].mxu0
    %1432 = vdwg.mxu0
    %1433 = vmatprep.subr.bf16.mxu0 %v929
    %1434 = vmatpush1.bf16.msra.mxu0 %v928
    %1435 = vmatprep.subr.bf16.mxu0 %v933
    %1436 = vmatpush1.bf16.msra.mxu0 %v932
    %1437 = vmatprep.subr.bf16.mxu0 %v937
    %1438 = vmatpush1.bf16.msra.mxu0 %v936
    %1439 = vmatprep.subr.bf16.mxu0 %v941
    %1440 = vmatpush1.bf16.msra.mxu0 %v940
    %1441 = vmatprep.subr.bf16.mxu0 %v945
    %1442 = vmatpush1.bf16.msra.mxu0 %v944
    %1443 = vmatprep.subr.bf16.mxu0 %v949
    %1444 = vmatpush1.bf16.msra.mxu0 %v948
    %1445 = vmatprep.subr.bf16.mxu0 %v953
    %1446 = vmatpush1.bf16.msra.mxu0 %v952
    %1447 = vmatprep.subr.bf16.mxu0 %v957
    %1448 = vmatpush1.bf16.msra.mxu0 %v956
    %1449 = vmatprep.subr.bf16.mxu0 %v961
    %1450 = vmatpush1.bf16.msra.mxu0 %v960
    %1451 = vmatprep.subr.bf16.mxu0 %v965
    %1452 = vmatpush1.bf16.msra.mxu0 %v964
    %1453 = vmatprep.subr.bf16.mxu0 %v969
    %1454 = vmatpush1.bf16.msra.mxu0 %v968
    %1455 = vmatprep.subr.bf16.mxu0 %v973
    %1456 = vmatpush1.bf16.msra.mxu0 %v972
    %1457 = vmatprep.subr.bf16.mxu0 %v977
    %1458 = vmatpush1.bf16.msra.mxu0 %v976
    %1459 = vmatprep.subr.bf16.mxu0 %v981
    %1460 = vmatpush1.bf16.msra.mxu0 %v980
    %1461 = vmatprep.subr.bf16.mxu0 %v985
    %1462 = vmatpush1.bf16.msra.mxu0 %v984
    %1463 = vmatprep.subr.bf16.mxu0 %v989
    %1464 = vmatpush1.bf16.msra.mxu0 %v988
    %1465 = vmatprep.mubr.bf16.mxu0 %v131
    %1466 = vmatmul.mubr.bf16.gmra.mrb[0].mxu0 %v130
    %v1467 = vpop.f32.mrb[0].mxu0
    %v1468 = vadd.f32 %v341, %v1467
    %v1469 = vpop.f32.mrb[0].mxu0
    %v1470 = vadd.f32 %v345, %v1469
    %v1471 = vpop.f32.mrb[0].mxu0
    %v1472 = vpop.f32.mrb[0].mxu0
    %1473 = vdwg.mxu0
    %1474 = vmatprep.subr.bf16.mxu0 %v993
    %1475 = vmatpush1.bf16.msra.mxu0 %v992
    %1476 = vmatprep.subr.bf16.mxu0 %v997
    %1477 = vmatpush1.bf16.msra.mxu0 %v996
    %1478 = vmatprep.subr.bf16.mxu0 %v1001
    %1479 = vmatpush1.bf16.msra.mxu0 %v1000
    %1480 = vmatprep.subr.bf16.mxu0 %v1005
    %1481 = vmatpush1.bf16.msra.mxu0 %v1004
    %1482 = vmatprep.subr.bf16.mxu0 %v1009
    %1483 = vmatpush1.bf16.msra.mxu0 %v1008
    %1484 = vmatprep.subr.bf16.mxu0 %v1013
    %1485 = vmatpush1.bf16.msra.mxu0 %v1012
    %1486 = vmatprep.subr.bf16.mxu0 %v1017
    %1487 = vmatpush1.bf16.msra.mxu0 %v1016
    %1488 = vmatprep.subr.bf16.mxu0 %v1021
    %1489 = vmatpush1.bf16.msra.mxu0 %v1020
    %1490 = vmatprep.subr.bf16.mxu0 %v1025
    %1491 = vmatpush1.bf16.msra.mxu0 %v1024
    %1492 = vmatprep.subr.bf16.mxu0 %v1029
    %1493 = vmatpush1.bf16.msra.mxu0 %v1028
    %1494 = vmatprep.subr.bf16.mxu0 %v1033
    %1495 = vmatpush1.bf16.msra.mxu0 %v1032
    %1496 = vmatprep.subr.bf16.mxu0 %v1037
    %1497 = vmatpush1.bf16.msra.mxu0 %v1036
    %1498 = vmatprep.subr.bf16.mxu0 %v1041
    %1499 = vmatpush1.bf16.msra.mxu0 %v1040
    %1500 = vmatprep.subr.bf16.mxu0 %v1045
    %1501 = vmatpush1.bf16.msra.mxu0 %v1044
    %1502 = vmatprep.subr.bf16.mxu0 %v1049
    %1503 = vmatpush1.bf16.msra.mxu0 %v1048
    %1504 = vmatprep.subr.bf16.mxu0 %v1053
    %1505 = vmatpush1.bf16.msra.mxu0 %v1052
    %1506 = vmatprep.mubr.bf16.mxu0 %v133
    %1507 = vmatmul.mubr.bf16.gmra.mrb[0].mxu0 %v132
    %v1508 = vpop.f32.mrb[0].mxu0
    %v1509 = vadd.f32 %v1468, %v1508
    %v1510 = vpop.f32.mrb[0].mxu0
    %v1511 = vadd.f32 %v1470, %v1510
    %v1512 = vpop.f32.mrb[0].mxu0
    %v1513 = vpop.f32.mrb[0].mxu0
    %1514 = vdwg.mxu0
    %1515 = vmatprep.subr.bf16.mxu0 %v1057
    %1516 = vmatpush1.bf16.msra.mxu0 %v1056
    %1517 = vmatprep.subr.bf16.mxu0 %v1061
    %1518 = vmatpush1.bf16.msra.mxu0 %v1060
    %1519 = vmatprep.subr.bf16.mxu0 %v1065
    %1520 = vmatpush1.bf16.msra.mxu0 %v1064
    %1521 = vmatprep.subr.bf16.mxu0 %v1069
    %1522 = vmatpush1.bf16.msra.mxu0 %v1068
    %1523 = vmatprep.subr.bf16.mxu0 %v1073
    %1524 = vmatpush1.bf16.msra.mxu0 %v1072
    %1525 = vmatprep.subr.bf16.mxu0 %v1077
    %1526 = vmatpush1.bf16.msra.mxu0 %v1076
    %1527 = vmatprep.subr.bf16.mxu0 %v1081
    %1528 = vmatpush1.bf16.msra.mxu0 %v1080
    %1529 = vmatprep.subr.bf16.mxu0 %v1085
    %1530 = vmatpush1.bf16.msra.mxu0 %v1084
    %1531 = vmatprep.subr.bf16.mxu0 %v1089
    %1532 = vmatpush1.bf16.msra.mxu0 %v1088
    %1533 = vmatprep.subr.bf16.mxu0 %v1093
    %1534 = vmatpush1.bf16.msra.mxu0 %v1092
    %1535 = vmatprep.subr.bf16.mxu0 %v1097
    %1536 = vmatpush1.bf16.msra.mxu0 %v1096
    %1537 = vmatprep.subr.bf16.mxu0 %v1101
    %1538 = vmatpush1.bf16.msra.mxu0 %v1100
    %1539 = vmatprep.subr.bf16.mxu0 %v1105
    %1540 = vmatpush1.bf16.msra.mxu0 %v1104
    %1541 = vmatprep.subr.bf16.mxu0 %v1109
    %1542 = vmatpush1.bf16.msra.mxu0 %v1108
    %1543 = vmatprep.subr.bf16.mxu0 %v1113
    %1544 = vmatpush1.bf16.msra.mxu0 %v1112
    %1545 = vmatprep.subr.bf16.mxu0 %v1117
    %1546 = vmatpush1.bf16.msra.mxu0 %v1116
    %1547 = vmatprep.mubr.bf16.mxu0 %v135
    %1548 = vmatmul.mubr.bf16.gmra.mrb[0].mxu0 %v134
    %v1549 = vpop.f32.mrb[0].mxu0
    %v1550 = vadd.f32 %v1509, %v1549
    %v1551 = vpop.f32.mrb[0].mxu0
    %v1552 = vadd.f32 %v1511, %v1551
    %v1553 = vpop.f32.mrb[0].mxu0
    %v1554 = vpop.f32.mrb[0].mxu0
    %1555 = vdwg.mxu0
    %v1556 = vmax.f32 %v1427, 0.0
    %v1557 = vmax.f32 %v1429, 0.0
    %v1558 = vmax.f32 %v1550, 0.0
    %v1559 = vmax.f32 %v1552, 0.0
    %v1560 = vpack.c.bf16 %v1556, %v1556
    %v1561 = vpack.c.bf16 %v1557, %v1557
    %v1562 = vpack.c.bf16 %v1558, %v1558
    %v1563 = vpack.c.bf16 %v1559, %v1559
    %v1564 = vld [vmem:[#allocation4] sm:$0xff]
    %v1565 = vld [vmem:[#allocation4 + $0x8] sm:$0xff]
    %v1566 = vld [vmem:[#allocation4 + $0x10] sm:$0xff]
    %v1567 = vld [vmem:[#allocation4 + $0x18] sm:$0xff]
    %v1568 = vld [vmem:[#allocation4 + $0x20] sm:$0xff]
    %v1569 = vld [vmem:[#allocation4 + $0x28] sm:$0xff]
    %v1570 = vld [vmem:[#allocation4 + $0x30] sm:$0xff]
    %v1571 = vld [vmem:[#allocation4 + $0x38] sm:$0xff]
    %v1572 = vld [vmem:[#allocation4 + $0x40] sm:$0xff]
    %v1573 = vld [vmem:[#allocation4 + $0x48] sm:$0xff]
    %v1574 = vld [vmem:[#allocation4 + $0x50] sm:$0xff]
    %v1575 = vld [vmem:[#allocation4 + $0x58] sm:$0xff]
    %v1576 = vld [vmem:[#allocation4 + $0x60] sm:$0xff]
    %v1577 = vld [vmem:[#allocation4 + $0x68] sm:$0xff]
    %v1578 = vld [vmem:[#allocation4 + $0x70] sm:$0xff]
    %v1579 = vld [vmem:[#allocation4 + $0x78] sm:$0xff]
    %v1580 = vld [vmem:[#allocation4 + $0x80] sm:$0xff]
    %v1581 = vld [vmem:[#allocation4 + $0x88] sm:$0xff]
    %v1582 = vld [vmem:[#allocation4 + $0x90] sm:$0xff]
    %v1583 = vld [vmem:[#allocation4 + $0x98] sm:$0xff]
    %v1584 = vld [vmem:[#allocation4 + $0xa0] sm:$0xff]
    %v1585 = vld [vmem:[#allocation4 + $0xa8] sm:$0xff]
    %v1586 = vld [vmem:[#allocation4 + $0xb0] sm:$0xff]
    %v1587 = vld [vmem:[#allocation4 + $0xb8] sm:$0xff]
    %v1588 = vld [vmem:[#allocation4 + $0xc0] sm:$0xff]
    %v1589 = vld [vmem:[#allocation4 + $0xc8] sm:$0xff]
    %v1590 = vld [vmem:[#allocation4 + $0xd0] sm:$0xff]
    %v1591 = vld [vmem:[#allocation4 + $0xd8] sm:$0xff]
    %v1592 = vld [vmem:[#allocation4 + $0xe0] sm:$0xff]
    %v1593 = vld [vmem:[#allocation4 + $0xe8] sm:$0xff]
    %v1594 = vld [vmem:[#allocation4 + $0xf0] sm:$0xff]
    %v1595 = vld [vmem:[#allocation4 + $0xf8] sm:$0xff]
    %v1596 = vld [vmem:[#allocation4 + $0x100] sm:$0xff]
    %v1597 = vld [vmem:[#allocation4 + $0x108] sm:$0xff]
    %v1598 = vld [vmem:[#allocation4 + $0x110] sm:$0xff]
    %v1599 = vld [vmem:[#allocation4 + $0x118] sm:$0xff]
    %v1600 = vld [vmem:[#allocation4 + $0x120] sm:$0xff]
    %v1601 = vld [vmem:[#allocation4 + $0x128] sm:$0xff]
    %v1602 = vld [vmem:[#allocation4 + $0x130] sm:$0xff]
    %v1603 = vld [vmem:[#allocation4 + $0x138] sm:$0xff]
    %v1604 = vld [vmem:[#allocation4 + $0x140] sm:$0xff]
    %v1605 = vld [vmem:[#allocation4 + $0x148] sm:$0xff]
    %v1606 = vld [vmem:[#allocation4 + $0x150] sm:$0xff]
    %v1607 = vld [vmem:[#allocation4 + $0x158] sm:$0xff]
    %v1608 = vld [vmem:[#allocation4 + $0x160] sm:$0xff]
    %v1609 = vld [vmem:[#allocation4 + $0x168] sm:$0xff]
    %v1610 = vld [vmem:[#allocation4 + $0x170] sm:$0xff]
    %v1611 = vld [vmem:[#allocation4 + $0x178] sm:$0xff]
    %v1612 = vld [vmem:[#allocation4 + $0x180] sm:$0xff]
    %v1613 = vld [vmem:[#allocation4 + $0x188] sm:$0xff]
    %v1614 = vld [vmem:[#allocation4 + $0x190] sm:$0xff]
    %v1615 = vld [vmem:[#allocation4 + $0x198] sm:$0xff]
    %v1616 = vld [vmem:[#allocation4 + $0x1a0] sm:$0xff]
    %v1617 = vld [vmem:[#allocation4 + $0x1a8] sm:$0xff]
    %v1618 = vld [vmem:[#allocation4 + $0x1b0] sm:$0xff]
    %v1619 = vld [vmem:[#allocation4 + $0x1b8] sm:$0xff]
    %v1620 = vld [vmem:[#allocation4 + $0x1c0] sm:$0xff]
    %v1621 = vld [vmem:[#allocation4 + $0x1c8] sm:$0xff]
    %v1622 = vld [vmem:[#allocation4 + $0x1d0] sm:$0xff]
    %v1623 = vld [vmem:[#allocation4 + $0x1d8] sm:$0xff]
    %v1624 = vld [vmem:[#allocation4 + $0x1e0] sm:$0xff]
    %v1625 = vld [vmem:[#allocation4 + $0x1e8] sm:$0xff]
    %v1626 = vld [vmem:[#allocation4 + $0x1f0] sm:$0xff]
    %v1627 = vld [vmem:[#allocation4 + $0x1f8] sm:$0xff]
    %v1628 = vld [vmem:[%s7] sm:$0x3]
    %v1630 = vlaneseq
    %v1631 = vshrl.u32 %v1630, 7
    %v1632 = vsub.s32 0, %v1631
    %v1633 = vrot.slane %v1628, %v1632
    %v1634 = vlaneseq
    %v1635 = vshrl.u32 %v1634, 7
    %v1636 = vsub.s32 1, %v1635
    %v1637 = vrot.slane %v1628, %v1636
    %v1704 = vunpack.c.l.b16 %v1564
    %v1705 = vunpack.c.h.b16 %v1564
    %v1706 = vunpack.c.l.b16 %v1565
    %v1707 = vunpack.c.h.b16 %v1565
    %v1708 = vunpack.c.l.b16 %v1566
    %v1709 = vunpack.c.h.b16 %v1566
    %v1710 = vunpack.c.l.b16 %v1567
    %v1711 = vunpack.c.h.b16 %v1567
    %v1712 = vunpack.c.l.b16 %v1568
    %v1713 = vunpack.c.h.b16 %v1568
    %v1714 = vunpack.c.l.b16 %v1569
    %v1715 = vunpack.c.h.b16 %v1569
    %v1716 = vunpack.c.l.b16 %v1570
    %v1717 = vunpack.c.h.b16 %v1570
    %v1718 = vunpack.c.l.b16 %v1571
    %v1719 = vunpack.c.h.b16 %v1571
    %v1720 = vunpack.c.l.b16 %v1572
    %v1721 = vunpack.c.h.b16 %v1572
    %v1722 = vunpack.c.l.b16 %v1573
    %v1723 = vunpack.c.h.b16 %v1573
    %v1724 = vunpack.c.l.b16 %v1574
    %v1725 = vunpack.c.h.b16 %v1574
    %v1726 = vunpack.c.l.b16 %v1575
    %v1727 = vunpack.c.h.b16 %v1575
    %v1728 = vunpack.c.l.b16 %v1576
    %v1729 = vunpack.c.h.b16 %v1576
    %v1730 = vunpack.c.l.b16 %v1577
    %v1731 = vunpack.c.h.b16 %v1577
    %v1732 = vunpack.c.l.b16 %v1578
    %v1733 = vunpack.c.h.b16 %v1578
    %v1734 = vunpack.c.l.b16 %v1579
    %v1735 = vunpack.c.h.b16 %v1579
    %v1736 = vunpack.c.l.b16 %v1580
    %v1737 = vunpack.c.h.b16 %v1580
    %v1738 = vunpack.c.l.b16 %v1581
    %v1739 = vunpack.c.h.b16 %v1581
    %v1740 = vunpack.c.l.b16 %v1582
    %v1741 = vunpack.c.h.b16 %v1582
    %v1742 = vunpack.c.l.b16 %v1583
    %v1743 = vunpack.c.h.b16 %v1583
    %v1744 = vunpack.c.l.b16 %v1584
    %v1745 = vunpack.c.h.b16 %v1584
    %v1746 = vunpack.c.l.b16 %v1585
    %v1747 = vunpack.c.h.b16 %v1585
    %v1748 = vunpack.c.l.b16 %v1586
    %v1749 = vunpack.c.h.b16 %v1586
    %v1750 = vunpack.c.l.b16 %v1587
    %v1751 = vunpack.c.h.b16 %v1587
    %v1752 = vunpack.c.l.b16 %v1588
    %v1753 = vunpack.c.h.b16 %v1588
    %v1754 = vunpack.c.l.b16 %v1589
    %v1755 = vunpack.c.h.b16 %v1589
    %v1756 = vunpack.c.l.b16 %v1590
    %v1757 = vunpack.c.h.b16 %v1590
    %v1758 = vunpack.c.l.b16 %v1591
    %v1759 = vunpack.c.h.b16 %v1591
    %v1760 = vunpack.c.l.b16 %v1592
    %v1761 = vunpack.c.h.b16 %v1592
    %v1762 = vunpack.c.l.b16 %v1593
    %v1763 = vunpack.c.h.b16 %v1593
    %v1764 = vunpack.c.l.b16 %v1594
    %v1765 = vunpack.c.h.b16 %v1594
    %v1766 = vunpack.c.l.b16 %v1595
    %v1767 = vunpack.c.h.b16 %v1595
    %v1768 = vunpack.c.l.b16 %v1596
    %v1769 = vunpack.c.h.b16 %v1596
    %v1770 = vunpack.c.l.b16 %v1597
    %v1771 = vunpack.c.h.b16 %v1597
    %v1772 = vunpack.c.l.b16 %v1598
    %v1773 = vunpack.c.h.b16 %v1598
    %v1774 = vunpack.c.l.b16 %v1599
    %v1775 = vunpack.c.h.b16 %v1599
    %v1776 = vunpack.c.l.b16 %v1600
    %v1777 = vunpack.c.h.b16 %v1600
    %v1778 = vunpack.c.l.b16 %v1601
    %v1779 = vunpack.c.h.b16 %v1601
    %v1780 = vunpack.c.l.b16 %v1602
    %v1781 = vunpack.c.h.b16 %v1602
    %v1782 = vunpack.c.l.b16 %v1603
    %v1783 = vunpack.c.h.b16 %v1603
    %v1784 = vunpack.c.l.b16 %v1604
    %v1785 = vunpack.c.h.b16 %v1604
    %v1786 = vunpack.c.l.b16 %v1605
    %v1787 = vunpack.c.h.b16 %v1605
    %v1788 = vunpack.c.l.b16 %v1606
    %v1789 = vunpack.c.h.b16 %v1606
    %v1790 = vunpack.c.l.b16 %v1607
    %v1791 = vunpack.c.h.b16 %v1607
    %v1792 = vunpack.c.l.b16 %v1608
    %v1793 = vunpack.c.h.b16 %v1608
    %v1794 = vunpack.c.l.b16 %v1609
    %v1795 = vunpack.c.h.b16 %v1609
    %v1796 = vunpack.c.l.b16 %v1610
    %v1797 = vunpack.c.h.b16 %v1610
    %v1798 = vunpack.c.l.b16 %v1611
    %v1799 = vunpack.c.h.b16 %v1611
    %v1800 = vunpack.c.l.b16 %v1612
    %v1801 = vunpack.c.h.b16 %v1612
    %v1802 = vunpack.c.l.b16 %v1613
    %v1803 = vunpack.c.h.b16 %v1613
    %v1804 = vunpack.c.l.b16 %v1614
    %v1805 = vunpack.c.h.b16 %v1614
    %v1806 = vunpack.c.l.b16 %v1615
    %v1807 = vunpack.c.h.b16 %v1615
    %v1808 = vunpack.c.l.b16 %v1616
    %v1809 = vunpack.c.h.b16 %v1616
    %v1810 = vunpack.c.l.b16 %v1617
    %v1811 = vunpack.c.h.b16 %v1617
    %v1812 = vunpack.c.l.b16 %v1618
    %v1813 = vunpack.c.h.b16 %v1618
    %v1814 = vunpack.c.l.b16 %v1619
    %v1815 = vunpack.c.h.b16 %v1619
    %v1816 = vunpack.c.l.b16 %v1620
    %v1817 = vunpack.c.h.b16 %v1620
    %v1818 = vunpack.c.l.b16 %v1621
    %v1819 = vunpack.c.h.b16 %v1621
    %v1820 = vunpack.c.l.b16 %v1622
    %v1821 = vunpack.c.h.b16 %v1622
    %v1822 = vunpack.c.l.b16 %v1623
    %v1823 = vunpack.c.h.b16 %v1623
    %v1824 = vunpack.c.l.b16 %v1624
    %v1825 = vunpack.c.h.b16 %v1624
    %v1826 = vunpack.c.l.b16 %v1625
    %v1827 = vunpack.c.h.b16 %v1625
    %v1828 = vunpack.c.l.b16 %v1626
    %v1829 = vunpack.c.h.b16 %v1626
    %v1830 = vunpack.c.l.b16 %v1627
    %v1831 = vunpack.c.h.b16 %v1627
    %v1832 = vpack.c.b16 %v1706, %v1704
    %v1833 = vpack.c.b16 %v1707, %v1705
    %v1834 = vpack.c.b16 %v1710, %v1708
    %v1835 = vpack.c.b16 %v1711, %v1709
    %v1836 = vpack.c.b16 %v1714, %v1712
    %v1837 = vpack.c.b16 %v1715, %v1713
    %v1838 = vpack.c.b16 %v1718, %v1716
    %v1839 = vpack.c.b16 %v1719, %v1717
    %v1840 = vpack.c.b16 %v1722, %v1720
    %v1841 = vpack.c.b16 %v1723, %v1721
    %v1842 = vpack.c.b16 %v1726, %v1724
    %v1843 = vpack.c.b16 %v1727, %v1725
    %v1844 = vpack.c.b16 %v1730, %v1728
    %v1845 = vpack.c.b16 %v1731, %v1729
    %v1846 = vpack.c.b16 %v1734, %v1732
    %v1847 = vpack.c.b16 %v1735, %v1733
    %v1848 = vpack.c.b16 %v1738, %v1736
    %v1849 = vpack.c.b16 %v1739, %v1737
    %v1850 = vpack.c.b16 %v1742, %v1740
    %v1851 = vpack.c.b16 %v1743, %v1741
    %v1852 = vpack.c.b16 %v1746, %v1744
    %v1853 = vpack.c.b16 %v1747, %v1745
    %v1854 = vpack.c.b16 %v1750, %v1748
    %v1855 = vpack.c.b16 %v1751, %v1749
    %v1856 = vpack.c.b16 %v1754, %v1752
    %v1857 = vpack.c.b16 %v1755, %v1753
    %v1858 = vpack.c.b16 %v1758, %v1756
    %v1859 = vpack.c.b16 %v1759, %v1757
    %v1860 = vpack.c.b16 %v1762, %v1760
    %v1861 = vpack.c.b16 %v1763, %v1761
    %v1862 = vpack.c.b16 %v1766, %v1764
    %v1863 = vpack.c.b16 %v1767, %v1765
    %v1864 = vpack.c.b16 %v1770, %v1768
    %v1865 = vpack.c.b16 %v1771, %v1769
    %v1866 = vpack.c.b16 %v1774, %v1772
    %v1867 = vpack.c.b16 %v1775, %v1773
    %v1868 = vpack.c.b16 %v1778, %v1776
    %v1869 = vpack.c.b16 %v1779, %v1777
    %v1870 = vpack.c.b16 %v1782, %v1780
    %v1871 = vpack.c.b16 %v1783, %v1781
    %v1872 = vpack.c.b16 %v1786, %v1784
    %v1873 = vpack.c.b16 %v1787, %v1785
    %v1874 = vpack.c.b16 %v1790, %v1788
    %v1875 = vpack.c.b16 %v1791, %v1789
    %v1876 = vpack.c.b16 %v1794, %v1792
    %v1877 = vpack.c.b16 %v1795, %v1793
    %v1878 = vpack.c.b16 %v1798, %v1796
    %v1879 = vpack.c.b16 %v1799, %v1797
    %v1880 = vpack.c.b16 %v1802, %v1800
    %v1881 = vpack.c.b16 %v1803, %v1801
    %v1882 = vpack.c.b16 %v1806, %v1804
    %v1883 = vpack.c.b16 %v1807, %v1805
    %v1884 = vpack.c.b16 %v1810, %v1808
    %v1885 = vpack.c.b16 %v1811, %v1809
    %v1886 = vpack.c.b16 %v1814, %v1812
    %v1887 = vpack.c.b16 %v1815, %v1813
    %v1888 = vpack.c.b16 %v1818, %v1816
    %v1889 = vpack.c.b16 %v1819, %v1817
    %v1890 = vpack.c.b16 %v1822, %v1820
    %v1891 = vpack.c.b16 %v1823, %v1821
    %v1892 = vpack.c.b16 %v1826, %v1824
    %v1893 = vpack.c.b16 %v1827, %v1825
    %v1894 = vpack.c.b16 %v1830, %v1828
    %v1895 = vpack.c.b16 %v1831, %v1829
    %1960 = vmatprep.subr.bf16.mxu0 %v1833
    %1961 = vmatpush1.bf16.msra.mxu0 %v1832
    %1962 = vmatprep.subr.bf16.mxu0 %v1835
    %1963 = vmatpush1.bf16.msra.mxu0 %v1834
    %1964 = vmatprep.subr.bf16.mxu0 %v1837
    %1965 = vmatpush1.bf16.msra.mxu0 %v1836
    %1966 = vmatprep.subr.bf16.mxu0 %v1839
    %1967 = vmatpush1.bf16.msra.mxu0 %v1838
    %1968 = vmatprep.subr.bf16.mxu0 %v1841
    %1969 = vmatpush1.bf16.msra.mxu0 %v1840
    %1970 = vmatprep.subr.bf16.mxu0 %v1843
    %1971 = vmatpush1.bf16.msra.mxu0 %v1842
    %1972 = vmatprep.subr.bf16.mxu0 %v1845
    %1973 = vmatpush1.bf16.msra.mxu0 %v1844
    %1974 = vmatprep.subr.bf16.mxu0 %v1847
    %1975 = vmatpush1.bf16.msra.mxu0 %v1846
    %1976 = vmatprep.subr.bf16.mxu0 %v1849
    %1977 = vmatpush1.bf16.msra.mxu0 %v1848
    %1978 = vmatprep.subr.bf16.mxu0 %v1851
    %1979 = vmatpush1.bf16.msra.mxu0 %v1850
    %1980 = vmatprep.subr.bf16.mxu0 %v1853
    %1981 = vmatpush1.bf16.msra.mxu0 %v1852
    %1982 = vmatprep.subr.bf16.mxu0 %v1855
    %1983 = vmatpush1.bf16.msra.mxu0 %v1854
    %1984 = vmatprep.subr.bf16.mxu0 %v1857
    %1985 = vmatpush1.bf16.msra.mxu0 %v1856
    %1986 = vmatprep.subr.bf16.mxu0 %v1859
    %1987 = vmatpush1.bf16.msra.mxu0 %v1858
    %1988 = vmatprep.subr.bf16.mxu0 %v1861
    %1989 = vmatpush1.bf16.msra.mxu0 %v1860
    %1990 = vmatprep.subr.bf16.mxu0 %v1863
    %1991 = vmatpush1.bf16.msra.mxu0 %v1862
    %1992 = vmatprep.mubr.bf16.mxu0 %v1561
    %1993 = vmatmul.mubr.bf16.gmra.mrb[0].mxu0 %v1560
    %v1994 = vpop.f32.mrb[0].mxu0
    %v1995 = vadd.f32 %v1633, %v1994
    %v1996 = vpop.f32.mrb[0].mxu0
    %v1997 = vadd.f32 %v1637, %v1996
    %v1998 = vpop.f32.mrb[0].mxu0
    %v1999 = vpop.f32.mrb[0].mxu0
    %2000 = vdwg.mxu0
    %2001 = vmatprep.subr.bf16.mxu0 %v1865
    %2002 = vmatpush1.bf16.msra.mxu0 %v1864
    %2003 = vmatprep.subr.bf16.mxu0 %v1867
    %2004 = vmatpush1.bf16.msra.mxu0 %v1866
    %2005 = vmatprep.subr.bf16.mxu0 %v1869
    %2006 = vmatpush1.bf16.msra.mxu0 %v1868
    %2007 = vmatprep.subr.bf16.mxu0 %v1871
    %2008 = vmatpush1.bf16.msra.mxu0 %v1870
    %2009 = vmatprep.subr.bf16.mxu0 %v1873
    %2010 = vmatpush1.bf16.msra.mxu0 %v1872
    %2011 = vmatprep.subr.bf16.mxu0 %v1875
    %2012 = vmatpush1.bf16.msra.mxu0 %v1874
    %2013 = vmatprep.subr.bf16.mxu0 %v1877
    %2014 = vmatpush1.bf16.msra.mxu0 %v1876
    %2015 = vmatprep.subr.bf16.mxu0 %v1879
    %2016 = vmatpush1.bf16.msra.mxu0 %v1878
    %2017 = vmatprep.subr.bf16.mxu0 %v1881
    %2018 = vmatpush1.bf16.msra.mxu0 %v1880
    %2019 = vmatprep.subr.bf16.mxu0 %v1883
    %2020 = vmatpush1.bf16.msra.mxu0 %v1882
    %2021 = vmatprep.subr.bf16.mxu0 %v1885
    %2022 = vmatpush1.bf16.msra.mxu0 %v1884
    %2023 = vmatprep.subr.bf16.mxu0 %v1887
    %2024 = vmatpush1.bf16.msra.mxu0 %v1886
    %2025 = vmatprep.subr.bf16.mxu0 %v1889
    %2026 = vmatpush1.bf16.msra.mxu0 %v1888
    %2027 = vmatprep.subr.bf16.mxu0 %v1891
    %2028 = vmatpush1.bf16.msra.mxu0 %v1890
    %2029 = vmatprep.subr.bf16.mxu0 %v1893
    %2030 = vmatpush1.bf16.msra.mxu0 %v1892
    %2031 = vmatprep.subr.bf16.mxu0 %v1895
    %2032 = vmatpush1.bf16.msra.mxu0 %v1894
    %2033 = vmatprep.mubr.bf16.mxu0 %v1563
    %2034 = vmatmul.mubr.bf16.gmra.mrb[0].mxu0 %v1562
    %v2035 = vpop.f32.mrb[0].mxu0
    %v2036 = vadd.f32 %v1995, %v2035
    %v2037 = vpop.f32.mrb[0].mxu0
    %v2038 = vadd.f32 %v1997, %v2037
    %v2039 = vpop.f32.mrb[0].mxu0
    %v2040 = vpop.f32.mrb[0].mxu0
    %2041 = vdwg.mxu0
    %v2042 = vmax.f32 %v2036, 0.0
    %v2043 = vmax.f32 %v2038, 0.0
    %v2044 = vpack.c.bf16 %v2042, %v2042
    %v2045 = vpack.c.bf16 %v2043, %v2043
    %v2046 = vld [vmem:[%s8] sm:$0xf]
    %v2047 = vld [vmem:[%s8 + $0x4] sm:$0xf]
    %v2048 = vld [vmem:[%s8 + $0x8] sm:$0xf]
    %v2049 = vld [vmem:[%s8 + $0xc] sm:$0xf]
    %v2050 = vld [vmem:[%s8 + $0x10] sm:$0xf]
    %v2051 = vld [vmem:[%s8 + $0x14] sm:$0xf]
    %v2052 = vld [vmem:[%s8 + $0x18] sm:$0xf]
    %v2053 = vld [vmem:[%s8 + $0x1c] sm:$0xf]
    %v2054 = vld [vmem:[%s8 + $0x20] sm:$0xf]
    %v2055 = vld [vmem:[%s8 + $0x24] sm:$0xf]
    %v2056 = vld [vmem:[%s8 + $0x28] sm:$0xf]
    %v2057 = vld [vmem:[%s8 + $0x2c] sm:$0xf]
    %v2058 = vld [vmem:[%s8 + $0x30] sm:$0xf]
    %v2059 = vld [vmem:[%s8 + $0x34] sm:$0xf]
    %v2060 = vld [vmem:[%s8 + $0x38] sm:$0xf]
    %v2061 = vld [vmem:[%s8 + $0x3c] sm:$0xf]
    %v2062 = vld [vmem:[%s8 + $0x40] sm:$0xf]
    %v2063 = vld [vmem:[%s8 + $0x44] sm:$0xf]
    %v2064 = vld [vmem:[%s8 + $0x48] sm:$0xf]
    %v2065 = vld [vmem:[%s8 + $0x4c] sm:$0xf]
    %v2066 = vld [vmem:[%s8 + $0x50] sm:$0xf]
    %v2067 = vld [vmem:[%s8 + $0x54] sm:$0xf]
    %v2068 = vld [vmem:[%s8 + $0x58] sm:$0xf]
    %v2069 = vld [vmem:[%s8 + $0x5c] sm:$0xf]
    %v2070 = vld [vmem:[%s8 + $0x60] sm:$0xf]
    %v2071 = vld [vmem:[%s8 + $0x64] sm:$0xf]
    %v2072 = vld [vmem:[%s8 + $0x68] sm:$0xf]
    %v2073 = vld [vmem:[%s8 + $0x6c] sm:$0xf]
    %v2074 = vld [vmem:[%s8 + $0x70] sm:$0xf]
    %v2075 = vld [vmem:[%s8 + $0x74] sm:$0xf]
    %v2076 = vld [vmem:[%s8 + $0x78] sm:$0xf]
    %v2077 = vld [vmem:[%s8 + $0x7c] sm:$0xf]
    %v2110 = vunpack.c.l.b16 %v2046
    %v2111 = vunpack.c.l.b16 %v2047
    %v2112 = vunpack.c.l.b16 %v2048
    %v2113 = vunpack.c.l.b16 %v2049
    %v2114 = vunpack.c.l.b16 %v2050
    %v2115 = vunpack.c.l.b16 %v2051
    %v2116 = vunpack.c.l.b16 %v2052
    %v2117 = vunpack.c.l.b16 %v2053
    %v2118 = vunpack.c.l.b16 %v2054
    %v2119 = vunpack.c.l.b16 %v2055
    %v2120 = vunpack.c.l.b16 %v2056
    %v2121 = vunpack.c.l.b16 %v2057
    %v2122 = vunpack.c.l.b16 %v2058
    %v2123 = vunpack.c.l.b16 %v2059
    %v2124 = vunpack.c.l.b16 %v2060
    %v2125 = vunpack.c.l.b16 %v2061
    %v2126 = vunpack.c.l.b16 %v2062
    %v2127 = vunpack.c.l.b16 %v2063
    %v2128 = vunpack.c.l.b16 %v2064
    %v2129 = vunpack.c.l.b16 %v2065
    %v2130 = vunpack.c.l.b16 %v2066
    %v2131 = vunpack.c.l.b16 %v2067
    %v2132 = vunpack.c.l.b16 %v2068
    %v2133 = vunpack.c.l.b16 %v2069
    %v2134 = vunpack.c.l.b16 %v2070
    %v2135 = vunpack.c.l.b16 %v2071
    %v2136 = vunpack.c.l.b16 %v2072
    %v2137 = vunpack.c.l.b16 %v2073
    %v2138 = vunpack.c.l.b16 %v2074
    %v2139 = vunpack.c.l.b16 %v2075
    %v2140 = vunpack.c.l.b16 %v2076
    %v2141 = vunpack.c.l.b16 %v2077
    %v2142 = vpack.c.b16 %v2111, %v2110
    %v2143 = vpack.c.b16 %v2113, %v2112
    %v2144 = vpack.c.b16 %v2115, %v2114
    %v2145 = vpack.c.b16 %v2117, %v2116
    %v2146 = vpack.c.b16 %v2119, %v2118
    %v2147 = vpack.c.b16 %v2121, %v2120
    %v2148 = vpack.c.b16 %v2123, %v2122
    %v2149 = vpack.c.b16 %v2125, %v2124
    %v2150 = vpack.c.b16 %v2127, %v2126
    %v2151 = vpack.c.b16 %v2129, %v2128
    %v2152 = vpack.c.b16 %v2131, %v2130
    %v2153 = vpack.c.b16 %v2133, %v2132
    %v2154 = vpack.c.b16 %v2135, %v2134
    %v2155 = vpack.c.b16 %v2137, %v2136
    %v2156 = vpack.c.b16 %v2139, %v2138
    %v2157 = vpack.c.b16 %v2141, %v2140
    %2174 = vmatprep.subr.bf16.mxu0 0
    %2175 = vmatpush1.bf16.msra.mxu0 %v2142
    %2176 = vmatprep.subr.bf16.mxu0 0
    %2177 = vmatpush1.bf16.msra.mxu0 %v2143
    %2178 = vmatprep.subr.bf16.mxu0 0
    %2179 = vmatpush1.bf16.msra.mxu0 %v2144
    %2180 = vmatprep.subr.bf16.mxu0 0
    %2181 = vmatpush1.bf16.msra.mxu0 %v2145
    %2182 = vmatprep.subr.bf16.mxu0 0
    %2183 = vmatpush1.bf16.msra.mxu0 %v2146
    %2184 = vmatprep.subr.bf16.mxu0 0
    %2185 = vmatpush1.bf16.msra.mxu0 %v2147
    %2186 = vmatprep.subr.bf16.mxu0 0
    %2187 = vmatpush1.bf16.msra.mxu0 %v2148
    %2188 = vmatprep.subr.bf16.mxu0 0
    %2189 = vmatpush1.bf16.msra.mxu0 %v2149
    %2190 = vmatprep.subr.bf16.mxu0 0
    %2191 = vmatpush1.bf16.msra.mxu0 %v2150
    %2192 = vmatprep.subr.bf16.mxu0 0
    %2193 = vmatpush1.bf16.msra.mxu0 %v2151
    %2194 = vmatprep.subr.bf16.mxu0 0
    %2195 = vmatpush1.bf16.msra.mxu0 %v2152
    %2196 = vmatprep.subr.bf16.mxu0 0
    %2197 = vmatpush1.bf16.msra.mxu0 %v2153
    %2198 = vmatprep.subr.bf16.mxu0 0
    %2199 = vmatpush1.bf16.msra.mxu0 %v2154
    %2200 = vmatprep.subr.bf16.mxu0 0
    %2201 = vmatpush1.bf16.msra.mxu0 %v2155
    %2202 = vmatprep.subr.bf16.mxu0 0
    %2203 = vmatpush1.bf16.msra.mxu0 %v2156
    %2204 = vmatprep.subr.bf16.mxu0 0
    %2205 = vmatpush1.bf16.msra.mxu0 %v2157
    %2206 = vmatprep.mubr.bf16.mxu0 %v2045
    %2207 = vmatmul.mubr.bf16.gmra.mrb[0].mxu0 %v2044
    %v2208 = vpop.f32.mrb[0].mxu0
    %v2209 = vadd.f32 0.0, %v2208
    %v2210 = vpop.f32.mrb[0].mxu0
    %v2211 = vpop.f32.mrb[0].mxu0
    %v2212 = vpop.f32.mrb[0].mxu0
    %2213 = vdwg.mxu0
    %v2214 = vld [vmem:[%s1] sm:$0xff]
    %v2215 = vpack.c.bf16 %v2214, %v2214
    %v2216 = vld [vmem:[%s9] sm:$0x3]
    %vm2217 = vcmask 31744
    %v2219 = vsel %vm2217, %v2215, 0
    %vm2221 = vcmask 1041408
    %v2223 = vsel %vm2221, %v2216, 0
    %2225 = vmatprep.subr.bf16.mxu0 0
    %2226 = vmatpush1.bf16.msra.mxu0 %v2223
    %2227 = vmatprep.subr.bf16.mxu0 0
    %2228 = vmatpush1.bf16.msra.mxu0 0
    %2229 = vmatprep.subr.bf16.mxu0 0
    %2230 = vmatpush1.bf16.msra.mxu0 0
    %2231 = vmatprep.subr.bf16.mxu0 0
    %2232 = vmatpush1.bf16.msra.mxu0 0
    %2233 = vmatprep.subr.bf16.mxu0 0
    %2234 = vmatpush1.bf16.msra.mxu0 0
    %2235 = vmatprep.subr.bf16.mxu0 0
    %2236 = vmatpush1.bf16.msra.mxu0 0
    %2237 = vmatprep.subr.bf16.mxu0 0
    %2238 = vmatpush1.bf16.msra.mxu0 0
    %2239 = vmatprep.subr.bf16.mxu0 0
    %2240 = vmatpush1.bf16.msra.mxu0 0
    %2241 = vmatprep.subr.bf16.mxu0 0
    %2242 = vmatpush1.bf16.msra.mxu0 0
    %2243 = vmatprep.subr.bf16.mxu0 0
    %2244 = vmatpush1.bf16.msra.mxu0 0
    %2245 = vmatprep.subr.bf16.mxu0 0
    %2246 = vmatpush1.bf16.msra.mxu0 0
    %2247 = vmatprep.subr.bf16.mxu0 0
    %2248 = vmatpush1.bf16.msra.mxu0 0
    %2249 = vmatprep.subr.bf16.mxu0 0
    %2250 = vmatpush1.bf16.msra.mxu0 0
    %2251 = vmatprep.subr.bf16.mxu0 0
    %2252 = vmatpush1.bf16.msra.mxu0 0
    %2253 = vmatprep.subr.bf16.mxu0 0
    %2254 = vmatpush1.bf16.msra.mxu0 0
    %2255 = vmatprep.subr.bf16.mxu0 0
    %2256 = vmatpush1.bf16.msra.mxu0 0
    %2257 = vmatprep.mubr.bf16.mxu0 0
    %2258 = vmatmul.mubr.bf16.gmra.mrb[0].mxu0 %v2219
    %v2259 = vpop.f32.mrb[0].mxu0
    %v2260 = vadd.f32 0.0, %v2259
    %v2261 = vpop.f32.mrb[0].mxu0
    %v2262 = vpop.f32.mrb[0].mxu0
    %v2263 = vpop.f32.mrb[0].mxu0
    %2264 = vdwg.mxu0
    %v2265 = vmul.f32 %v2209, %v2260
    %v2266 = vpack.c.bf16 %v2265, %v2265
    %v2267 = vld [vmem:[%s2] sm:$0xff]
    %v2268 = vpack.c.bf16 %v2267, %v2267
    %v2269 = vld [vmem:[%s10] sm:$0xf]
    %v2270 = vld [vmem:[%s10 + $0x4] sm:$0xf]
    %v2271 = vld [vmem:[%s10 + $0x8] sm:$0xf]
    %v2272 = vld [vmem:[%s10 + $0xc] sm:$0xf]
    %v2273 = vld [vmem:[%s11] sm:$0xf]
    %v2274 = vld [vmem:[%s11 + $0x4] sm:$0xf]
    %v2275 = vld [vmem:[%s11 + $0x8] sm:$0xf]
    %v2276 = vld [vmem:[%s11 + $0xc] sm:$0xf]
    %v2281 = vunpack.c.l.b16 %v2273
    %v2282 = vunpack.c.l.b16 %v2274
    %v2283 = vunpack.c.l.b16 %v2275
    %v2284 = vunpack.c.l.b16 %v2276
    %v2285 = vpack.c.b16 %v2282, %v2281
    %v2286 = vpack.c.b16 %v2284, %v2283
    %vm2289 = vcmask 261120
    %v2291 = vsel %vm2289, %v2268, 0
    %2293 = vmatprep.subr.bf16.mxu0 0
    %2294 = vmatpush1.bf16.msra.mxu0 %v2285
    %2295 = vmatprep.subr.bf16.mxu0 0
    %2296 = vmatpush1.bf16.msra.mxu0 %v2286
    %2297 = vmatprep.subr.bf16.mxu0 0
    %2298 = vmatpush1.bf16.msra.mxu0 0
    %2299 = vmatprep.subr.bf16.mxu0 0
    %2300 = vmatpush1.bf16.msra.mxu0 0
    %2301 = vmatprep.subr.bf16.mxu0 0
    %2302 = vmatpush1.bf16.msra.mxu0 0
    %2303 = vmatprep.subr.bf16.mxu0 0
    %2304 = vmatpush1.bf16.msra.mxu0 0
    %2305 = vmatprep.subr.bf16.mxu0 0
    %2306 = vmatpush1.bf16.msra.mxu0 0
    %2307 = vmatprep.subr.bf16.mxu0 0
    %2308 = vmatpush1.bf16.msra.mxu0 0
    %2309 = vmatprep.subr.bf16.mxu0 0
    %2310 = vmatpush1.bf16.msra.mxu0 0
    %2311 = vmatprep.subr.bf16.mxu0 0
    %2312 = vmatpush1.bf16.msra.mxu0 0
    %2313 = vmatprep.subr.bf16.mxu0 0
    %2314 = vmatpush1.bf16.msra.mxu0 0
    %2315 = vmatprep.subr.bf16.mxu0 0
    %2316 = vmatpush1.bf16.msra.mxu0 0
    %2317 = vmatprep.subr.bf16.mxu0 0
    %2318 = vmatpush1.bf16.msra.mxu0 0
    %2319 = vmatprep.subr.bf16.mxu0 0
    %2320 = vmatpush1.bf16.msra.mxu0 0
    %2321 = vmatprep.subr.bf16.mxu0 0
    %2322 = vmatpush1.bf16.msra.mxu0 0
    %2323 = vmatprep.subr.bf16.mxu0 0
    %2324 = vmatpush1.bf16.msra.mxu0 0
    %2325 = vmatprep.mubr.bf16.mxu0 0
    %2326 = vmatmul.mubr.bf16.gmra.mrb[0].mxu0 %v2291
    %v2327 = vpop.f32.mrb[0].mxu0
    %v2328 = vadd.f32 0.0, %v2327
    %v2329 = vpop.f32.mrb[0].mxu0
    %v2330 = vpop.f32.mrb[0].mxu0
    %v2331 = vpop.f32.mrb[0].mxu0
    %2332 = vdwg.mxu0
    %v2337 = vunpack.c.l.b16 %v2269
    %v2338 = vunpack.c.l.b16 %v2270
    %v2339 = vunpack.c.l.b16 %v2271
    %v2340 = vunpack.c.l.b16 %v2272
    %v2341 = vpack.c.b16 %v2338, %v2337
    %v2342 = vpack.c.b16 %v2340, %v2339
    %v2346 = vsel %vm2289, %v2266, 0
    %2348 = vmatprep.subr.bf16.mxu0 0
    %2349 = vmatpush1.bf16.msra.mxu0 %v2341
    %2350 = vmatprep.subr.bf16.mxu0 0
    %2351 = vmatpush1.bf16.msra.mxu0 %v2342
    %2352 = vmatprep.subr.bf16.mxu0 0
    %2353 = vmatpush1.bf16.msra.mxu0 0
    %2354 = vmatprep.subr.bf16.mxu0 0
    %2355 = vmatpush1.bf16.msra.mxu0 0
    %2356 = vmatprep.subr.bf16.mxu0 0
    %2357 = vmatpush1.bf16.msra.mxu0 0
    %2358 = vmatprep.subr.bf16.mxu0 0
    %2359 = vmatpush1.bf16.msra.mxu0 0
    %2360 = vmatprep.subr.bf16.mxu0 0
    %2361 = vmatpush1.bf16.msra.mxu0 0
    %2362 = vmatprep.subr.bf16.mxu0 0
    %2363 = vmatpush1.bf16.msra.mxu0 0
    %2364 = vmatprep.subr.bf16.mxu0 0
    %2365 = vmatpush1.bf16.msra.mxu0 0
    %2366 = vmatprep.subr.bf16.mxu0 0
    %2367 = vmatpush1.bf16.msra.mxu0 0
    %2368 = vmatprep.subr.bf16.mxu0 0
    %2369 = vmatpush1.bf16.msra.mxu0 0
    %2370 = vmatprep.subr.bf16.mxu0 0
    %2371 = vmatpush1.bf16.msra.mxu0 0
    %2372 = vmatprep.subr.bf16.mxu0 0
    %2373 = vmatpush1.bf16.msra.mxu0 0
    %2374 = vmatprep.subr.bf16.mxu0 0
    %2375 = vmatpush1.bf16.msra.mxu0 0
    %2376 = vmatprep.subr.bf16.mxu0 0
    %2377 = vmatpush1.bf16.msra.mxu0 0
    %2378 = vmatprep.subr.bf16.mxu0 0
    %2379 = vmatpush1.bf16.msra.mxu0 0
    %2380 = vmatprep.mubr.bf16.mxu0 0
    %2381 = vmatmul.mubr.bf16.gmra.mrb[0].mxu0 %v2346
    %v2382 = vpop.f32.mrb[0].mxu0
    %v2383 = vadd.f32 %v2328, %v2382
    %v2384 = vpop.f32.mrb[0].mxu0
    %v2385 = vpop.f32.mrb[0].mxu0
    %v2386 = vpop.f32.mrb[0].mxu0
    %2387 = vdwg.mxu0
    %v2388 = vld [vmem:[%s12] sm:$0x1]
    %v2390 = vlaneseq
    %v2391 = vshrl.u32 %v2390, 7
    %v2392 = vsub.s32 0, %v2391
    %v2393 = vrot.slane %v2388, %v2392
    %v2395 = vadd.f32 %v2383, %v2393
    %s2396 = scalar_lea.vmem %s10, 16
    %v2397 = vld [vmem:[%s2396] sm:$0xf]
    %v2398 = vld [vmem:[%s2396 + $0x4] sm:$0xf]
    %v2399 = vld [vmem:[%s2396 + $0x8] sm:$0xf]
    %v2400 = vld [vmem:[%s2396 + $0xc] sm:$0xf]
    %s2401 = scalar_lea.vmem %s11, 16
    %v2402 = vld [vmem:[%s2401] sm:$0xf]
    %v2403 = vld [vmem:[%s2401 + $0x4] sm:$0xf]
    %v2404 = vld [vmem:[%s2401 + $0x8] sm:$0xf]
    %v2405 = vld [vmem:[%s2401 + $0xc] sm:$0xf]
    %v2410 = vunpack.c.l.b16 %v2402
    %v2411 = vunpack.c.l.b16 %v2403
    %v2412 = vunpack.c.l.b16 %v2404
    %v2413 = vunpack.c.l.b16 %v2405
    %v2414 = vpack.c.b16 %v2411, %v2410
    %v2415 = vpack.c.b16 %v2413, %v2412
    %2418 = vmatprep.subr.bf16.mxu0 0
    %2419 = vmatpush1.bf16.msra.mxu0 %v2414
    %2420 = vmatprep.subr.bf16.mxu0 0
    %2421 = vmatpush1.bf16.msra.mxu0 %v2415
    %2422 = vmatprep.subr.bf16.mxu0 0
    %2423 = vmatpush1.bf16.msra.mxu0 0
    %2424 = vmatprep.subr.bf16.mxu0 0
    %2425 = vmatpush1.bf16.msra.mxu0 0
    %2426 = vmatprep.subr.bf16.mxu0 0
    %2427 = vmatpush1.bf16.msra.mxu0 0
    %2428 = vmatprep.subr.bf16.mxu0 0
    %2429 = vmatpush1.bf16.msra.mxu0 0
    %2430 = vmatprep.subr.bf16.mxu0 0
    %2431 = vmatpush1.bf16.msra.mxu0 0
    %2432 = vmatprep.subr.bf16.mxu0 0
    %2433 = vmatpush1.bf16.msra.mxu0 0
    %2434 = vmatprep.subr.bf16.mxu0 0
    %2435 = vmatpush1.bf16.msra.mxu0 0
    %2436 = vmatprep.subr.bf16.mxu0 0
    %2437 = vmatpush1.bf16.msra.mxu0 0
    %2438 = vmatprep.subr.bf16.mxu0 0
    %2439 = vmatpush1.bf16.msra.mxu0 0
    %2440 = vmatprep.subr.bf16.mxu0 0
    %2441 = vmatpush1.bf16.msra.mxu0 0
    %2442 = vmatprep.subr.bf16.mxu0 0
    %2443 = vmatpush1.bf16.msra.mxu0 0
    %2444 = vmatprep.subr.bf16.mxu0 0
    %2445 = vmatpush1.bf16.msra.mxu0 0
    %2446 = vmatprep.subr.bf16.mxu0 0
    %2447 = vmatpush1.bf16.msra.mxu0 0
    %2448 = vmatprep.subr.bf16.mxu0 0
    %2449 = vmatpush1.bf16.msra.mxu0 0
    %2450 = vmatprep.mubr.bf16.mxu0 0
    %2451 = vmatmul.mubr.bf16.gmra.mrb[0].mxu0 %v2291
    %v2452 = vpop.f32.mrb[0].mxu0
    %v2453 = vadd.f32 0.0, %v2452
    %v2454 = vpop.f32.mrb[0].mxu0
    %v2455 = vpop.f32.mrb[0].mxu0
    %v2456 = vpop.f32.mrb[0].mxu0
    %2457 = vdwg.mxu0
    %v2462 = vunpack.c.l.b16 %v2397
    %v2463 = vunpack.c.l.b16 %v2398
    %v2464 = vunpack.c.l.b16 %v2399
    %v2465 = vunpack.c.l.b16 %v2400
    %v2466 = vpack.c.b16 %v2463, %v2462
    %v2467 = vpack.c.b16 %v2465, %v2464
    %2470 = vmatprep.subr.bf16.mxu0 0
    %2471 = vmatpush1.bf16.msra.mxu0 %v2466
    %2472 = vmatprep.subr.bf16.mxu0 0
    %2473 = vmatpush1.bf16.msra.mxu0 %v2467
    %2474 = vmatprep.subr.bf16.mxu0 0
    %2475 = vmatpush1.bf16.msra.mxu0 0
    %2476 = vmatprep.subr.bf16.mxu0 0
    %2477 = vmatpush1.bf16.msra.mxu0 0
    %2478 = vmatprep.subr.bf16.mxu0 0
    %2479 = vmatpush1.bf16.msra.mxu0 0
    %2480 = vmatprep.subr.bf16.mxu0 0
    %2481 = vmatpush1.bf16.msra.mxu0 0
    %2482 = vmatprep.subr.bf16.mxu0 0
    %2483 = vmatpush1.bf16.msra.mxu0 0
    %2484 = vmatprep.subr.bf16.mxu0 0
    %2485 = vmatpush1.bf16.msra.mxu0 0
    %2486 = vmatprep.subr.bf16.mxu0 0
    %2487 = vmatpush1.bf16.msra.mxu0 0
    %2488 = vmatprep.subr.bf16.mxu0 0
    %2489 = vmatpush1.bf16.msra.mxu0 0
    %2490 = vmatprep.subr.bf16.mxu0 0
    %2491 = vmatpush1.bf16.msra.mxu0 0
    %2492 = vmatprep.subr.bf16.mxu0 0
    %2493 = vmatpush1.bf16.msra.mxu0 0
    %2494 = vmatprep.subr.bf16.mxu0 0
    %2495 = vmatpush1.bf16.msra.mxu0 0
    %2496 = vmatprep.subr.bf16.mxu0 0
    %2497 = vmatpush1.bf16.msra.mxu0 0
    %2498 = vmatprep.subr.bf16.mxu0 0
    %2499 = vmatpush1.bf16.msra.mxu0 0
    %2500 = vmatprep.subr.bf16.mxu0 0
    %2501 = vmatpush1.bf16.msra.mxu0 0
    %2502 = vmatprep.mubr.bf16.mxu0 0
    %2503 = vmatmul.mubr.bf16.gmra.mrb[0].mxu0 %v2346
    %v2504 = vpop.f32.mrb[0].mxu0
    %v2505 = vadd.f32 %v2453, %v2504
    %v2506 = vpop.f32.mrb[0].mxu0
    %v2507 = vpop.f32.mrb[0].mxu0
    %v2508 = vpop.f32.mrb[0].mxu0
    %2509 = vdwg.mxu0
    %s2510 = scalar_lea.vmem %s12, 1
    %v2511 = vld [vmem:[%s2510] sm:$0x1]
    %v2513 = vlaneseq
    %v2514 = vshrl.u32 %v2513, 7
    %v2515 = vsub.s32 0, %v2514
    %v2516 = vrot.slane %v2511, %v2515
    %v2518 = vadd.f32 %v2505, %v2516
    %s2519 = scalar_lea.vmem %s10, 32
    %v2520 = vld [vmem:[%s2519] sm:$0xf]
    %v2521 = vld [vmem:[%s2519 + $0x4] sm:$0xf]
    %v2522 = vld [vmem:[%s2519 + $0x8] sm:$0xf]
    %v2523 = vld [vmem:[%s2519 + $0xc] sm:$0xf]
    %s2524 = scalar_lea.vmem %s11, 32
    %v2525 = vld [vmem:[%s2524] sm:$0xf]
    %v2526 = vld [vmem:[%s2524 + $0x4] sm:$0xf]
    %v2527 = vld [vmem:[%s2524 + $0x8] sm:$0xf]
    %v2528 = vld [vmem:[%s2524 + $0xc] sm:$0xf]
    %v2533 = vunpack.c.l.b16 %v2525
    %v2534 = vunpack.c.l.b16 %v2526
    %v2535 = vunpack.c.l.b16 %v2527
    %v2536 = vunpack.c.l.b16 %v2528
    %v2537 = vpack.c.b16 %v2534, %v2533
    %v2538 = vpack.c.b16 %v2536, %v2535
    %2541 = vmatprep.subr.bf16.mxu0 0
    %2542 = vmatpush1.bf16.msra.mxu0 %v2537
    %2543 = vmatprep.subr.bf16.mxu0 0
    %2544 = vmatpush1.bf16.msra.mxu0 %v2538
    %2545 = vmatprep.subr.bf16.mxu0 0
    %2546 = vmatpush1.bf16.msra.mxu0 0
    %2547 = vmatprep.subr.bf16.mxu0 0
    %2548 = vmatpush1.bf16.msra.mxu0 0
    %2549 = vmatprep.subr.bf16.mxu0 0
    %2550 = vmatpush1.bf16.msra.mxu0 0
    %2551 = vmatprep.subr.bf16.mxu0 0
    %2552 = vmatpush1.bf16.msra.mxu0 0
    %2553 = vmatprep.subr.bf16.mxu0 0
    %2554 = vmatpush1.bf16.msra.mxu0 0
    %2555 = vmatprep.subr.bf16.mxu0 0
    %2556 = vmatpush1.bf16.msra.mxu0 0
    %2557 = vmatprep.subr.bf16.mxu0 0
    %2558 = vmatpush1.bf16.msra.mxu0 0
    %2559 = vmatprep.subr.bf16.mxu0 0
    %2560 = vmatpush1.bf16.msra.mxu0 0
    %2561 = vmatprep.subr.bf16.mxu0 0
    %2562 = vmatpush1.bf16.msra.mxu0 0
    %2563 = vmatprep.subr.bf16.mxu0 0
    %2564 = vmatpush1.bf16.msra.mxu0 0
    %2565 = vmatprep.subr.bf16.mxu0 0
    %2566 = vmatpush1.bf16.msra.mxu0 0
    %2567 = vmatprep.subr.bf16.mxu0 0
    %2568 = vmatpush1.bf16.msra.mxu0 0
    %2569 = vmatprep.subr.bf16.mxu0 0
    %2570 = vmatpush1.bf16.msra.mxu0 0
    %2571 = vmatprep.subr.bf16.mxu0 0
    %2572 = vmatpush1.bf16.msra.mxu0 0
    %2573 = vmatprep.mubr.bf16.mxu0 0
    %2574 = vmatmul.mubr.bf16.gmra.mrb[0].mxu0 %v2291
    %v2575 = vpop.f32.mrb[0].mxu0
    %v2576 = vadd.f32 0.0, %v2575
    %v2577 = vpop.f32.mrb[0].mxu0
    %v2578 = vpop.f32.mrb[0].mxu0
    %v2579 = vpop.f32.mrb[0].mxu0
    %2580 = vdwg.mxu0
    %v2585 = vunpack.c.l.b16 %v2520
    %v2586 = vunpack.c.l.b16 %v2521
    %v2587 = vunpack.c.l.b16 %v2522
    %v2588 = vunpack.c.l.b16 %v2523
    %v2589 = vpack.c.b16 %v2586, %v2585
    %v2590 = vpack.c.b16 %v2588, %v2587
    %2593 = vmatprep.subr.bf16.mxu0 0
    %2594 = vmatpush1.bf16.msra.mxu0 %v2589
    %2595 = vmatprep.subr.bf16.mxu0 0
    %2596 = vmatpush1.bf16.msra.mxu0 %v2590
    %2597 = vmatprep.subr.bf16.mxu0 0
    %2598 = vmatpush1.bf16.msra.mxu0 0
    %2599 = vmatprep.subr.bf16.mxu0 0
    %2600 = vmatpush1.bf16.msra.mxu0 0
    %2601 = vmatprep.subr.bf16.mxu0 0
    %2602 = vmatpush1.bf16.msra.mxu0 0
    %2603 = vmatprep.subr.bf16.mxu0 0
    %2604 = vmatpush1.bf16.msra.mxu0 0
    %2605 = vmatprep.subr.bf16.mxu0 0
    %2606 = vmatpush1.bf16.msra.mxu0 0
    %2607 = vmatprep.subr.bf16.mxu0 0
    %2608 = vmatpush1.bf16.msra.mxu0 0
    %2609 = vmatprep.subr.bf16.mxu0 0
    %2610 = vmatpush1.bf16.msra.mxu0 0
    %2611 = vmatprep.subr.bf16.mxu0 0
    %2612 = vmatpush1.bf16.msra.mxu0 0
    %2613 = vmatprep.subr.bf16.mxu0 0
    %2614 = vmatpush1.bf16.msra.mxu0 0
    %2615 = vmatprep.subr.bf16.mxu0 0
    %2616 = vmatpush1.bf16.msra.mxu0 0
    %2617 = vmatprep.subr.bf16.mxu0 0
    %2618 = vmatpush1.bf16.msra.mxu0 0
    %2619 = vmatprep.subr.bf16.mxu0 0
    %2620 = vmatpush1.bf16.msra.mxu0 0
    %2621 = vmatprep.subr.bf16.mxu0 0
    %2622 = vmatpush1.bf16.msra.mxu0 0
    %2623 = vmatprep.subr.bf16.mxu0 0
    %2624 = vmatpush1.bf16.msra.mxu0 0
    %2625 = vmatprep.mubr.bf16.mxu0 0
    %2626 = vmatmul.mubr.bf16.gmra.mrb[0].mxu0 %v2346
    %v2627 = vpop.f32.mrb[0].mxu0
    %v2628 = vadd.f32 %v2576, %v2627
    %v2629 = vpop.f32.mrb[0].mxu0
    %v2630 = vpop.f32.mrb[0].mxu0
    %v2631 = vpop.f32.mrb[0].mxu0
    %2632 = vdwg.mxu0
    %s2633 = scalar_lea.vmem %s12, 2
    %v2634 = vld [vmem:[%s2633] sm:$0x1]
    %v2636 = vlaneseq
    %v2637 = vshrl.u32 %v2636, 7
    %v2638 = vsub.s32 0, %v2637
    %v2639 = vrot.slane %v2634, %v2638
    %v2641 = vadd.f32 %v2628, %v2639
    %s2642 = scalar_lea.vmem %s10, 48
    %v2643 = vld [vmem:[%s2642] sm:$0xf]
    %v2644 = vld [vmem:[%s2642 + $0x4] sm:$0xf]
    %v2645 = vld [vmem:[%s2642 + $0x8] sm:$0xf]
    %v2646 = vld [vmem:[%s2642 + $0xc] sm:$0xf]
    %s2647 = scalar_lea.vmem %s11, 48
    %v2648 = vld [vmem:[%s2647] sm:$0xf]
    %v2649 = vld [vmem:[%s2647 + $0x4] sm:$0xf]
    %v2650 = vld [vmem:[%s2647 + $0x8] sm:$0xf]
    %v2651 = vld [vmem:[%s2647 + $0xc] sm:$0xf]
    %v2656 = vunpack.c.l.b16 %v2648
    %v2657 = vunpack.c.l.b16 %v2649
    %v2658 = vunpack.c.l.b16 %v2650
    %v2659 = vunpack.c.l.b16 %v2651
    %v2660 = vpack.c.b16 %v2657, %v2656
    %v2661 = vpack.c.b16 %v2659, %v2658
    %2664 = vmatprep.subr.bf16.mxu0 0
    %2665 = vmatpush1.bf16.msra.mxu0 %v2660
    %2666 = vmatprep.subr.bf16.mxu0 0
    %2667 = vmatpush1.bf16.msra.mxu0 %v2661
    %2668 = vmatprep.subr.bf16.mxu0 0
    %2669 = vmatpush1.bf16.msra.mxu0 0
    %2670 = vmatprep.subr.bf16.mxu0 0
    %2671 = vmatpush1.bf16.msra.mxu0 0
    %2672 = vmatprep.subr.bf16.mxu0 0
    %2673 = vmatpush1.bf16.msra.mxu0 0
    %2674 = vmatprep.subr.bf16.mxu0 0
    %2675 = vmatpush1.bf16.msra.mxu0 0
    %2676 = vmatprep.subr.bf16.mxu0 0
    %2677 = vmatpush1.bf16.msra.mxu0 0
    %2678 = vmatprep.subr.bf16.mxu0 0
    %2679 = vmatpush1.bf16.msra.mxu0 0
    %2680 = vmatprep.subr.bf16.mxu0 0
    %2681 = vmatpush1.bf16.msra.mxu0 0
    %2682 = vmatprep.subr.bf16.mxu0 0
    %2683 = vmatpush1.bf16.msra.mxu0 0
    %2684 = vmatprep.subr.bf16.mxu0 0
    %2685 = vmatpush1.bf16.msra.mxu0 0
    %2686 = vmatprep.subr.bf16.mxu0 0
    %2687 = vmatpush1.bf16.msra.mxu0 0
    %2688 = vmatprep.subr.bf16.mxu0 0
    %2689 = vmatpush1.bf16.msra.mxu0 0
    %2690 = vmatprep.subr.bf16.mxu0 0
    %2691 = vmatpush1.bf16.msra.mxu0 0
    %2692 = vmatprep.subr.bf16.mxu0 0
    %2693 = vmatpush1.bf16.msra.mxu0 0
    %2694 = vmatprep.subr.bf16.mxu0 0
    %2695 = vmatpush1.bf16.msra.mxu0 0
    %2696 = vmatprep.mubr.bf16.mxu0 0
    %2697 = vmatmul.mubr.bf16.gmra.mrb[0].mxu0 %v2291
    %v2698 = vpop.f32.mrb[0].mxu0
    %v2699 = vadd.f32 0.0, %v2698
    %v2700 = vpop.f32.mrb[0].mxu0
    %v2701 = vpop.f32.mrb[0].mxu0
    %v2702 = vpop.f32.mrb[0].mxu0
    %2703 = vdwg.mxu0
    %v2708 = vunpack.c.l.b16 %v2643
    %v2709 = vunpack.c.l.b16 %v2644
    %v2710 = vunpack.c.l.b16 %v2645
    %v2711 = vunpack.c.l.b16 %v2646
    %v2712 = vpack.c.b16 %v2709, %v2708
    %v2713 = vpack.c.b16 %v2711, %v2710
    %2716 = vmatprep.subr.bf16.mxu0 0
    %2717 = vmatpush1.bf16.msra.mxu0 %v2712
    %2718 = vmatprep.subr.bf16.mxu0 0
    %2719 = vmatpush1.bf16.msra.mxu0 %v2713
    %2720 = vmatprep.subr.bf16.mxu0 0
    %2721 = vmatpush1.bf16.msra.mxu0 0
    %2722 = vmatprep.subr.bf16.mxu0 0
    %2723 = vmatpush1.bf16.msra.mxu0 0
    %2724 = vmatprep.subr.bf16.mxu0 0
    %2725 = vmatpush1.bf16.msra.mxu0 0
    %2726 = vmatprep.subr.bf16.mxu0 0
    %2727 = vmatpush1.bf16.msra.mxu0 0
    %2728 = vmatprep.subr.bf16.mxu0 0
    %2729 = vmatpush1.bf16.msra.mxu0 0
    %2730 = vmatprep.subr.bf16.mxu0 0
    %2731 = vmatpush1.bf16.msra.mxu0 0
    %2732 = vmatprep.subr.bf16.mxu0 0
    %2733 = vmatpush1.bf16.msra.mxu0 0
    %2734 = vmatprep.subr.bf16.mxu0 0
    %2735 = vmatpush1.bf16.msra.mxu0 0
    %2736 = vmatprep.subr.bf16.mxu0 0
    %2737 = vmatpush1.bf16.msra.mxu0 0
    %2738 = vmatprep.subr.bf16.mxu0 0
    %2739 = vmatpush1.bf16.msra.mxu0 0
    %2740 = vmatprep.subr.bf16.mxu0 0
    %2741 = vmatpush1.bf16.msra.mxu0 0
    %2742 = vmatprep.subr.bf16.mxu0 0
    %2743 = vmatpush1.bf16.msra.mxu0 0
    %2744 = vmatprep.subr.bf16.mxu0 0
    %2745 = vmatpush1.bf16.msra.mxu0 0
    %2746 = vmatprep.subr.bf16.mxu0 0
    %2747 = vmatpush1.bf16.msra.mxu0 0
    %2748 = vmatprep.mubr.bf16.mxu0 0
    %2749 = vmatmul.mubr.bf16.gmra.mrb[0].mxu0 %v2346
    %v2750 = vpop.f32.mrb[0].mxu0
    %v2751 = vadd.f32 %v2699, %v2750
    %v2752 = vpop.f32.mrb[0].mxu0
    %v2753 = vpop.f32.mrb[0].mxu0
    %v2754 = vpop.f32.mrb[0].mxu0
    %2755 = vdwg.mxu0
    %s2756 = scalar_lea.vmem %s12, 3
    %v2757 = vld [vmem:[%s2756] sm:$0x1]
    %v2759 = vlaneseq
    %v2760 = vshrl.u32 %v2759, 7
    %v2761 = vsub.s32 0, %v2760
    %v2762 = vrot.slane %v2757, %v2761
    %v2764 = vadd.f32 %v2751, %v2762
    %v2765 = vmul.f32 %v2395, 0.5
    %v2766 = vtanh.pop %v2765
    %v2767 = vmul.f32 %v2766, 0.5
    %v2768 = vadd.f32 %v2767, 0.5
    %v2769 = vmul.f32 %v2518, 0.5
    %v2770 = vtanh.pop %v2769
    %v2771 = vmul.f32 %v2770, 0.5
    %v2772 = vadd.f32 %v2771, 0.5
    %v2773 = vtanh.pop %v2641
    %v2774 = vmul.f32 %v2764, 0.5
    %v2775 = vtanh.pop %v2774
    %v2776 = vmul.f32 %v2775, 0.5
    %v2777 = vadd.f32 %v2776, 0.5
    %v2778 = vld [vmem:[%s3] sm:$0xff]
    %v2779 = vmul.f32 %v2772, %v2778
    %v2780 = vmul.f32 %v2768, %v2773
    %v2781 = vadd.f32 %v2779, %v2780
    %v2782 = vtanh.pop %v2781
    %v2783 = vmul.f32 %v2777, %v2782
    %2784 = vst.msk [vmem:[%s21] sm:$0xff] %vm2289, %v2783
    %2785 = vst.msk [vmem:[%s22] sm:$0xff] %vm2289, %v2781
    %v2786 = vpack.c.bf16 %v2783, %v2783
    %v2787 = vld [vmem:[%s13] sm:$0xff]
    %v2788 = vld [vmem:[%s13 + $0x8] sm:$0xff]
    %v2789 = vld [vmem:[%s13 + $0x10] sm:$0xff]
    %v2790 = vld [vmem:[%s13 + $0x18] sm:$0xff]
    %v2791 = vpack.c.bf16 %v2781, %v2781
    %v2792 = vld [vmem:[%s14] sm:$0xff]
    %v2793 = vld [vmem:[%s14 + $0x8] sm:$0xff]
    %v2794 = vld [vmem:[%s14 + $0x10] sm:$0xff]
    %v2795 = vld [vmem:[%s14 + $0x18] sm:$0xff]
    %v2800 = vunpack.c.l.b16 %v2792
    %v2801 = vunpack.c.h.b16 %v2792
    %v2802 = vunpack.c.l.b16 %v2793
    %v2803 = vunpack.c.h.b16 %v2793
    %v2804 = vunpack.c.l.b16 %v2794
    %v2805 = vunpack.c.h.b16 %v2794
    %v2806 = vunpack.c.l.b16 %v2795
    %v2807 = vunpack.c.h.b16 %v2795
    %v2808 = vpack.c.b16 %v2802, %v2800
    %v2809 = vpack.c.b16 %v2803, %v2801
    %v2810 = vpack.c.b16 %v2806, %v2804
    %v2811 = vpack.c.b16 %v2807, %v2805
    %v2817 = vsel %vm2289, %v2791, 0
    %2819 = vmatprep.subr.bf16.mxu0 %v2809
    %2820 = vmatpush1.bf16.msra.mxu0 %v2808
    %2821 = vmatprep.subr.bf16.mxu0 %v2811
    %2822 = vmatpush1.bf16.msra.mxu0 %v2810
    %2823 = vmatprep.subr.bf16.mxu0 0
    %2824 = vmatpush1.bf16.msra.mxu0 0
    %2825 = vmatprep.subr.bf16.mxu0 0
    %2826 = vmatpush1.bf16.msra.mxu0 0
    %2827 = vmatprep.subr.bf16.mxu0 0
    %2828 = vmatpush1.bf16.msra.mxu0 0
    %2829 = vmatprep.subr.bf16.mxu0 0
    %2830 = vmatpush1.bf16.msra.mxu0 0
    %2831 = vmatprep.subr.bf16.mxu0 0
    %2832 = vmatpush1.bf16.msra.mxu0 0
    %2833 = vmatprep.subr.bf16.mxu0 0
    %2834 = vmatpush1.bf16.msra.mxu0 0
    %2835 = vmatprep.subr.bf16.mxu0 0
    %2836 = vmatpush1.bf16.msra.mxu0 0
    %2837 = vmatprep.subr.bf16.mxu0 0
    %2838 = vmatpush1.bf16.msra.mxu0 0
    %2839 = vmatprep.subr.bf16.mxu0 0
    %2840 = vmatpush1.bf16.msra.mxu0 0
    %2841 = vmatprep.subr.bf16.mxu0 0
    %2842 = vmatpush1.bf16.msra.mxu0 0
    %2843 = vmatprep.subr.bf16.mxu0 0
    %2844 = vmatpush1.bf16.msra.mxu0 0
    %2845 = vmatprep.subr.bf16.mxu0 0
    %2846 = vmatpush1.bf16.msra.mxu0 0
    %2847 = vmatprep.subr.bf16.mxu0 0
    %2848 = vmatpush1.bf16.msra.mxu0 0
    %2849 = vmatprep.subr.bf16.mxu0 0
    %2850 = vmatpush1.bf16.msra.mxu0 0
    %2851 = vmatprep.mubr.bf16.mxu0 0
    %2852 = vmatmul.mubr.bf16.gmra.mrb[0].mxu0 %v2817
    %v2853 = vpop.f32.mrb[0].mxu0
    %v2854 = vadd.f32 0.0, %v2853
    %v2855 = vpop.f32.mrb[0].mxu0
    %v2856 = vadd.f32 0.0, %v2855
    %v2857 = vpop.f32.mrb[0].mxu0
    %v2858 = vpop.f32.mrb[0].mxu0
    %2859 = vdwg.mxu0
    %v2864 = vunpack.c.l.b16 %v2787
    %v2865 = vunpack.c.h.b16 %v2787
    %v2866 = vunpack.c.l.b16 %v2788
    %v2867 = vunpack.c.h.b16 %v2788
    %v2868 = vunpack.c.l.b16 %v2789
    %v2869 = vunpack.c.h.b16 %v2789
    %v2870 = vunpack.c.l.b16 %v2790
    %v2871 = vunpack.c.h.b16 %v2790
    %v2872 = vpack.c.b16 %v2866, %v2864
    %v2873 = vpack.c.b16 %v2867, %v2865
    %v2874 = vpack.c.b16 %v2870, %v2868
    %v2875 = vpack.c.b16 %v2871, %v2869
    %v2881 = vsel %vm2289, %v2786, 0
    %2883 = vmatprep.subr.bf16.mxu0 %v2873
    %2884 = vmatpush1.bf16.msra.mxu0 %v2872
    %2885 = vmatprep.subr.bf16.mxu0 %v2875
    %2886 = vmatpush1.bf16.msra.mxu0 %v2874
    %2887 = vmatprep.subr.bf16.mxu0 0
    %2888 = vmatpush1.bf16.msra.mxu0 0
    %2889 = vmatprep.subr.bf16.mxu0 0
    %2890 = vmatpush1.bf16.msra.mxu0 0
    %2891 = vmatprep.subr.bf16.mxu0 0
    %2892 = vmatpush1.bf16.msra.mxu0 0
    %2893 = vmatprep.subr.bf16.mxu0 0
    %2894 = vmatpush1.bf16.msra.mxu0 0
    %2895 = vmatprep.subr.bf16.mxu0 0
    %2896 = vmatpush1.bf16.msra.mxu0 0
    %2897 = vmatprep.subr.bf16.mxu0 0
    %2898 = vmatpush1.bf16.msra.mxu0 0
    %2899 = vmatprep.subr.bf16.mxu0 0
    %2900 = vmatpush1.bf16.msra.mxu0 0
    %2901 = vmatprep.subr.bf16.mxu0 0
    %2902 = vmatpush1.bf16.msra.mxu0 0
    %2903 = vmatprep.subr.bf16.mxu0 0
    %2904 = vmatpush1.bf16.msra.mxu0 0
    %2905 = vmatprep.subr.bf16.mxu0 0
    %2906 = vmatpush1.bf16.msra.mxu0 0
    %2907 = vmatprep.subr.bf16.mxu0 0
    %2908 = vmatpush1.bf16.msra.mxu0 0
    %2909 = vmatprep.subr.bf16.mxu0 0
    %2910 = vmatpush1.bf16.msra.mxu0 0
    %2911 = vmatprep.subr.bf16.mxu0 0
    %2912 = vmatpush1.bf16.msra.mxu0 0
    %2913 = vmatprep.subr.bf16.mxu0 0
    %2914 = vmatpush1.bf16.msra.mxu0 0
    %2915 = vmatprep.mubr.bf16.mxu0 0
    %2916 = vmatmul.mubr.bf16.gmra.mrb[0].mxu0 %v2881
    %v2917 = vpop.f32.mrb[0].mxu0
    %v2918 = vadd.f32 %v2854, %v2917
    %v2919 = vpop.f32.mrb[0].mxu0
    %v2920 = vadd.f32 %v2856, %v2919
    %v2921 = vpop.f32.mrb[0].mxu0
    %v2922 = vpop.f32.mrb[0].mxu0
    %2923 = vdwg.mxu0
    %v2924 = vld [vmem:[%s15] sm:$0x3]
    %v2926 = vlaneseq
    %v2927 = vshrl.u32 %v2926, 7
    %v2928 = vsub.s32 0, %v2927
    %v2929 = vrot.slane %v2924, %v2928
    %v2930 = vlaneseq
    %v2931 = vshrl.u32 %v2930, 7
    %v2932 = vsub.s32 1, %v2931
    %v2933 = vrot.slane %v2924, %v2932
    %v2936 = vadd.f32 %v2918, %v2929
    %v2937 = vadd.f32 %v2920, %v2933
    %v2938 = vmax.f32 %v2936, 0.0
    %v2939 = vmax.f32 %v2937, 0.0
    %v2940 = vpack.c.bf16 %v2938, %v2938
    %v2941 = vpack.c.bf16 %v2939, %v2939
    %v2942 = vld [vmem:[#allocation6] sm:$0xff]
    %v2943 = vld [vmem:[#allocation6 + $0x8] sm:$0xff]
    %v2944 = vld [vmem:[#allocation6 + $0x10] sm:$0xff]
    %v2945 = vld [vmem:[#allocation6 + $0x18] sm:$0xff]
    %v2946 = vld [vmem:[#allocation6 + $0x20] sm:$0xff]
    %v2947 = vld [vmem:[#allocation6 + $0x28] sm:$0xff]
    %v2948 = vld [vmem:[#allocation6 + $0x30] sm:$0xff]
    %v2949 = vld [vmem:[#allocation6 + $0x38] sm:$0xff]
    %v2950 = vld [vmem:[#allocation6 + $0x40] sm:$0xff]
    %v2951 = vld [vmem:[#allocation6 + $0x48] sm:$0xff]
    %v2952 = vld [vmem:[#allocation6 + $0x50] sm:$0xff]
    %v2953 = vld [vmem:[#allocation6 + $0x58] sm:$0xff]
    %v2954 = vld [vmem:[#allocation6 + $0x60] sm:$0xff]
    %v2955 = vld [vmem:[#allocation6 + $0x68] sm:$0xff]
    %v2956 = vld [vmem:[#allocation6 + $0x70] sm:$0xff]
    %v2957 = vld [vmem:[#allocation6 + $0x78] sm:$0xff]
    %v2958 = vld [vmem:[#allocation6 + $0x80] sm:$0xff]
    %v2959 = vld [vmem:[#allocation6 + $0x88] sm:$0xff]
    %v2960 = vld [vmem:[#allocation6 + $0x90] sm:$0xff]
    %v2961 = vld [vmem:[#allocation6 + $0x98] sm:$0xff]
    %v2962 = vld [vmem:[#allocation6 + $0xa0] sm:$0xff]
    %v2963 = vld [vmem:[#allocation6 + $0xa8] sm:$0xff]
    %v2964 = vld [vmem:[#allocation6 + $0xb0] sm:$0xff]
    %v2965 = vld [vmem:[#allocation6 + $0xb8] sm:$0xff]
    %v2966 = vld [vmem:[#allocation6 + $0xc0] sm:$0xff]
    %v2967 = vld [vmem:[#allocation6 + $0xc8] sm:$0xff]
    %v2968 = vld [vmem:[#allocation6 + $0xd0] sm:$0xff]
    %v2969 = vld [vmem:[#allocation6 + $0xd8] sm:$0xff]
    %v2970 = vld [vmem:[#allocation6 + $0xe0] sm:$0xff]
    %v2971 = vld [vmem:[#allocation6 + $0xe8] sm:$0xff]
    %v2972 = vld [vmem:[#allocation6 + $0xf0] sm:$0xff]
    %v2973 = vld [vmem:[#allocation6 + $0xf8] sm:$0xff]
    %v2974 = vld [vmem:[#allocation6 + $0x100] sm:$0xff]
    %v2975 = vld [vmem:[#allocation6 + $0x108] sm:$0xff]
    %v2976 = vld [vmem:[#allocation6 + $0x110] sm:$0xff]
    %v2977 = vld [vmem:[#allocation6 + $0x118] sm:$0xff]
    %v2978 = vld [vmem:[#allocation6 + $0x120] sm:$0xff]
    %v2979 = vld [vmem:[#allocation6 + $0x128] sm:$0xff]
    %v2980 = vld [vmem:[#allocation6 + $0x130] sm:$0xff]
    %v2981 = vld [vmem:[#allocation6 + $0x138] sm:$0xff]
    %v2982 = vld [vmem:[#allocation6 + $0x140] sm:$0xff]
    %v2983 = vld [vmem:[#allocation6 + $0x148] sm:$0xff]
    %v2984 = vld [vmem:[#allocation6 + $0x150] sm:$0xff]
    %v2985 = vld [vmem:[#allocation6 + $0x158] sm:$0xff]
    %v2986 = vld [vmem:[#allocation6 + $0x160] sm:$0xff]
    %v2987 = vld [vmem:[#allocation6 + $0x168] sm:$0xff]
    %v2988 = vld [vmem:[#allocation6 + $0x170] sm:$0xff]
    %v2989 = vld [vmem:[#allocation6 + $0x178] sm:$0xff]
    %v2990 = vld [vmem:[#allocation6 + $0x180] sm:$0xff]
    %v2991 = vld [vmem:[#allocation6 + $0x188] sm:$0xff]
    %v2992 = vld [vmem:[#allocation6 + $0x190] sm:$0xff]
    %v2993 = vld [vmem:[#allocation6 + $0x198] sm:$0xff]
    %v2994 = vld [vmem:[#allocation6 + $0x1a0] sm:$0xff]
    %v2995 = vld [vmem:[#allocation6 + $0x1a8] sm:$0xff]
    %v2996 = vld [vmem:[#allocation6 + $0x1b0] sm:$0xff]
    %v2997 = vld [vmem:[#allocation6 + $0x1b8] sm:$0xff]
    %v2998 = vld [vmem:[#allocation6 + $0x1c0] sm:$0xff]
    %v2999 = vld [vmem:[#allocation6 + $0x1c8] sm:$0xff]
    %v3000 = vld [vmem:[#allocation6 + $0x1d0] sm:$0xff]
    %v3001 = vld [vmem:[#allocation6 + $0x1d8] sm:$0xff]
    %v3002 = vld [vmem:[#allocation6 + $0x1e0] sm:$0xff]
    %v3003 = vld [vmem:[#allocation6 + $0x1e8] sm:$0xff]
    %v3004 = vld [vmem:[#allocation6 + $0x1f0] sm:$0xff]
    %v3005 = vld [vmem:[#allocation6 + $0x1f8] sm:$0xff]
    %v3006 = vld [vmem:[%s17] sm:$0xf]
    %v3008 = vlaneseq
    %v3009 = vshrl.u32 %v3008, 7
    %v3010 = vsub.s32 0, %v3009
    %v3011 = vrot.slane %v3006, %v3010
    %v3012 = vlaneseq
    %v3013 = vshrl.u32 %v3012, 7
    %v3014 = vsub.s32 1, %v3013
    %v3015 = vrot.slane %v3006, %v3014
    %v3016 = vlaneseq
    %v3017 = vshrl.u32 %v3016, 7
    %v3018 = vsub.s32 2, %v3017
    %v3019 = vrot.slane %v3006, %v3018
    %v3020 = vlaneseq
    %v3021 = vshrl.u32 %v3020, 7
    %v3022 = vsub.s32 3, %v3021
    %v3023 = vrot.slane %v3006, %v3022
    %v3092 = vunpack.c.l.b16 %v2942
    %v3093 = vunpack.c.h.b16 %v2942
    %v3094 = vunpack.c.l.b16 %v2943
    %v3095 = vunpack.c.h.b16 %v2943
    %v3096 = vunpack.c.l.b16 %v2944
    %v3097 = vunpack.c.h.b16 %v2944
    %v3098 = vunpack.c.l.b16 %v2945
    %v3099 = vunpack.c.h.b16 %v2945
    %v3100 = vunpack.c.l.b16 %v2946
    %v3101 = vunpack.c.h.b16 %v2946
    %v3102 = vunpack.c.l.b16 %v2947
    %v3103 = vunpack.c.h.b16 %v2947
    %v3104 = vunpack.c.l.b16 %v2948
    %v3105 = vunpack.c.h.b16 %v2948
    %v3106 = vunpack.c.l.b16 %v2949
    %v3107 = vunpack.c.h.b16 %v2949
    %v3108 = vunpack.c.l.b16 %v2950
    %v3109 = vunpack.c.h.b16 %v2950
    %v3110 = vunpack.c.l.b16 %v2951
    %v3111 = vunpack.c.h.b16 %v2951
    %v3112 = vunpack.c.l.b16 %v2952
    %v3113 = vunpack.c.h.b16 %v2952
    %v3114 = vunpack.c.l.b16 %v2953
    %v3115 = vunpack.c.h.b16 %v2953
    %v3116 = vunpack.c.l.b16 %v2954
    %v3117 = vunpack.c.h.b16 %v2954
    %v3118 = vunpack.c.l.b16 %v2955
    %v3119 = vunpack.c.h.b16 %v2955
    %v3120 = vunpack.c.l.b16 %v2956
    %v3121 = vunpack.c.h.b16 %v2956
    %v3122 = vunpack.c.l.b16 %v2957
    %v3123 = vunpack.c.h.b16 %v2957
    %v3124 = vunpack.c.l.b16 %v2958
    %v3125 = vunpack.c.h.b16 %v2958
    %v3126 = vunpack.c.l.b16 %v2959
    %v3127 = vunpack.c.h.b16 %v2959
    %v3128 = vunpack.c.l.b16 %v2960
    %v3129 = vunpack.c.h.b16 %v2960
    %v3130 = vunpack.c.l.b16 %v2961
    %v3131 = vunpack.c.h.b16 %v2961
    %v3132 = vunpack.c.l.b16 %v2962
    %v3133 = vunpack.c.h.b16 %v2962
    %v3134 = vunpack.c.l.b16 %v2963
    %v3135 = vunpack.c.h.b16 %v2963
    %v3136 = vunpack.c.l.b16 %v2964
    %v3137 = vunpack.c.h.b16 %v2964
    %v3138 = vunpack.c.l.b16 %v2965
    %v3139 = vunpack.c.h.b16 %v2965
    %v3140 = vunpack.c.l.b16 %v2966
    %v3141 = vunpack.c.h.b16 %v2966
    %v3142 = vunpack.c.l.b16 %v2967
    %v3143 = vunpack.c.h.b16 %v2967
    %v3144 = vunpack.c.l.b16 %v2968
    %v3145 = vunpack.c.h.b16 %v2968
    %v3146 = vunpack.c.l.b16 %v2969
    %v3147 = vunpack.c.h.b16 %v2969
    %v3148 = vunpack.c.l.b16 %v2970
    %v3149 = vunpack.c.h.b16 %v2970
    %v3150 = vunpack.c.l.b16 %v2971
    %v3151 = vunpack.c.h.b16 %v2971
    %v3152 = vunpack.c.l.b16 %v2972
    %v3153 = vunpack.c.h.b16 %v2972
    %v3154 = vunpack.c.l.b16 %v2973
    %v3155 = vunpack.c.h.b16 %v2973
    %v3156 = vunpack.c.l.b16 %v2974
    %v3157 = vunpack.c.h.b16 %v2974
    %v3158 = vunpack.c.l.b16 %v2975
    %v3159 = vunpack.c.h.b16 %v2975
    %v3160 = vunpack.c.l.b16 %v2976
    %v3161 = vunpack.c.h.b16 %v2976
    %v3162 = vunpack.c.l.b16 %v2977
    %v3163 = vunpack.c.h.b16 %v2977
    %v3164 = vunpack.c.l.b16 %v2978
    %v3165 = vunpack.c.h.b16 %v2978
    %v3166 = vunpack.c.l.b16 %v2979
    %v3167 = vunpack.c.h.b16 %v2979
    %v3168 = vunpack.c.l.b16 %v2980
    %v3169 = vunpack.c.h.b16 %v2980
    %v3170 = vunpack.c.l.b16 %v2981
    %v3171 = vunpack.c.h.b16 %v2981
    %v3172 = vunpack.c.l.b16 %v2982
    %v3173 = vunpack.c.h.b16 %v2982
    %v3174 = vunpack.c.l.b16 %v2983
    %v3175 = vunpack.c.h.b16 %v2983
    %v3176 = vunpack.c.l.b16 %v2984
    %v3177 = vunpack.c.h.b16 %v2984
    %v3178 = vunpack.c.l.b16 %v2985
    %v3179 = vunpack.c.h.b16 %v2985
    %v3180 = vunpack.c.l.b16 %v2986
    %v3181 = vunpack.c.h.b16 %v2986
    %v3182 = vunpack.c.l.b16 %v2987
    %v3183 = vunpack.c.h.b16 %v2987
    %v3184 = vunpack.c.l.b16 %v2988
    %v3185 = vunpack.c.h.b16 %v2988
    %v3186 = vunpack.c.l.b16 %v2989
    %v3187 = vunpack.c.h.b16 %v2989
    %v3188 = vunpack.c.l.b16 %v2990
    %v3189 = vunpack.c.h.b16 %v2990
    %v3190 = vunpack.c.l.b16 %v2991
    %v3191 = vunpack.c.h.b16 %v2991
    %v3192 = vunpack.c.l.b16 %v2992
    %v3193 = vunpack.c.h.b16 %v2992
    %v3194 = vunpack.c.l.b16 %v2993
    %v3195 = vunpack.c.h.b16 %v2993
    %v3196 = vunpack.c.l.b16 %v2994
    %v3197 = vunpack.c.h.b16 %v2994
    %v3198 = vunpack.c.l.b16 %v2995
    %v3199 = vunpack.c.h.b16 %v2995
    %v3200 = vunpack.c.l.b16 %v2996
    %v3201 = vunpack.c.h.b16 %v2996
    %v3202 = vunpack.c.l.b16 %v2997
    %v3203 = vunpack.c.h.b16 %v2997
    %v3204 = vunpack.c.l.b16 %v2998
    %v3205 = vunpack.c.h.b16 %v2998
    %v3206 = vunpack.c.l.b16 %v2999
    %v3207 = vunpack.c.h.b16 %v2999
    %v3208 = vunpack.c.l.b16 %v3000
    %v3209 = vunpack.c.h.b16 %v3000
    %v3210 = vunpack.c.l.b16 %v3001
    %v3211 = vunpack.c.h.b16 %v3001
    %v3212 = vunpack.c.l.b16 %v3002
    %v3213 = vunpack.c.h.b16 %v3002
    %v3214 = vunpack.c.l.b16 %v3003
    %v3215 = vunpack.c.h.b16 %v3003
    %v3216 = vunpack.c.l.b16 %v3004
    %v3217 = vunpack.c.h.b16 %v3004
    %v3218 = vunpack.c.l.b16 %v3005
    %v3219 = vunpack.c.h.b16 %v3005
    %v3220 = vpack.c.b16 %v3096, %v3092
    %v3221 = vpack.c.b16 %v3097, %v3093
    %v3222 = vpack.c.b16 %v3098, %v3094
    %v3223 = vpack.c.b16 %v3099, %v3095
    %v3224 = vpack.c.b16 %v3104, %v3100
    %v3225 = vpack.c.b16 %v3105, %v3101
    %v3226 = vpack.c.b16 %v3106, %v3102
    %v3227 = vpack.c.b16 %v3107, %v3103
    %v3228 = vpack.c.b16 %v3112, %v3108
    %v3229 = vpack.c.b16 %v3113, %v3109
    %v3230 = vpack.c.b16 %v3114, %v3110
    %v3231 = vpack.c.b16 %v3115, %v3111
    %v3232 = vpack.c.b16 %v3120, %v3116
    %v3233 = vpack.c.b16 %v3121, %v3117
    %v3234 = vpack.c.b16 %v3122, %v3118
    %v3235 = vpack.c.b16 %v3123, %v3119
    %v3236 = vpack.c.b16 %v3128, %v3124
    %v3237 = vpack.c.b16 %v3129, %v3125
    %v3238 = vpack.c.b16 %v3130, %v3126
    %v3239 = vpack.c.b16 %v3131, %v3127
    %v3240 = vpack.c.b16 %v3136, %v3132
    %v3241 = vpack.c.b16 %v3137, %v3133
    %v3242 = vpack.c.b16 %v3138, %v3134
    %v3243 = vpack.c.b16 %v3139, %v3135
    %v3244 = vpack.c.b16 %v3144, %v3140
    %v3245 = vpack.c.b16 %v3145, %v3141
    %v3246 = vpack.c.b16 %v3146, %v3142
    %v3247 = vpack.c.b16 %v3147, %v3143
    %v3248 = vpack.c.b16 %v3152, %v3148
    %v3249 = vpack.c.b16 %v3153, %v3149
    %v3250 = vpack.c.b16 %v3154, %v3150
    %v3251 = vpack.c.b16 %v3155, %v3151
    %v3252 = vpack.c.b16 %v3160, %v3156
    %v3253 = vpack.c.b16 %v3161, %v3157
    %v3254 = vpack.c.b16 %v3162, %v3158
    %v3255 = vpack.c.b16 %v3163, %v3159
    %v3256 = vpack.c.b16 %v3168, %v3164
    %v3257 = vpack.c.b16 %v3169, %v3165
    %v3258 = vpack.c.b16 %v3170, %v3166
    %v3259 = vpack.c.b16 %v3171, %v3167
    %v3260 = vpack.c.b16 %v3176, %v3172
    %v3261 = vpack.c.b16 %v3177, %v3173
    %v3262 = vpack.c.b16 %v3178, %v3174
    %v3263 = vpack.c.b16 %v3179, %v3175
    %v3264 = vpack.c.b16 %v3184, %v3180
    %v3265 = vpack.c.b16 %v3185, %v3181
    %v3266 = vpack.c.b16 %v3186, %v3182
    %v3267 = vpack.c.b16 %v3187, %v3183
    %v3268 = vpack.c.b16 %v3192, %v3188
    %v3269 = vpack.c.b16 %v3193, %v3189
    %v3270 = vpack.c.b16 %v3194, %v3190
    %v3271 = vpack.c.b16 %v3195, %v3191
    %v3272 = vpack.c.b16 %v3200, %v3196
    %v3273 = vpack.c.b16 %v3201, %v3197
    %v3274 = vpack.c.b16 %v3202, %v3198
    %v3275 = vpack.c.b16 %v3203, %v3199
    %v3276 = vpack.c.b16 %v3208, %v3204
    %v3277 = vpack.c.b16 %v3209, %v3205
    %v3278 = vpack.c.b16 %v3210, %v3206
    %v3279 = vpack.c.b16 %v3211, %v3207
    %v3280 = vpack.c.b16 %v3216, %v3212
    %v3281 = vpack.c.b16 %v3217, %v3213
    %v3282 = vpack.c.b16 %v3218, %v3214
    %v3283 = vpack.c.b16 %v3219, %v3215
    %3348 = vmatprep.subr.bf16.mxu0 %v3221
    %3349 = vmatpush1.bf16.msra.mxu0 %v3220
    %3350 = vmatprep.subr.bf16.mxu0 %v3225
    %3351 = vmatpush1.bf16.msra.mxu0 %v3224
    %3352 = vmatprep.subr.bf16.mxu0 %v3229
    %3353 = vmatpush1.bf16.msra.mxu0 %v3228
    %3354 = vmatprep.subr.bf16.mxu0 %v3233
    %3355 = vmatpush1.bf16.msra.mxu0 %v3232
    %3356 = vmatprep.subr.bf16.mxu0 %v3237
    %3357 = vmatpush1.bf16.msra.mxu0 %v3236
    %3358 = vmatprep.subr.bf16.mxu0 %v3241
    %3359 = vmatpush1.bf16.msra.mxu0 %v3240
    %3360 = vmatprep.subr.bf16.mxu0 %v3245
    %3361 = vmatpush1.bf16.msra.mxu0 %v3244
    %3362 = vmatprep.subr.bf16.mxu0 %v3249
    %3363 = vmatpush1.bf16.msra.mxu0 %v3248
    %3364 = vmatprep.subr.bf16.mxu0 %v3253
    %3365 = vmatpush1.bf16.msra.mxu0 %v3252
    %3366 = vmatprep.subr.bf16.mxu0 %v3257
    %3367 = vmatpush1.bf16.msra.mxu0 %v3256
    %3368 = vmatprep.subr.bf16.mxu0 %v3261
    %3369 = vmatpush1.bf16.msra.mxu0 %v3260
    %3370 = vmatprep.subr.bf16.mxu0 %v3265
    %3371 = vmatpush1.bf16.msra.mxu0 %v3264
    %3372 = vmatprep.subr.bf16.mxu0 %v3269
    %3373 = vmatpush1.bf16.msra.mxu0 %v3268
    %3374 = vmatprep.subr.bf16.mxu0 %v3273
    %3375 = vmatpush1.bf16.msra.mxu0 %v3272
    %3376 = vmatprep.subr.bf16.mxu0 %v3277
    %3377 = vmatpush1.bf16.msra.mxu0 %v3276
    %3378 = vmatprep.subr.bf16.mxu0 %v3281
    %3379 = vmatpush1.bf16.msra.mxu0 %v3280
    %3380 = vmatprep.mubr.bf16.mxu0 %v2941
    %3381 = vmatmul.mubr.bf16.gmra.mrb[0].mxu0 %v2940
    %v3382 = vpop.f32.mrb[0].mxu0
    %v3383 = vadd.f32 %v3011, %v3382
    %v3384 = vpop.f32.mrb[0].mxu0
    %v3385 = vadd.f32 %v3015, %v3384
    %v3386 = vpop.f32.mrb[0].mxu0
    %v3387 = vpop.f32.mrb[0].mxu0
    %3388 = vdwg.mxu0
    %3389 = vmatprep.subr.bf16.mxu0 %v3223
    %3390 = vmatpush1.bf16.msra.mxu0 %v3222
    %3391 = vmatprep.subr.bf16.mxu0 %v3227
    %3392 = vmatpush1.bf16.msra.mxu0 %v3226
    %3393 = vmatprep.subr.bf16.mxu0 %v3231
    %3394 = vmatpush1.bf16.msra.mxu0 %v3230
    %3395 = vmatprep.subr.bf16.mxu0 %v3235
    %3396 = vmatpush1.bf16.msra.mxu0 %v3234
    %3397 = vmatprep.subr.bf16.mxu0 %v3239
    %3398 = vmatpush1.bf16.msra.mxu0 %v3238
    %3399 = vmatprep.subr.bf16.mxu0 %v3243
    %3400 = vmatpush1.bf16.msra.mxu0 %v3242
    %3401 = vmatprep.subr.bf16.mxu0 %v3247
    %3402 = vmatpush1.bf16.msra.mxu0 %v3246
    %3403 = vmatprep.subr.bf16.mxu0 %v3251
    %3404 = vmatpush1.bf16.msra.mxu0 %v3250
    %3405 = vmatprep.subr.bf16.mxu0 %v3255
    %3406 = vmatpush1.bf16.msra.mxu0 %v3254
    %3407 = vmatprep.subr.bf16.mxu0 %v3259
    %3408 = vmatpush1.bf16.msra.mxu0 %v3258
    %3409 = vmatprep.subr.bf16.mxu0 %v3263
    %3410 = vmatpush1.bf16.msra.mxu0 %v3262
    %3411 = vmatprep.subr.bf16.mxu0 %v3267
    %3412 = vmatpush1.bf16.msra.mxu0 %v3266
    %3413 = vmatprep.subr.bf16.mxu0 %v3271
    %3414 = vmatpush1.bf16.msra.mxu0 %v3270
    %3415 = vmatprep.subr.bf16.mxu0 %v3275
    %3416 = vmatpush1.bf16.msra.mxu0 %v3274
    %3417 = vmatprep.subr.bf16.mxu0 %v3279
    %3418 = vmatpush1.bf16.msra.mxu0 %v3278
    %3419 = vmatprep.subr.bf16.mxu0 %v3283
    %3420 = vmatpush1.bf16.msra.mxu0 %v3282
    %3421 = vmatprep.mubr.bf16.mxu0 %v2941
    %3422 = vmatmul.mubr.bf16.gmra.mrb[0].mxu0 %v2940
    %v3423 = vpop.f32.mrb[0].mxu0
    %v3424 = vadd.f32 %v3019, %v3423
    %v3425 = vpop.f32.mrb[0].mxu0
    %v3426 = vadd.f32 %v3023, %v3425
    %v3427 = vpop.f32.mrb[0].mxu0
    %v3428 = vpop.f32.mrb[0].mxu0
    %3429 = vdwg.mxu0
    %v3430 = vmax.f32 %v3383, 0.0
    %v3431 = vmax.f32 %v3385, 0.0
    %v3432 = vmax.f32 %v3424, 0.0
    %v3433 = vmax.f32 %v3426, 0.0
    %v3434 = vpack.c.bf16 %v3430, %v3430
    %v3435 = vpack.c.bf16 %v3431, %v3431
    %v3436 = vpack.c.bf16 %v3432, %v3432
    %v3437 = vpack.c.bf16 %v3433, %v3433
    %v3438 = vld [vmem:[#allocation7] sm:$0xff]
    %v3439 = vld [vmem:[#allocation7 + $0x8] sm:$0xff]
    %v3440 = vld [vmem:[#allocation7 + $0x10] sm:$0xff]
    %v3441 = vld [vmem:[#allocation7 + $0x18] sm:$0xff]
    %v3442 = vld [vmem:[#allocation7 + $0x20] sm:$0xff]
    %v3443 = vld [vmem:[#allocation7 + $0x28] sm:$0xff]
    %v3444 = vld [vmem:[#allocation7 + $0x30] sm:$0xff]
    %v3445 = vld [vmem:[#allocation7 + $0x38] sm:$0xff]
    %v3446 = vld [vmem:[#allocation7 + $0x40] sm:$0xff]
    %v3447 = vld [vmem:[#allocation7 + $0x48] sm:$0xff]
    %v3448 = vld [vmem:[#allocation7 + $0x50] sm:$0xff]
    %v3449 = vld [vmem:[#allocation7 + $0x58] sm:$0xff]
    %v3450 = vld [vmem:[#allocation7 + $0x60] sm:$0xff]
    %v3451 = vld [vmem:[#allocation7 + $0x68] sm:$0xff]
    %v3452 = vld [vmem:[#allocation7 + $0x70] sm:$0xff]
    %v3453 = vld [vmem:[#allocation7 + $0x78] sm:$0xff]
    %v3454 = vld [vmem:[#allocation7 + $0x80] sm:$0xff]
    %v3455 = vld [vmem:[#allocation7 + $0x88] sm:$0xff]
    %v3456 = vld [vmem:[#allocation7 + $0x90] sm:$0xff]
    %v3457 = vld [vmem:[#allocation7 + $0x98] sm:$0xff]
    %v3458 = vld [vmem:[#allocation7 + $0xa0] sm:$0xff]
    %v3459 = vld [vmem:[#allocation7 + $0xa8] sm:$0xff]
    %v3460 = vld [vmem:[#allocation7 + $0xb0] sm:$0xff]
    %v3461 = vld [vmem:[#allocation7 + $0xb8] sm:$0xff]
    %v3462 = vld [vmem:[#allocation7 + $0xc0] sm:$0xff]
    %v3463 = vld [vmem:[#allocation7 + $0xc8] sm:$0xff]
    %v3464 = vld [vmem:[#allocation7 + $0xd0] sm:$0xff]
    %v3465 = vld [vmem:[#allocation7 + $0xd8] sm:$0xff]
    %v3466 = vld [vmem:[#allocation7 + $0xe0] sm:$0xff]
    %v3467 = vld [vmem:[#allocation7 + $0xe8] sm:$0xff]
    %v3468 = vld [vmem:[#allocation7 + $0xf0] sm:$0xff]
    %v3469 = vld [vmem:[#allocation7 + $0xf8] sm:$0xff]
    %v3470 = vld [vmem:[#allocation7 + $0x100] sm:$0xff]
    %v3471 = vld [vmem:[#allocation7 + $0x108] sm:$0xff]
    %v3472 = vld [vmem:[#allocation7 + $0x110] sm:$0xff]
    %v3473 = vld [vmem:[#allocation7 + $0x118] sm:$0xff]
    %v3474 = vld [vmem:[#allocation7 + $0x120] sm:$0xff]
    %v3475 = vld [vmem:[#allocation7 + $0x128] sm:$0xff]
    %v3476 = vld [vmem:[#allocation7 + $0x130] sm:$0xff]
    %v3477 = vld [vmem:[#allocation7 + $0x138] sm:$0xff]
    %v3478 = vld [vmem:[#allocation7 + $0x140] sm:$0xff]
    %v3479 = vld [vmem:[#allocation7 + $0x148] sm:$0xff]
    %v3480 = vld [vmem:[#allocation7 + $0x150] sm:$0xff]
    %v3481 = vld [vmem:[#allocation7 + $0x158] sm:$0xff]
    %v3482 = vld [vmem:[#allocation7 + $0x160] sm:$0xff]
    %v3483 = vld [vmem:[#allocation7 + $0x168] sm:$0xff]
    %v3484 = vld [vmem:[#allocation7 + $0x170] sm:$0xff]
    %v3485 = vld [vmem:[#allocation7 + $0x178] sm:$0xff]
    %v3486 = vld [vmem:[#allocation7 + $0x180] sm:$0xff]
    %v3487 = vld [vmem:[#allocation7 + $0x188] sm:$0xff]
    %v3488 = vld [vmem:[#allocation7 + $0x190] sm:$0xff]
    %v3489 = vld [vmem:[#allocation7 + $0x198] sm:$0xff]
    %v3490 = vld [vmem:[#allocation7 + $0x1a0] sm:$0xff]
    %v3491 = vld [vmem:[#allocation7 + $0x1a8] sm:$0xff]
    %v3492 = vld [vmem:[#allocation7 + $0x1b0] sm:$0xff]
    %v3493 = vld [vmem:[#allocation7 + $0x1b8] sm:$0xff]
    %v3494 = vld [vmem:[#allocation7 + $0x1c0] sm:$0xff]
    %v3495 = vld [vmem:[#allocation7 + $0x1c8] sm:$0xff]
    %v3496 = vld [vmem:[#allocation7 + $0x1d0] sm:$0xff]
    %v3497 = vld [vmem:[#allocation7 + $0x1d8] sm:$0xff]
    %v3498 = vld [vmem:[#allocation7 + $0x1e0] sm:$0xff]
    %v3499 = vld [vmem:[#allocation7 + $0x1e8] sm:$0xff]
    %v3500 = vld [vmem:[#allocation7 + $0x1f0] sm:$0xff]
    %v3501 = vld [vmem:[#allocation7 + $0x1f8] sm:$0xff]
    %v3502 = vld [vmem:[#allocation7 + $0x200] sm:$0xff]
    %v3503 = vld [vmem:[#allocation7 + $0x208] sm:$0xff]
    %v3504 = vld [vmem:[#allocation7 + $0x210] sm:$0xff]
    %v3505 = vld [vmem:[#allocation7 + $0x218] sm:$0xff]
    %v3506 = vld [vmem:[#allocation7 + $0x220] sm:$0xff]
    %v3507 = vld [vmem:[#allocation7 + $0x228] sm:$0xff]
    %v3508 = vld [vmem:[#allocation7 + $0x230] sm:$0xff]
    %v3509 = vld [vmem:[#allocation7 + $0x238] sm:$0xff]
    %v3510 = vld [vmem:[#allocation7 + $0x240] sm:$0xff]
    %v3511 = vld [vmem:[#allocation7 + $0x248] sm:$0xff]
    %v3512 = vld [vmem:[#allocation7 + $0x250] sm:$0xff]
    %v3513 = vld [vmem:[#allocation7 + $0x258] sm:$0xff]
    %v3514 = vld [vmem:[#allocation7 + $0x260] sm:$0xff]
    %v3515 = vld [vmem:[#allocation7 + $0x268] sm:$0xff]
    %v3516 = vld [vmem:[#allocation7 + $0x270] sm:$0xff]
    %v3517 = vld [vmem:[#allocation7 + $0x278] sm:$0xff]
    %v3518 = vld [vmem:[#allocation7 + $0x280] sm:$0xff]
    %v3519 = vld [vmem:[#allocation7 + $0x288] sm:$0xff]
    %v3520 = vld [vmem:[#allocation7 + $0x290] sm:$0xff]
    %v3521 = vld [vmem:[#allocation7 + $0x298] sm:$0xff]
    %v3522 = vld [vmem:[#allocation7 + $0x2a0] sm:$0xff]
    %v3523 = vld [vmem:[#allocation7 + $0x2a8] sm:$0xff]
    %v3524 = vld [vmem:[#allocation7 + $0x2b0] sm:$0xff]
    %v3525 = vld [vmem:[#allocation7 + $0x2b8] sm:$0xff]
    %v3526 = vld [vmem:[#allocation7 + $0x2c0] sm:$0xff]
    %v3527 = vld [vmem:[#allocation7 + $0x2c8] sm:$0xff]
    %v3528 = vld [vmem:[#allocation7 + $0x2d0] sm:$0xff]
    %v3529 = vld [vmem:[#allocation7 + $0x2d8] sm:$0xff]
    %v3530 = vld [vmem:[#allocation7 + $0x2e0] sm:$0xff]
    %v3531 = vld [vmem:[#allocation7 + $0x2e8] sm:$0xff]
    %v3532 = vld [vmem:[#allocation7 + $0x2f0] sm:$0xff]
    %v3533 = vld [vmem:[#allocation7 + $0x2f8] sm:$0xff]
    %v3534 = vld [vmem:[#allocation7 + $0x300] sm:$0xff]
    %v3535 = vld [vmem:[#allocation7 + $0x308] sm:$0xff]
    %v3536 = vld [vmem:[#allocation7 + $0x310] sm:$0xff]
    %v3537 = vld [vmem:[#allocation7 + $0x318] sm:$0xff]
    %v3538 = vld [vmem:[#allocation7 + $0x320] sm:$0xff]
    %v3539 = vld [vmem:[#allocation7 + $0x328] sm:$0xff]
    %v3540 = vld [vmem:[#allocation7 + $0x330] sm:$0xff]
    %v3541 = vld [vmem:[#allocation7 + $0x338] sm:$0xff]
    %v3542 = vld [vmem:[#allocation7 + $0x340] sm:$0xff]
    %v3543 = vld [vmem:[#allocation7 + $0x348] sm:$0xff]
    %v3544 = vld [vmem:[#allocation7 + $0x350] sm:$0xff]
    %v3545 = vld [vmem:[#allocation7 + $0x358] sm:$0xff]
    %v3546 = vld [vmem:[#allocation7 + $0x360] sm:$0xff]
    %v3547 = vld [vmem:[#allocation7 + $0x368] sm:$0xff]
    %v3548 = vld [vmem:[#allocation7 + $0x370] sm:$0xff]
    %v3549 = vld [vmem:[#allocation7 + $0x378] sm:$0xff]
    %v3550 = vld [vmem:[#allocation7 + $0x380] sm:$0xff]
    %v3551 = vld [vmem:[#allocation7 + $0x388] sm:$0xff]
    %v3552 = vld [vmem:[#allocation7 + $0x390] sm:$0xff]
    %v3553 = vld [vmem:[#allocation7 + $0x398] sm:$0xff]
    %v3554 = vld [vmem:[#allocation7 + $0x3a0] sm:$0xff]
    %v3555 = vld [vmem:[#allocation7 + $0x3a8] sm:$0xff]
    %v3556 = vld [vmem:[#allocation7 + $0x3b0] sm:$0xff]
    %v3557 = vld [vmem:[#allocation7 + $0x3b8] sm:$0xff]
    %v3558 = vld [vmem:[#allocation7 + $0x3c0] sm:$0xff]
    %v3559 = vld [vmem:[#allocation7 + $0x3c8] sm:$0xff]
    %v3560 = vld [vmem:[#allocation7 + $0x3d0] sm:$0xff]
    %v3561 = vld [vmem:[#allocation7 + $0x3d8] sm:$0xff]
    %v3562 = vld [vmem:[#allocation7 + $0x3e0] sm:$0xff]
    %v3563 = vld [vmem:[#allocation7 + $0x3e8] sm:$0xff]
    %v3564 = vld [vmem:[#allocation7 + $0x3f0] sm:$0xff]
    %v3565 = vld [vmem:[#allocation7 + $0x3f8] sm:$0xff]
    %v3566 = vld [vmem:[#allocation7 + $0x400] sm:$0xff]
    %v3567 = vld [vmem:[#allocation7 + $0x408] sm:$0xff]
    %v3568 = vld [vmem:[#allocation7 + $0x410] sm:$0xff]
    %v3569 = vld [vmem:[#allocation7 + $0x418] sm:$0xff]
    %v3570 = vld [vmem:[#allocation7 + $0x420] sm:$0xff]
    %v3571 = vld [vmem:[#allocation7 + $0x428] sm:$0xff]
    %v3572 = vld [vmem:[#allocation7 + $0x430] sm:$0xff]
    %v3573 = vld [vmem:[#allocation7 + $0x438] sm:$0xff]
    %v3574 = vld [vmem:[#allocation7 + $0x440] sm:$0xff]
    %v3575 = vld [vmem:[#allocation7 + $0x448] sm:$0xff]
    %v3576 = vld [vmem:[#allocation7 + $0x450] sm:$0xff]
    %v3577 = vld [vmem:[#allocation7 + $0x458] sm:$0xff]
    %v3578 = vld [vmem:[#allocation7 + $0x460] sm:$0xff]
    %v3579 = vld [vmem:[#allocation7 + $0x468] sm:$0xff]
    %v3580 = vld [vmem:[#allocation7 + $0x470] sm:$0xff]
    %v3581 = vld [vmem:[#allocation7 + $0x478] sm:$0xff]
    %v3582 = vld [vmem:[#allocation7 + $0x480] sm:$0xff]
    %v3583 = vld [vmem:[#allocation7 + $0x488] sm:$0xff]
    %v3584 = vld [vmem:[#allocation7 + $0x490] sm:$0xff]
    %v3585 = vld [vmem:[#allocation7 + $0x498] sm:$0xff]
    %v3586 = vld [vmem:[#allocation7 + $0x4a0] sm:$0xff]
    %v3587 = vld [vmem:[#allocation7 + $0x4a8] sm:$0xff]
    %v3588 = vld [vmem:[#allocation7 + $0x4b0] sm:$0xff]
    %v3589 = vld [vmem:[#allocation7 + $0x4b8] sm:$0xff]
    %v3590 = vld [vmem:[#allocation7 + $0x4c0] sm:$0xff]
    %v3591 = vld [vmem:[#allocation7 + $0x4c8] sm:$0xff]
    %v3592 = vld [vmem:[#allocation7 + $0x4d0] sm:$0xff]
    %v3593 = vld [vmem:[#allocation7 + $0x4d8] sm:$0xff]
    %v3594 = vld [vmem:[#allocation7 + $0x4e0] sm:$0xff]
    %v3595 = vld [vmem:[#allocation7 + $0x4e8] sm:$0xff]
    %v3596 = vld [vmem:[#allocation7 + $0x4f0] sm:$0xff]
    %v3597 = vld [vmem:[#allocation7 + $0x4f8] sm:$0xff]
    %v3598 = vld [vmem:[#allocation7 + $0x500] sm:$0xff]
    %v3599 = vld [vmem:[#allocation7 + $0x508] sm:$0xff]
    %v3600 = vld [vmem:[#allocation7 + $0x510] sm:$0xff]
    %v3601 = vld [vmem:[#allocation7 + $0x518] sm:$0xff]
    %v3602 = vld [vmem:[#allocation7 + $0x520] sm:$0xff]
    %v3603 = vld [vmem:[#allocation7 + $0x528] sm:$0xff]
    %v3604 = vld [vmem:[#allocation7 + $0x530] sm:$0xff]
    %v3605 = vld [vmem:[#allocation7 + $0x538] sm:$0xff]
    %v3606 = vld [vmem:[#allocation7 + $0x540] sm:$0xff]
    %v3607 = vld [vmem:[#allocation7 + $0x548] sm:$0xff]
    %v3608 = vld [vmem:[#allocation7 + $0x550] sm:$0xff]
    %v3609 = vld [vmem:[#allocation7 + $0x558] sm:$0xff]
    %v3610 = vld [vmem:[#allocation7 + $0x560] sm:$0xff]
    %v3611 = vld [vmem:[#allocation7 + $0x568] sm:$0xff]
    %v3612 = vld [vmem:[#allocation7 + $0x570] sm:$0xff]
    %v3613 = vld [vmem:[#allocation7 + $0x578] sm:$0xff]
    %v3614 = vld [vmem:[#allocation7 + $0x580] sm:$0xff]
    %v3615 = vld [vmem:[#allocation7 + $0x588] sm:$0xff]
    %v3616 = vld [vmem:[#allocation7 + $0x590] sm:$0xff]
    %v3617 = vld [vmem:[#allocation7 + $0x598] sm:$0xff]
    %v3618 = vld [vmem:[#allocation7 + $0x5a0] sm:$0xff]
    %v3619 = vld [vmem:[#allocation7 + $0x5a8] sm:$0xff]
    %v3620 = vld [vmem:[#allocation7 + $0x5b0] sm:$0xff]
    %v3621 = vld [vmem:[#allocation7 + $0x5b8] sm:$0xff]
    %v3622 = vld [vmem:[#allocation7 + $0x5c0] sm:$0xff]
    %v3623 = vld [vmem:[#allocation7 + $0x5c8] sm:$0xff]
    %v3624 = vld [vmem:[#allocation7 + $0x5d0] sm:$0xff]
    %v3625 = vld [vmem:[#allocation7 + $0x5d8] sm:$0xff]
    %v3626 = vld [vmem:[#allocation7 + $0x5e0] sm:$0xff]
    %v3627 = vld [vmem:[#allocation7 + $0x5e8] sm:$0xff]
    %v3628 = vld [vmem:[#allocation7 + $0x5f0] sm:$0xff]
    %v3629 = vld [vmem:[#allocation7 + $0x5f8] sm:$0xff]
    %v3630 = vld [vmem:[%s19] sm:$0x3f]
    %v3632 = vlaneseq
    %v3633 = vshrl.u32 %v3632, 7
    %v3634 = vsub.s32 0, %v3633
    %v3635 = vrot.slane %v3630, %v3634
    %v3636 = vlaneseq
    %v3637 = vshrl.u32 %v3636, 7
    %v3638 = vsub.s32 1, %v3637
    %v3639 = vrot.slane %v3630, %v3638
    %v3640 = vlaneseq
    %v3641 = vshrl.u32 %v3640, 7
    %v3642 = vsub.s32 2, %v3641
    %v3643 = vrot.slane %v3630, %v3642
    %v3644 = vlaneseq
    %v3645 = vshrl.u32 %v3644, 7
    %v3646 = vsub.s32 3, %v3645
    %v3647 = vrot.slane %v3630, %v3646
    %v3648 = vlaneseq
    %v3649 = vshrl.u32 %v3648, 7
    %v3650 = vsub.s32 4, %v3649
    %v3651 = vrot.slane %v3630, %v3650
    %v3652 = vlaneseq
    %v3653 = vshrl.u32 %v3652, 7
    %v3654 = vsub.s32 5, %v3653
    %v3655 = vrot.slane %v3630, %v3654
    %v3854 = vunpack.c.l.b16 %v3438
    %v3855 = vunpack.c.h.b16 %v3438
    %v3856 = vunpack.c.l.b16 %v3439
    %v3857 = vunpack.c.h.b16 %v3439
    %v3858 = vunpack.c.l.b16 %v3440
    %v3859 = vunpack.c.h.b16 %v3440
    %v3860 = vunpack.c.l.b16 %v3441
    %v3861 = vunpack.c.h.b16 %v3441
    %v3862 = vunpack.c.l.b16 %v3442
    %v3863 = vunpack.c.h.b16 %v3442
    %v3864 = vunpack.c.l.b16 %v3443
    %v3865 = vunpack.c.h.b16 %v3443
    %v3866 = vunpack.c.l.b16 %v3444
    %v3867 = vunpack.c.h.b16 %v3444
    %v3868 = vunpack.c.l.b16 %v3445
    %v3869 = vunpack.c.h.b16 %v3445
    %v3870 = vunpack.c.l.b16 %v3446
    %v3871 = vunpack.c.h.b16 %v3446
    %v3872 = vunpack.c.l.b16 %v3447
    %v3873 = vunpack.c.h.b16 %v3447
    %v3874 = vunpack.c.l.b16 %v3448
    %v3875 = vunpack.c.h.b16 %v3448
    %v3876 = vunpack.c.l.b16 %v3449
    %v3877 = vunpack.c.h.b16 %v3449
    %v3878 = vunpack.c.l.b16 %v3450
    %v3879 = vunpack.c.h.b16 %v3450
    %v3880 = vunpack.c.l.b16 %v3451
    %v3881 = vunpack.c.h.b16 %v3451
    %v3882 = vunpack.c.l.b16 %v3452
    %v3883 = vunpack.c.h.b16 %v3452
    %v3884 = vunpack.c.l.b16 %v3453
    %v3885 = vunpack.c.h.b16 %v3453
    %v3886 = vunpack.c.l.b16 %v3454
    %v3887 = vunpack.c.h.b16 %v3454
    %v3888 = vunpack.c.l.b16 %v3455
    %v3889 = vunpack.c.h.b16 %v3455
    %v3890 = vunpack.c.l.b16 %v3456
    %v3891 = vunpack.c.h.b16 %v3456
    %v3892 = vunpack.c.l.b16 %v3457
    %v3893 = vunpack.c.h.b16 %v3457
    %v3894 = vunpack.c.l.b16 %v3458
    %v3895 = vunpack.c.h.b16 %v3458
    %v3896 = vunpack.c.l.b16 %v3459
    %v3897 = vunpack.c.h.b16 %v3459
    %v3898 = vunpack.c.l.b16 %v3460
    %v3899 = vunpack.c.h.b16 %v3460
    %v3900 = vunpack.c.l.b16 %v3461
    %v3901 = vunpack.c.h.b16 %v3461
    %v3902 = vunpack.c.l.b16 %v3462
    %v3903 = vunpack.c.h.b16 %v3462
    %v3904 = vunpack.c.l.b16 %v3463
    %v3905 = vunpack.c.h.b16 %v3463
    %v3906 = vunpack.c.l.b16 %v3464
    %v3907 = vunpack.c.h.b16 %v3464
    %v3908 = vunpack.c.l.b16 %v3465
    %v3909 = vunpack.c.h.b16 %v3465
    %v3910 = vunpack.c.l.b16 %v3466
    %v3911 = vunpack.c.h.b16 %v3466
    %v3912 = vunpack.c.l.b16 %v3467
    %v3913 = vunpack.c.h.b16 %v3467
    %v3914 = vunpack.c.l.b16 %v3468
    %v3915 = vunpack.c.h.b16 %v3468
    %v3916 = vunpack.c.l.b16 %v3469
    %v3917 = vunpack.c.h.b16 %v3469
    %v3918 = vunpack.c.l.b16 %v3470
    %v3919 = vunpack.c.h.b16 %v3470
    %v3920 = vunpack.c.l.b16 %v3471
    %v3921 = vunpack.c.h.b16 %v3471
    %v3922 = vunpack.c.l.b16 %v3472
    %v3923 = vunpack.c.h.b16 %v3472
    %v3924 = vunpack.c.l.b16 %v3473
    %v3925 = vunpack.c.h.b16 %v3473
    %v3926 = vunpack.c.l.b16 %v3474
    %v3927 = vunpack.c.h.b16 %v3474
    %v3928 = vunpack.c.l.b16 %v3475
    %v3929 = vunpack.c.h.b16 %v3475
    %v3930 = vunpack.c.l.b16 %v3476
    %v3931 = vunpack.c.h.b16 %v3476
    %v3932 = vunpack.c.l.b16 %v3477
    %v3933 = vunpack.c.h.b16 %v3477
    %v3934 = vunpack.c.l.b16 %v3478
    %v3935 = vunpack.c.h.b16 %v3478
    %v3936 = vunpack.c.l.b16 %v3479
    %v3937 = vunpack.c.h.b16 %v3479
    %v3938 = vunpack.c.l.b16 %v3480
    %v3939 = vunpack.c.h.b16 %v3480
    %v3940 = vunpack.c.l.b16 %v3481
    %v3941 = vunpack.c.h.b16 %v3481
    %v3942 = vunpack.c.l.b16 %v3482
    %v3943 = vunpack.c.h.b16 %v3482
    %v3944 = vunpack.c.l.b16 %v3483
    %v3945 = vunpack.c.h.b16 %v3483
    %v3946 = vunpack.c.l.b16 %v3484
    %v3947 = vunpack.c.h.b16 %v3484
    %v3948 = vunpack.c.l.b16 %v3485
    %v3949 = vunpack.c.h.b16 %v3485
    %v3950 = vunpack.c.l.b16 %v3486
    %v3951 = vunpack.c.h.b16 %v3486
    %v3952 = vunpack.c.l.b16 %v3487
    %v3953 = vunpack.c.h.b16 %v3487
    %v3954 = vunpack.c.l.b16 %v3488
    %v3955 = vunpack.c.h.b16 %v3488
    %v3956 = vunpack.c.l.b16 %v3489
    %v3957 = vunpack.c.h.b16 %v3489
    %v3958 = vunpack.c.l.b16 %v3490
    %v3959 = vunpack.c.h.b16 %v3490
    %v3960 = vunpack.c.l.b16 %v3491
    %v3961 = vunpack.c.h.b16 %v3491
    %v3962 = vunpack.c.l.b16 %v3492
    %v3963 = vunpack.c.h.b16 %v3492
    %v3964 = vunpack.c.l.b16 %v3493
    %v3965 = vunpack.c.h.b16 %v3493
    %v3966 = vunpack.c.l.b16 %v3494
    %v3967 = vunpack.c.h.b16 %v3494
    %v3968 = vunpack.c.l.b16 %v3495
    %v3969 = vunpack.c.h.b16 %v3495
    %v3970 = vunpack.c.l.b16 %v3496
    %v3971 = vunpack.c.h.b16 %v3496
    %v3972 = vunpack.c.l.b16 %v3497
    %v3973 = vunpack.c.h.b16 %v3497
    %v3974 = vunpack.c.l.b16 %v3498
    %v3975 = vunpack.c.h.b16 %v3498
    %v3976 = vunpack.c.l.b16 %v3499
    %v3977 = vunpack.c.h.b16 %v3499
    %v3978 = vunpack.c.l.b16 %v3500
    %v3979 = vunpack.c.h.b16 %v3500
    %v3980 = vunpack.c.l.b16 %v3501
    %v3981 = vunpack.c.h.b16 %v3501
    %v3982 = vunpack.c.l.b16 %v3502
    %v3983 = vunpack.c.h.b16 %v3502
    %v3984 = vunpack.c.l.b16 %v3503
    %v3985 = vunpack.c.h.b16 %v3503
    %v3986 = vunpack.c.l.b16 %v3504
    %v3987 = vunpack.c.h.b16 %v3504
    %v3988 = vunpack.c.l.b16 %v3505
    %v3989 = vunpack.c.h.b16 %v3505
    %v3990 = vunpack.c.l.b16 %v3506
    %v3991 = vunpack.c.h.b16 %v3506
    %v3992 = vunpack.c.l.b16 %v3507
    %v3993 = vunpack.c.h.b16 %v3507
    %v3994 = vunpack.c.l.b16 %v3508
    %v3995 = vunpack.c.h.b16 %v3508
    %v3996 = vunpack.c.l.b16 %v3509
    %v3997 = vunpack.c.h.b16 %v3509
    %v3998 = vunpack.c.l.b16 %v3510
    %v3999 = vunpack.c.h.b16 %v3510
    %v4000 = vunpack.c.l.b16 %v3511
    %v4001 = vunpack.c.h.b16 %v3511
    %v4002 = vunpack.c.l.b16 %v3512
    %v4003 = vunpack.c.h.b16 %v3512
    %v4004 = vunpack.c.l.b16 %v3513
    %v4005 = vunpack.c.h.b16 %v3513
    %v4006 = vunpack.c.l.b16 %v3514
    %v4007 = vunpack.c.h.b16 %v3514
    %v4008 = vunpack.c.l.b16 %v3515
    %v4009 = vunpack.c.h.b16 %v3515
    %v4010 = vunpack.c.l.b16 %v3516
    %v4011 = vunpack.c.h.b16 %v3516
    %v4012 = vunpack.c.l.b16 %v3517
    %v4013 = vunpack.c.h.b16 %v3517
    %v4014 = vunpack.c.l.b16 %v3518
    %v4015 = vunpack.c.h.b16 %v3518
    %v4016 = vunpack.c.l.b16 %v3519
    %v4017 = vunpack.c.h.b16 %v3519
    %v4018 = vunpack.c.l.b16 %v3520
    %v4019 = vunpack.c.h.b16 %v3520
    %v4020 = vunpack.c.l.b16 %v3521
    %v4021 = vunpack.c.h.b16 %v3521
    %v4022 = vunpack.c.l.b16 %v3522
    %v4023 = vunpack.c.h.b16 %v3522
    %v4024 = vunpack.c.l.b16 %v3523
    %v4025 = vunpack.c.h.b16 %v3523
    %v4026 = vunpack.c.l.b16 %v3524
    %v4027 = vunpack.c.h.b16 %v3524
    %v4028 = vunpack.c.l.b16 %v3525
    %v4029 = vunpack.c.h.b16 %v3525
    %v4030 = vunpack.c.l.b16 %v3526
    %v4031 = vunpack.c.h.b16 %v3526
    %v4032 = vunpack.c.l.b16 %v3527
    %v4033 = vunpack.c.h.b16 %v3527
    %v4034 = vunpack.c.l.b16 %v3528
    %v4035 = vunpack.c.h.b16 %v3528
    %v4036 = vunpack.c.l.b16 %v3529
    %v4037 = vunpack.c.h.b16 %v3529
    %v4038 = vunpack.c.l.b16 %v3530
    %v4039 = vunpack.c.h.b16 %v3530
    %v4040 = vunpack.c.l.b16 %v3531
    %v4041 = vunpack.c.h.b16 %v3531
    %v4042 = vunpack.c.l.b16 %v3532
    %v4043 = vunpack.c.h.b16 %v3532
    %v4044 = vunpack.c.l.b16 %v3533
    %v4045 = vunpack.c.h.b16 %v3533
    %v4046 = vunpack.c.l.b16 %v3534
    %v4047 = vunpack.c.h.b16 %v3534
    %v4048 = vunpack.c.l.b16 %v3535
    %v4049 = vunpack.c.h.b16 %v3535
    %v4050 = vunpack.c.l.b16 %v3536
    %v4051 = vunpack.c.h.b16 %v3536
    %v4052 = vunpack.c.l.b16 %v3537
    %v4053 = vunpack.c.h.b16 %v3537
    %v4054 = vunpack.c.l.b16 %v3538
    %v4055 = vunpack.c.h.b16 %v3538
    %v4056 = vunpack.c.l.b16 %v3539
    %v4057 = vunpack.c.h.b16 %v3539
    %v4058 = vunpack.c.l.b16 %v3540
    %v4059 = vunpack.c.h.b16 %v3540
    %v4060 = vunpack.c.l.b16 %v3541
    %v4061 = vunpack.c.h.b16 %v3541
    %v4062 = vunpack.c.l.b16 %v3542
    %v4063 = vunpack.c.h.b16 %v3542
    %v4064 = vunpack.c.l.b16 %v3543
    %v4065 = vunpack.c.h.b16 %v3543
    %v4066 = vunpack.c.l.b16 %v3544
    %v4067 = vunpack.c.h.b16 %v3544
    %v4068 = vunpack.c.l.b16 %v3545
    %v4069 = vunpack.c.h.b16 %v3545
    %v4070 = vunpack.c.l.b16 %v3546
    %v4071 = vunpack.c.h.b16 %v3546
    %v4072 = vunpack.c.l.b16 %v3547
    %v4073 = vunpack.c.h.b16 %v3547
    %v4074 = vunpack.c.l.b16 %v3548
    %v4075 = vunpack.c.h.b16 %v3548
    %v4076 = vunpack.c.l.b16 %v3549
    %v4077 = vunpack.c.h.b16 %v3549
    %v4078 = vunpack.c.l.b16 %v3550
    %v4079 = vunpack.c.h.b16 %v3550
    %v4080 = vunpack.c.l.b16 %v3551
    %v4081 = vunpack.c.h.b16 %v3551
    %v4082 = vunpack.c.l.b16 %v3552
    %v4083 = vunpack.c.h.b16 %v3552
    %v4084 = vunpack.c.l.b16 %v3553
    %v4085 = vunpack.c.h.b16 %v3553
    %v4086 = vunpack.c.l.b16 %v3554
    %v4087 = vunpack.c.h.b16 %v3554
    %v4088 = vunpack.c.l.b16 %v3555
    %v4089 = vunpack.c.h.b16 %v3555
    %v4090 = vunpack.c.l.b16 %v3556
    %v4091 = vunpack.c.h.b16 %v3556
    %v4092 = vunpack.c.l.b16 %v3557
    %v4093 = vunpack.c.h.b16 %v3557
    %v4094 = vunpack.c.l.b16 %v3558
    %v4095 = vunpack.c.h.b16 %v3558
    %v4096 = vunpack.c.l.b16 %v3559
    %v4097 = vunpack.c.h.b16 %v3559
    %v4098 = vunpack.c.l.b16 %v3560
    %v4099 = vunpack.c.h.b16 %v3560
    %v4100 = vunpack.c.l.b16 %v3561
    %v4101 = vunpack.c.h.b16 %v3561
    %v4102 = vunpack.c.l.b16 %v3562
    %v4103 = vunpack.c.h.b16 %v3562
    %v4104 = vunpack.c.l.b16 %v3563
    %v4105 = vunpack.c.h.b16 %v3563
    %v4106 = vunpack.c.l.b16 %v3564
    %v4107 = vunpack.c.h.b16 %v3564
    %v4108 = vunpack.c.l.b16 %v3565
    %v4109 = vunpack.c.h.b16 %v3565
    %v4110 = vunpack.c.l.b16 %v3566
    %v4111 = vunpack.c.h.b16 %v3566
    %v4112 = vunpack.c.l.b16 %v3567
    %v4113 = vunpack.c.h.b16 %v3567
    %v4114 = vunpack.c.l.b16 %v3568
    %v4115 = vunpack.c.h.b16 %v3568
    %v4116 = vunpack.c.l.b16 %v3569
    %v4117 = vunpack.c.h.b16 %v3569
    %v4118 = vunpack.c.l.b16 %v3570
    %v4119 = vunpack.c.h.b16 %v3570
    %v4120 = vunpack.c.l.b16 %v3571
    %v4121 = vunpack.c.h.b16 %v3571
    %v4122 = vunpack.c.l.b16 %v3572
    %v4123 = vunpack.c.h.b16 %v3572
    %v4124 = vunpack.c.l.b16 %v3573
    %v4125 = vunpack.c.h.b16 %v3573
    %v4126 = vunpack.c.l.b16 %v3574
    %v4127 = vunpack.c.h.b16 %v3574
    %v4128 = vunpack.c.l.b16 %v3575
    %v4129 = vunpack.c.h.b16 %v3575
    %v4130 = vunpack.c.l.b16 %v3576
    %v4131 = vunpack.c.h.b16 %v3576
    %v4132 = vunpack.c.l.b16 %v3577
    %v4133 = vunpack.c.h.b16 %v3577
    %v4134 = vunpack.c.l.b16 %v3578
    %v4135 = vunpack.c.h.b16 %v3578
    %v4136 = vunpack.c.l.b16 %v3579
    %v4137 = vunpack.c.h.b16 %v3579
    %v4138 = vunpack.c.l.b16 %v3580
    %v4139 = vunpack.c.h.b16 %v3580
    %v4140 = vunpack.c.l.b16 %v3581
    %v4141 = vunpack.c.h.b16 %v3581
    %v4142 = vunpack.c.l.b16 %v3582
    %v4143 = vunpack.c.h.b16 %v3582
    %v4144 = vunpack.c.l.b16 %v3583
    %v4145 = vunpack.c.h.b16 %v3583
    %v4146 = vunpack.c.l.b16 %v3584
    %v4147 = vunpack.c.h.b16 %v3584
    %v4148 = vunpack.c.l.b16 %v3585
    %v4149 = vunpack.c.h.b16 %v3585
    %v4150 = vunpack.c.l.b16 %v3586
    %v4151 = vunpack.c.h.b16 %v3586
    %v4152 = vunpack.c.l.b16 %v3587
    %v4153 = vunpack.c.h.b16 %v3587
    %v4154 = vunpack.c.l.b16 %v3588
    %v4155 = vunpack.c.h.b16 %v3588
    %v4156 = vunpack.c.l.b16 %v3589
    %v4157 = vunpack.c.h.b16 %v3589
    %v4158 = vunpack.c.l.b16 %v3590
    %v4159 = vunpack.c.h.b16 %v3590
    %v4160 = vunpack.c.l.b16 %v3591
    %v4161 = vunpack.c.h.b16 %v3591
    %v4162 = vunpack.c.l.b16 %v3592
    %v4163 = vunpack.c.h.b16 %v3592
    %v4164 = vunpack.c.l.b16 %v3593
    %v4165 = vunpack.c.h.b16 %v3593
    %v4166 = vunpack.c.l.b16 %v3594
    %v4167 = vunpack.c.h.b16 %v3594
    %v4168 = vunpack.c.l.b16 %v3595
    %v4169 = vunpack.c.h.b16 %v3595
    %v4170 = vunpack.c.l.b16 %v3596
    %v4171 = vunpack.c.h.b16 %v3596
    %v4172 = vunpack.c.l.b16 %v3597
    %v4173 = vunpack.c.h.b16 %v3597
    %v4174 = vunpack.c.l.b16 %v3598
    %v4175 = vunpack.c.h.b16 %v3598
    %v4176 = vunpack.c.l.b16 %v3599
    %v4177 = vunpack.c.h.b16 %v3599
    %v4178 = vunpack.c.l.b16 %v3600
    %v4179 = vunpack.c.h.b16 %v3600
    %v4180 = vunpack.c.l.b16 %v3601
    %v4181 = vunpack.c.h.b16 %v3601
    %v4182 = vunpack.c.l.b16 %v3602
    %v4183 = vunpack.c.h.b16 %v3602
    %v4184 = vunpack.c.l.b16 %v3603
    %v4185 = vunpack.c.h.b16 %v3603
    %v4186 = vunpack.c.l.b16 %v3604
    %v4187 = vunpack.c.h.b16 %v3604
    %v4188 = vunpack.c.l.b16 %v3605
    %v4189 = vunpack.c.h.b16 %v3605
    %v4190 = vunpack.c.l.b16 %v3606
    %v4191 = vunpack.c.h.b16 %v3606
    %v4192 = vunpack.c.l.b16 %v3607
    %v4193 = vunpack.c.h.b16 %v3607
    %v4194 = vunpack.c.l.b16 %v3608
    %v4195 = vunpack.c.h.b16 %v3608
    %v4196 = vunpack.c.l.b16 %v3609
    %v4197 = vunpack.c.h.b16 %v3609
    %v4198 = vunpack.c.l.b16 %v3610
    %v4199 = vunpack.c.h.b16 %v3610
    %v4200 = vunpack.c.l.b16 %v3611
    %v4201 = vunpack.c.h.b16 %v3611
    %v4202 = vunpack.c.l.b16 %v3612
    %v4203 = vunpack.c.h.b16 %v3612
    %v4204 = vunpack.c.l.b16 %v3613
    %v4205 = vunpack.c.h.b16 %v3613
    %v4206 = vunpack.c.l.b16 %v3614
    %v4207 = vunpack.c.h.b16 %v3614
    %v4208 = vunpack.c.l.b16 %v3615
    %v4209 = vunpack.c.h.b16 %v3615
    %v4210 = vunpack.c.l.b16 %v3616
    %v4211 = vunpack.c.h.b16 %v3616
    %v4212 = vunpack.c.l.b16 %v3617
    %v4213 = vunpack.c.h.b16 %v3617
    %v4214 = vunpack.c.l.b16 %v3618
    %v4215 = vunpack.c.h.b16 %v3618
    %v4216 = vunpack.c.l.b16 %v3619
    %v4217 = vunpack.c.h.b16 %v3619
    %v4218 = vunpack.c.l.b16 %v3620
    %v4219 = vunpack.c.h.b16 %v3620
    %v4220 = vunpack.c.l.b16 %v3621
    %v4221 = vunpack.c.h.b16 %v3621
    %v4222 = vunpack.c.l.b16 %v3622
    %v4223 = vunpack.c.h.b16 %v3622
    %v4224 = vunpack.c.l.b16 %v3623
    %v4225 = vunpack.c.h.b16 %v3623
    %v4226 = vunpack.c.l.b16 %v3624
    %v4227 = vunpack.c.h.b16 %v3624
    %v4228 = vunpack.c.l.b16 %v3625
    %v4229 = vunpack.c.h.b16 %v3625
    %v4230 = vunpack.c.l.b16 %v3626
    %v4231 = vunpack.c.h.b16 %v3626
    %v4232 = vunpack.c.l.b16 %v3627
    %v4233 = vunpack.c.h.b16 %v3627
    %v4234 = vunpack.c.l.b16 %v3628
    %v4235 = vunpack.c.h.b16 %v3628
    %v4236 = vunpack.c.l.b16 %v3629
    %v4237 = vunpack.c.h.b16 %v3629
    %v4238 = vpack.c.b16 %v3860, %v3854
    %v4239 = vpack.c.b16 %v3861, %v3855
    %v4240 = vpack.c.b16 %v3862, %v3856
    %v4241 = vpack.c.b16 %v3863, %v3857
    %v4242 = vpack.c.b16 %v3864, %v3858
    %v4243 = vpack.c.b16 %v3865, %v3859
    %v4244 = vpack.c.b16 %v3872, %v3866
    %v4245 = vpack.c.b16 %v3873, %v3867
    %v4246 = vpack.c.b16 %v3874, %v3868
    %v4247 = vpack.c.b16 %v3875, %v3869
    %v4248 = vpack.c.b16 %v3876, %v3870
    %v4249 = vpack.c.b16 %v3877, %v3871
    %v4250 = vpack.c.b16 %v3884, %v3878
    %v4251 = vpack.c.b16 %v3885, %v3879
    %v4252 = vpack.c.b16 %v3886, %v3880
    %v4253 = vpack.c.b16 %v3887, %v3881
    %v4254 = vpack.c.b16 %v3888, %v3882
    %v4255 = vpack.c.b16 %v3889, %v3883
    %v4256 = vpack.c.b16 %v3896, %v3890
    %v4257 = vpack.c.b16 %v3897, %v3891
    %v4258 = vpack.c.b16 %v3898, %v3892
    %v4259 = vpack.c.b16 %v3899, %v3893
    %v4260 = vpack.c.b16 %v3900, %v3894
    %v4261 = vpack.c.b16 %v3901, %v3895
    %v4262 = vpack.c.b16 %v3908, %v3902
    %v4263 = vpack.c.b16 %v3909, %v3903
    %v4264 = vpack.c.b16 %v3910, %v3904
    %v4265 = vpack.c.b16 %v3911, %v3905
    %v4266 = vpack.c.b16 %v3912, %v3906
    %v4267 = vpack.c.b16 %v3913, %v3907
    %v4268 = vpack.c.b16 %v3920, %v3914
    %v4269 = vpack.c.b16 %v3921, %v3915
    %v4270 = vpack.c.b16 %v3922, %v3916
    %v4271 = vpack.c.b16 %v3923, %v3917
    %v4272 = vpack.c.b16 %v3924, %v3918
    %v4273 = vpack.c.b16 %v3925, %v3919
    %v4274 = vpack.c.b16 %v3932, %v3926
    %v4275 = vpack.c.b16 %v3933, %v3927
    %v4276 = vpack.c.b16 %v3934, %v3928
    %v4277 = vpack.c.b16 %v3935, %v3929
    %v4278 = vpack.c.b16 %v3936, %v3930
    %v4279 = vpack.c.b16 %v3937, %v3931
    %v4280 = vpack.c.b16 %v3944, %v3938
    %v4281 = vpack.c.b16 %v3945, %v3939
    %v4282 = vpack.c.b16 %v3946, %v3940
    %v4283 = vpack.c.b16 %v3947, %v3941
    %v4284 = vpack.c.b16 %v3948, %v3942
    %v4285 = vpack.c.b16 %v3949, %v3943
    %v4286 = vpack.c.b16 %v3956, %v3950
    %v4287 = vpack.c.b16 %v3957, %v3951
    %v4288 = vpack.c.b16 %v3958, %v3952
    %v4289 = vpack.c.b16 %v3959, %v3953
    %v4290 = vpack.c.b16 %v3960, %v3954
    %v4291 = vpack.c.b16 %v3961, %v3955
    %v4292 = vpack.c.b16 %v3968, %v3962
    %v4293 = vpack.c.b16 %v3969, %v3963
    %v4294 = vpack.c.b16 %v3970, %v3964
    %v4295 = vpack.c.b16 %v3971, %v3965
    %v4296 = vpack.c.b16 %v3972, %v3966
    %v4297 = vpack.c.b16 %v3973, %v3967
    %v4298 = vpack.c.b16 %v3980, %v3974
    %v4299 = vpack.c.b16 %v3981, %v3975
    %v4300 = vpack.c.b16 %v3982, %v3976
    %v4301 = vpack.c.b16 %v3983, %v3977
    %v4302 = vpack.c.b16 %v3984, %v3978
    %v4303 = vpack.c.b16 %v3985, %v3979
    %v4304 = vpack.c.b16 %v3992, %v3986
    %v4305 = vpack.c.b16 %v3993, %v3987
    %v4306 = vpack.c.b16 %v3994, %v3988
    %v4307 = vpack.c.b16 %v3995, %v3989
    %v4308 = vpack.c.b16 %v3996, %v3990
    %v4309 = vpack.c.b16 %v3997, %v3991
    %v4310 = vpack.c.b16 %v4004, %v3998
    %v4311 = vpack.c.b16 %v4005, %v3999
    %v4312 = vpack.c.b16 %v4006, %v4000
    %v4313 = vpack.c.b16 %v4007, %v4001
    %v4314 = vpack.c.b16 %v4008, %v4002
    %v4315 = vpack.c.b16 %v4009, %v4003
    %v4316 = vpack.c.b16 %v4016, %v4010
    %v4317 = vpack.c.b16 %v4017, %v4011
    %v4318 = vpack.c.b16 %v4018, %v4012
    %v4319 = vpack.c.b16 %v4019, %v4013
    %v4320 = vpack.c.b16 %v4020, %v4014
    %v4321 = vpack.c.b16 %v4021, %v4015
    %v4322 = vpack.c.b16 %v4028, %v4022
    %v4323 = vpack.c.b16 %v4029, %v4023
    %v4324 = vpack.c.b16 %v4030, %v4024
    %v4325 = vpack.c.b16 %v4031, %v4025
    %v4326 = vpack.c.b16 %v4032, %v4026
    %v4327 = vpack.c.b16 %v4033, %v4027
    %v4328 = vpack.c.b16 %v4040, %v4034
    %v4329 = vpack.c.b16 %v4041, %v4035
    %v4330 = vpack.c.b16 %v4042, %v4036
    %v4331 = vpack.c.b16 %v4043, %v4037
    %v4332 = vpack.c.b16 %v4044, %v4038
    %v4333 = vpack.c.b16 %v4045, %v4039
    %v4334 = vpack.c.b16 %v4052, %v4046
    %v4335 = vpack.c.b16 %v4053, %v4047
    %v4336 = vpack.c.b16 %v4054, %v4048
    %v4337 = vpack.c.b16 %v4055, %v4049
    %v4338 = vpack.c.b16 %v4056, %v4050
    %v4339 = vpack.c.b16 %v4057, %v4051
    %v4340 = vpack.c.b16 %v4064, %v4058
    %v4341 = vpack.c.b16 %v4065, %v4059
    %v4342 = vpack.c.b16 %v4066, %v4060
    %v4343 = vpack.c.b16 %v4067, %v4061
    %v4344 = vpack.c.b16 %v4068, %v4062
    %v4345 = vpack.c.b16 %v4069, %v4063
    %v4346 = vpack.c.b16 %v4076, %v4070
    %v4347 = vpack.c.b16 %v4077, %v4071
    %v4348 = vpack.c.b16 %v4078, %v4072
    %v4349 = vpack.c.b16 %v4079, %v4073
    %v4350 = vpack.c.b16 %v4080, %v4074
    %v4351 = vpack.c.b16 %v4081, %v4075
    %v4352 = vpack.c.b16 %v4088, %v4082
    %v4353 = vpack.c.b16 %v4089, %v4083
    %v4354 = vpack.c.b16 %v4090, %v4084
    %v4355 = vpack.c.b16 %v4091, %v4085
    %v4356 = vpack.c.b16 %v4092, %v4086
    %v4357 = vpack.c.b16 %v4093, %v4087
    %v4358 = vpack.c.b16 %v4100, %v4094
    %v4359 = vpack.c.b16 %v4101, %v4095
    %v4360 = vpack.c.b16 %v4102, %v4096
    %v4361 = vpack.c.b16 %v4103, %v4097
    %v4362 = vpack.c.b16 %v4104, %v4098
    %v4363 = vpack.c.b16 %v4105, %v4099
    %v4364 = vpack.c.b16 %v4112, %v4106
    %v4365 = vpack.c.b16 %v4113, %v4107
    %v4366 = vpack.c.b16 %v4114, %v4108
    %v4367 = vpack.c.b16 %v4115, %v4109
    %v4368 = vpack.c.b16 %v4116, %v4110
    %v4369 = vpack.c.b16 %v4117, %v4111
    %v4370 = vpack.c.b16 %v4124, %v4118
    %v4371 = vpack.c.b16 %v4125, %v4119
    %v4372 = vpack.c.b16 %v4126, %v4120
    %v4373 = vpack.c.b16 %v4127, %v4121
    %v4374 = vpack.c.b16 %v4128, %v4122
    %v4375 = vpack.c.b16 %v4129, %v4123
    %v4376 = vpack.c.b16 %v4136, %v4130
    %v4377 = vpack.c.b16 %v4137, %v4131
    %v4378 = vpack.c.b16 %v4138, %v4132
    %v4379 = vpack.c.b16 %v4139, %v4133
    %v4380 = vpack.c.b16 %v4140, %v4134
    %v4381 = vpack.c.b16 %v4141, %v4135
    %v4382 = vpack.c.b16 %v4148, %v4142
    %v4383 = vpack.c.b16 %v4149, %v4143
    %v4384 = vpack.c.b16 %v4150, %v4144
    %v4385 = vpack.c.b16 %v4151, %v4145
    %v4386 = vpack.c.b16 %v4152, %v4146
    %v4387 = vpack.c.b16 %v4153, %v4147
    %v4388 = vpack.c.b16 %v4160, %v4154
    %v4389 = vpack.c.b16 %v4161, %v4155
    %v4390 = vpack.c.b16 %v4162, %v4156
    %v4391 = vpack.c.b16 %v4163, %v4157
    %v4392 = vpack.c.b16 %v4164, %v4158
    %v4393 = vpack.c.b16 %v4165, %v4159
    %v4394 = vpack.c.b16 %v4172, %v4166
    %v4395 = vpack.c.b16 %v4173, %v4167
    %v4396 = vpack.c.b16 %v4174, %v4168
    %v4397 = vpack.c.b16 %v4175, %v4169
    %v4398 = vpack.c.b16 %v4176, %v4170
    %v4399 = vpack.c.b16 %v4177, %v4171
    %v4400 = vpack.c.b16 %v4184, %v4178
    %v4401 = vpack.c.b16 %v4185, %v4179
    %v4402 = vpack.c.b16 %v4186, %v4180
    %v4403 = vpack.c.b16 %v4187, %v4181
    %v4404 = vpack.c.b16 %v4188, %v4182
    %v4405 = vpack.c.b16 %v4189, %v4183
    %v4406 = vpack.c.b16 %v4196, %v4190
    %v4407 = vpack.c.b16 %v4197, %v4191
    %v4408 = vpack.c.b16 %v4198, %v4192
    %v4409 = vpack.c.b16 %v4199, %v4193
    %v4410 = vpack.c.b16 %v4200, %v4194
    %v4411 = vpack.c.b16 %v4201, %v4195
    %v4412 = vpack.c.b16 %v4208, %v4202
    %v4413 = vpack.c.b16 %v4209, %v4203
    %v4414 = vpack.c.b16 %v4210, %v4204
    %v4415 = vpack.c.b16 %v4211, %v4205
    %v4416 = vpack.c.b16 %v4212, %v4206
    %v4417 = vpack.c.b16 %v4213, %v4207
    %v4418 = vpack.c.b16 %v4220, %v4214
    %v4419 = vpack.c.b16 %v4221, %v4215
    %v4420 = vpack.c.b16 %v4222, %v4216
    %v4421 = vpack.c.b16 %v4223, %v4217
    %v4422 = vpack.c.b16 %v4224, %v4218
    %v4423 = vpack.c.b16 %v4225, %v4219
    %v4424 = vpack.c.b16 %v4232, %v4226
    %v4425 = vpack.c.b16 %v4233, %v4227
    %v4426 = vpack.c.b16 %v4234, %v4228
    %v4427 = vpack.c.b16 %v4235, %v4229
    %v4428 = vpack.c.b16 %v4236, %v4230
    %v4429 = vpack.c.b16 %v4237, %v4231
    %4622 = vmatprep.subr.bf16.mxu0 %v4239
    %4623 = vmatpush1.bf16.msra.mxu0 %v4238
    %4624 = vmatprep.subr.bf16.mxu0 %v4245
    %4625 = vmatpush1.bf16.msra.mxu0 %v4244
    %4626 = vmatprep.subr.bf16.mxu0 %v4251
    %4627 = vmatpush1.bf16.msra.mxu0 %v4250
    %4628 = vmatprep.subr.bf16.mxu0 %v4257
    %4629 = vmatpush1.bf16.msra.mxu0 %v4256
    %4630 = vmatprep.subr.bf16.mxu0 %v4263
    %4631 = vmatpush1.bf16.msra.mxu0 %v4262
    %4632 = vmatprep.subr.bf16.mxu0 %v4269
    %4633 = vmatpush1.bf16.msra.mxu0 %v4268
    %4634 = vmatprep.subr.bf16.mxu0 %v4275
    %4635 = vmatpush1.bf16.msra.mxu0 %v4274
    %4636 = vmatprep.subr.bf16.mxu0 %v4281
    %4637 = vmatpush1.bf16.msra.mxu0 %v4280
    %4638 = vmatprep.subr.bf16.mxu0 %v4287
    %4639 = vmatpush1.bf16.msra.mxu0 %v4286
    %4640 = vmatprep.subr.bf16.mxu0 %v4293
    %4641 = vmatpush1.bf16.msra.mxu0 %v4292
    %4642 = vmatprep.subr.bf16.mxu0 %v4299
    %4643 = vmatpush1.bf16.msra.mxu0 %v4298
    %4644 = vmatprep.subr.bf16.mxu0 %v4305
    %4645 = vmatpush1.bf16.msra.mxu0 %v4304
    %4646 = vmatprep.subr.bf16.mxu0 %v4311
    %4647 = vmatpush1.bf16.msra.mxu0 %v4310
    %4648 = vmatprep.subr.bf16.mxu0 %v4317
    %4649 = vmatpush1.bf16.msra.mxu0 %v4316
    %4650 = vmatprep.subr.bf16.mxu0 %v4323
    %4651 = vmatpush1.bf16.msra.mxu0 %v4322
    %4652 = vmatprep.subr.bf16.mxu0 %v4329
    %4653 = vmatpush1.bf16.msra.mxu0 %v4328
    %4654 = vmatprep.mubr.bf16.mxu0 %v3435
    %4655 = vmatmul.mubr.bf16.gmra.mrb[0].mxu0 %v3434
    %v4656 = vpop.f32.mrb[0].mxu0
    %v4657 = vadd.f32 %v3635, %v4656
    %v4658 = vpop.f32.mrb[0].mxu0
    %v4659 = vadd.f32 %v3639, %v4658
    %v4660 = vpop.f32.mrb[0].mxu0
    %v4661 = vpop.f32.mrb[0].mxu0
    %4662 = vdwg.mxu0
    %4663 = vmatprep.subr.bf16.mxu0 %v4335
    %4664 = vmatpush1.bf16.msra.mxu0 %v4334
    %4665 = vmatprep.subr.bf16.mxu0 %v4341
    %4666 = vmatpush1.bf16.msra.mxu0 %v4340
    %4667 = vmatprep.subr.bf16.mxu0 %v4347
    %4668 = vmatpush1.bf16.msra.mxu0 %v4346
    %4669 = vmatprep.subr.bf16.mxu0 %v4353
    %4670 = vmatpush1.bf16.msra.mxu0 %v4352
    %4671 = vmatprep.subr.bf16.mxu0 %v4359
    %4672 = vmatpush1.bf16.msra.mxu0 %v4358
    %4673 = vmatprep.subr.bf16.mxu0 %v4365
    %4674 = vmatpush1.bf16.msra.mxu0 %v4364
    %4675 = vmatprep.subr.bf16.mxu0 %v4371
    %4676 = vmatpush1.bf16.msra.mxu0 %v4370
    %4677 = vmatprep.subr.bf16.mxu0 %v4377
    %4678 = vmatpush1.bf16.msra.mxu0 %v4376
    %4679 = vmatprep.subr.bf16.mxu0 %v4383
    %4680 = vmatpush1.bf16.msra.mxu0 %v4382
    %4681 = vmatprep.subr.bf16.mxu0 %v4389
    %4682 = vmatpush1.bf16.msra.mxu0 %v4388
    %4683 = vmatprep.subr.bf16.mxu0 %v4395
    %4684 = vmatpush1.bf16.msra.mxu0 %v4394
    %4685 = vmatprep.subr.bf16.mxu0 %v4401
    %4686 = vmatpush1.bf16.msra.mxu0 %v4400
    %4687 = vmatprep.subr.bf16.mxu0 %v4407
    %4688 = vmatpush1.bf16.msra.mxu0 %v4406
    %4689 = vmatprep.subr.bf16.mxu0 %v4413
    %4690 = vmatpush1.bf16.msra.mxu0 %v4412
    %4691 = vmatprep.subr.bf16.mxu0 %v4419
    %4692 = vmatpush1.bf16.msra.mxu0 %v4418
    %4693 = vmatprep.subr.bf16.mxu0 %v4425
    %4694 = vmatpush1.bf16.msra.mxu0 %v4424
    %4695 = vmatprep.mubr.bf16.mxu0 %v3437
    %4696 = vmatmul.mubr.bf16.gmra.mrb[0].mxu0 %v3436
    %v4697 = vpop.f32.mrb[0].mxu0
    %v4698 = vadd.f32 %v4657, %v4697
    %v4699 = vpop.f32.mrb[0].mxu0
    %v4700 = vadd.f32 %v4659, %v4699
    %v4701 = vpop.f32.mrb[0].mxu0
    %v4702 = vpop.f32.mrb[0].mxu0
    %4703 = vdwg.mxu0
    %4704 = vmatprep.subr.bf16.mxu0 %v4241
    %4705 = vmatpush1.bf16.msra.mxu0 %v4240
    %4706 = vmatprep.subr.bf16.mxu0 %v4247
    %4707 = vmatpush1.bf16.msra.mxu0 %v4246
    %4708 = vmatprep.subr.bf16.mxu0 %v4253
    %4709 = vmatpush1.bf16.msra.mxu0 %v4252
    %4710 = vmatprep.subr.bf16.mxu0 %v4259
    %4711 = vmatpush1.bf16.msra.mxu0 %v4258
    %4712 = vmatprep.subr.bf16.mxu0 %v4265
    %4713 = vmatpush1.bf16.msra.mxu0 %v4264
    %4714 = vmatprep.subr.bf16.mxu0 %v4271
    %4715 = vmatpush1.bf16.msra.mxu0 %v4270
    %4716 = vmatprep.subr.bf16.mxu0 %v4277
    %4717 = vmatpush1.bf16.msra.mxu0 %v4276
    %4718 = vmatprep.subr.bf16.mxu0 %v4283
    %4719 = vmatpush1.bf16.msra.mxu0 %v4282
    %4720 = vmatprep.subr.bf16.mxu0 %v4289
    %4721 = vmatpush1.bf16.msra.mxu0 %v4288
    %4722 = vmatprep.subr.bf16.mxu0 %v4295
    %4723 = vmatpush1.bf16.msra.mxu0 %v4294
    %4724 = vmatprep.subr.bf16.mxu0 %v4301
    %4725 = vmatpush1.bf16.msra.mxu0 %v4300
    %4726 = vmatprep.subr.bf16.mxu0 %v4307
    %4727 = vmatpush1.bf16.msra.mxu0 %v4306
    %4728 = vmatprep.subr.bf16.mxu0 %v4313
    %4729 = vmatpush1.bf16.msra.mxu0 %v4312
    %4730 = vmatprep.subr.bf16.mxu0 %v4319
    %4731 = vmatpush1.bf16.msra.mxu0 %v4318
    %4732 = vmatprep.subr.bf16.mxu0 %v4325
    %4733 = vmatpush1.bf16.msra.mxu0 %v4324
    %4734 = vmatprep.subr.bf16.mxu0 %v4331
    %4735 = vmatpush1.bf16.msra.mxu0 %v4330
    %4736 = vmatprep.mubr.bf16.mxu0 %v3435
    %4737 = vmatmul.mubr.bf16.gmra.mrb[0].mxu0 %v3434
    %v4738 = vpop.f32.mrb[0].mxu0
    %v4739 = vadd.f32 %v3643, %v4738
    %v4740 = vpop.f32.mrb[0].mxu0
    %v4741 = vadd.f32 %v3647, %v4740
    %v4742 = vpop.f32.mrb[0].mxu0
    %v4743 = vpop.f32.mrb[0].mxu0
    %4744 = vdwg.mxu0
    %4745 = vmatprep.subr.bf16.mxu0 %v4337
    %4746 = vmatpush1.bf16.msra.mxu0 %v4336
    %4747 = vmatprep.subr.bf16.mxu0 %v4343
    %4748 = vmatpush1.bf16.msra.mxu0 %v4342
    %4749 = vmatprep.subr.bf16.mxu0 %v4349
    %4750 = vmatpush1.bf16.msra.mxu0 %v4348
    %4751 = vmatprep.subr.bf16.mxu0 %v4355
    %4752 = vmatpush1.bf16.msra.mxu0 %v4354
    %4753 = vmatprep.subr.bf16.mxu0 %v4361
    %4754 = vmatpush1.bf16.msra.mxu0 %v4360
    %4755 = vmatprep.subr.bf16.mxu0 %v4367
    %4756 = vmatpush1.bf16.msra.mxu0 %v4366
    %4757 = vmatprep.subr.bf16.mxu0 %v4373
    %4758 = vmatpush1.bf16.msra.mxu0 %v4372
    %4759 = vmatprep.subr.bf16.mxu0 %v4379
    %4760 = vmatpush1.bf16.msra.mxu0 %v4378
    %4761 = vmatprep.subr.bf16.mxu0 %v4385
    %4762 = vmatpush1.bf16.msra.mxu0 %v4384
    %4763 = vmatprep.subr.bf16.mxu0 %v4391
    %4764 = vmatpush1.bf16.msra.mxu0 %v4390
    %4765 = vmatprep.subr.bf16.mxu0 %v4397
    %4766 = vmatpush1.bf16.msra.mxu0 %v4396
    %4767 = vmatprep.subr.bf16.mxu0 %v4403
    %4768 = vmatpush1.bf16.msra.mxu0 %v4402
    %4769 = vmatprep.subr.bf16.mxu0 %v4409
    %4770 = vmatpush1.bf16.msra.mxu0 %v4408
    %4771 = vmatprep.subr.bf16.mxu0 %v4415
    %4772 = vmatpush1.bf16.msra.mxu0 %v4414
    %4773 = vmatprep.subr.bf16.mxu0 %v4421
    %4774 = vmatpush1.bf16.msra.mxu0 %v4420
    %4775 = vmatprep.subr.bf16.mxu0 %v4427
    %4776 = vmatpush1.bf16.msra.mxu0 %v4426
    %4777 = vmatprep.mubr.bf16.mxu0 %v3437
    %4778 = vmatmul.mubr.bf16.gmra.mrb[0].mxu0 %v3436
    %v4779 = vpop.f32.mrb[0].mxu0
    %v4780 = vadd.f32 %v4739, %v4779
    %v4781 = vpop.f32.mrb[0].mxu0
    %v4782 = vadd.f32 %v4741, %v4781
    %v4783 = vpop.f32.mrb[0].mxu0
    %v4784 = vpop.f32.mrb[0].mxu0
    %4785 = vdwg.mxu0
    %4786 = vmatprep.subr.bf16.mxu0 %v4243
    %4787 = vmatpush1.bf16.msra.mxu0 %v4242
    %4788 = vmatprep.subr.bf16.mxu0 %v4249
    %4789 = vmatpush1.bf16.msra.mxu0 %v4248
    %4790 = vmatprep.subr.bf16.mxu0 %v4255
    %4791 = vmatpush1.bf16.msra.mxu0 %v4254
    %4792 = vmatprep.subr.bf16.mxu0 %v4261
    %4793 = vmatpush1.bf16.msra.mxu0 %v4260
    %4794 = vmatprep.subr.bf16.mxu0 %v4267
    %4795 = vmatpush1.bf16.msra.mxu0 %v4266
    %4796 = vmatprep.subr.bf16.mxu0 %v4273
    %4797 = vmatpush1.bf16.msra.mxu0 %v4272
    %4798 = vmatprep.subr.bf16.mxu0 %v4279
    %4799 = vmatpush1.bf16.msra.mxu0 %v4278
    %4800 = vmatprep.subr.bf16.mxu0 %v4285
    %4801 = vmatpush1.bf16.msra.mxu0 %v4284
    %4802 = vmatprep.subr.bf16.mxu0 %v4291
    %4803 = vmatpush1.bf16.msra.mxu0 %v4290
    %4804 = vmatprep.subr.bf16.mxu0 %v4297
    %4805 = vmatpush1.bf16.msra.mxu0 %v4296
    %4806 = vmatprep.subr.bf16.mxu0 %v4303
    %4807 = vmatpush1.bf16.msra.mxu0 %v4302
    %4808 = vmatprep.subr.bf16.mxu0 %v4309
    %4809 = vmatpush1.bf16.msra.mxu0 %v4308
    %4810 = vmatprep.subr.bf16.mxu0 %v4315
    %4811 = vmatpush1.bf16.msra.mxu0 %v4314
    %4812 = vmatprep.subr.bf16.mxu0 %v4321
    %4813 = vmatpush1.bf16.msra.mxu0 %v4320
    %4814 = vmatprep.subr.bf16.mxu0 %v4327
    %4815 = vmatpush1.bf16.msra.mxu0 %v4326
    %4816 = vmatprep.subr.bf16.mxu0 %v4333
    %4817 = vmatpush1.bf16.msra.mxu0 %v4332
    %4818 = vmatprep.mubr.bf16.mxu0 %v3435
    %4819 = vmatmul.mubr.bf16.gmra.mrb[0].mxu0 %v3434
    %v4820 = vpop.f32.mrb[0].mxu0
    %v4821 = vadd.f32 %v3651, %v4820
    %v4822 = vpop.f32.mrb[0].mxu0
    %v4823 = vadd.f32 %v3655, %v4822
    %v4824 = vpop.f32.mrb[0].mxu0
    %v4825 = vpop.f32.mrb[0].mxu0
    %4826 = vdwg.mxu0
    %4827 = vmatprep.subr.bf16.mxu0 %v4339
    %4828 = vmatpush1.bf16.msra.mxu0 %v4338
    %4829 = vmatprep.subr.bf16.mxu0 %v4345
    %4830 = vmatpush1.bf16.msra.mxu0 %v4344
    %4831 = vmatprep.subr.bf16.mxu0 %v4351
    %4832 = vmatpush1.bf16.msra.mxu0 %v4350
    %4833 = vmatprep.subr.bf16.mxu0 %v4357
    %4834 = vmatpush1.bf16.msra.mxu0 %v4356
    %4835 = vmatprep.subr.bf16.mxu0 %v4363
    %4836 = vmatpush1.bf16.msra.mxu0 %v4362
    %4837 = vmatprep.subr.bf16.mxu0 %v4369
    %4838 = vmatpush1.bf16.msra.mxu0 %v4368
    %4839 = vmatprep.subr.bf16.mxu0 %v4375
    %4840 = vmatpush1.bf16.msra.mxu0 %v4374
    %4841 = vmatprep.subr.bf16.mxu0 %v4381
    %4842 = vmatpush1.bf16.msra.mxu0 %v4380
    %4843 = vmatprep.subr.bf16.mxu0 %v4387
    %4844 = vmatpush1.bf16.msra.mxu0 %v4386
    %4845 = vmatprep.subr.bf16.mxu0 %v4393
    %4846 = vmatpush1.bf16.msra.mxu0 %v4392
    %4847 = vmatprep.subr.bf16.mxu0 %v4399
    %4848 = vmatpush1.bf16.msra.mxu0 %v4398
    %4849 = vmatprep.subr.bf16.mxu0 %v4405
    %4850 = vmatpush1.bf16.msra.mxu0 %v4404
    %4851 = vmatprep.subr.bf16.mxu0 %v4411
    %4852 = vmatpush1.bf16.msra.mxu0 %v4410
    %4853 = vmatprep.subr.bf16.mxu0 %v4417
    %4854 = vmatpush1.bf16.msra.mxu0 %v4416
    %4855 = vmatprep.subr.bf16.mxu0 %v4423
    %4856 = vmatpush1.bf16.msra.mxu0 %v4422
    %4857 = vmatprep.subr.bf16.mxu0 %v4429
    %4858 = vmatpush1.bf16.msra.mxu0 %v4428
    %4859 = vmatprep.mubr.bf16.mxu0 %v3437
    %4860 = vmatmul.mubr.bf16.gmra.mrb[0].mxu0 %v3436
    %v4861 = vpop.f32.mrb[0].mxu0
    %v4862 = vadd.f32 %v4821, %v4861
    %v4863 = vpop.f32.mrb[0].mxu0
    %v4864 = vadd.f32 %v4823, %v4863
    %v4865 = vpop.f32.mrb[0].mxu0
    %v4866 = vpop.f32.mrb[0].mxu0
    %4867 = vdwg.mxu0
    %4868 = vst [vmem:[%s20] sm:$0xff] %v4698
    %4869 = vst [vmem:[%s20 + $0x8] sm:$0xff] %v4700
    %4870 = vst [vmem:[%s20 + $0x10] sm:$0xff] %v4780
    %4871 = vst [vmem:[%s20 + $0x18] sm:$0xff] %v4782
    %4872 = vst [vmem:[%s20 + $0x20] sm:$0xff] %v4862
    %4873 = vst [vmem:[%s20 + $0x28] sm:$0xff] %v4864
    // Predicated region
    $region98: #{rec_env_sim_forward.1} parent=1 // pred_check
      _
    $region99: #{rec_env_sim_forward.1} parent=1 // pred_check_branch
      %4875 = sbr.rel (0) target = $region101
    $region100: #{rec_env_sim_forward.1} parent=1 // pred_region
      _
    $region101: #{rec_env_sim_forward.1} parent=1 // pred_fallthru
      _
    // Predicated region
    $region102: #{rec_env_sim_forward.1} parent=1 // pred_check
      _
    $region103: #{rec_env_sim_forward.1} parent=1 // pred_check_branch
      %4877 = sbr.rel (0) target = $region105
    $region104: #{rec_env_sim_forward.1} parent=1 // pred_region
      _
    $region105: #{rec_env_sim_forward.1} parent=1 // pred_fallthru
      _
    // Predicated region
    $region106: #{rec_env_sim_forward.1} parent=1 // pred_check
      _
    $region107: #{rec_env_sim_forward.1} parent=1 // pred_check_branch
      %4879 = sbr.rel (0) target = $region109
    $region108: #{rec_env_sim_forward.1} parent=1 // pred_region
      _
    $region109: #{rec_env_sim_forward.1} parent=1 // pred_fallthru
      _
    // Predicated region
    $region110: #{rec_env_sim_forward.1} parent=1 // pred_check
      _
    $region111: #{rec_env_sim_forward.1} parent=1 // pred_check_branch
      %4881 = sbr.rel (0) target = $region113
    $region112: #{rec_env_sim_forward.1} parent=1 // pred_region
      _
    $region113: #{rec_env_sim_forward.1} parent=1 // pred_fallthru
      _
    // Predicated region
    $region114: #{rec_env_sim_forward.1} parent=1 // pred_check
      _
    $region115: #{rec_env_sim_forward.1} parent=1 // pred_check_branch
      %4883 = sbr.rel (0) target = $region117
    $region116: #{rec_env_sim_forward.1} parent=1 // pred_region
      _
    $region117: #{rec_env_sim_forward.1} parent=1 // pred_fallthru
      _
    // Predicated region
    $region118: #{rec_env_sim_forward.1} parent=1 // pred_check
      _
    $region119: #{rec_env_sim_forward.1} parent=1 // pred_check_branch
      %4885 = sbr.rel (0) target = $region121
    $region120: #{rec_env_sim_forward.1} parent=1 // pred_region
      _
    $region121: #{rec_env_sim_forward.1} parent=1 // pred_fallthru
      _
    %4886 = vsyncpa [#allocation3], 1
    %4887 = vsyncpa [#allocation5], 1
    %4888 = vsyncpa [#allocation8], 1

</llo_original>
